<compile_context>
chip_gen: v7x
topology: tpu7x:2x2x1
jax: 0.10.0
libtpu: 0.0.40
codegen_flags: <defaults>
</compile_context>

<pallas_src>
import functools

import jax
import jax.numpy as jnp
from jax.experimental import pallas as pl
from jax.experimental.pallas import tpu as pltpu


def _mlp_kernel(x_ref, w1_ref, b1_ref, w2_ref, b2_ref, w3_ref, b3_ref, o_ref):
    # fc1 + ReLU (bf16 x bf16 -> f32 accumulation on the MXU).  If x is
    # already bf16 the astype is a no-op; if f32, the cast happens in VMEM
    # (no extra HBM pass in the wrapper).
    x = x_ref[...].astype(w1_ref.dtype)
    h1 = jnp.dot(x, w1_ref[...], preferred_element_type=jnp.float32)
    h1 = jnp.maximum(h1 + b1_ref[...], 0.0)
    # fc2 + ReLU
    h2 = jnp.dot(h1.astype(w2_ref.dtype), w2_ref[...],
                 preferred_element_type=jnp.float32)
    h2 = jnp.maximum(h2 + b2_ref[...], 0.0)
    # fc3 (logits, lane-padded to 128 -> full-width matmul, lane-dense store)
    logits = jnp.dot(h2.astype(w3_ref.dtype), w3_ref[...],
                     preferred_element_type=jnp.float32) + b3_ref[...]
    o_ref[...] = logits.astype(o_ref.dtype)


def _round_up(n, m):
    return ((n + m - 1) // m) * m


def _const_spec(shape):
    """Spec for a grid-invariant (weight/bias) input: single-buffered if the
    running JAX supports pipeline_mode, otherwise the default 2-deep buffers."""
    if hasattr(pl, "Buffered"):
        try:
            return pl.BlockSpec(shape, lambda i: (0, 0),
                                pipeline_mode=pl.Buffered(1))
        except TypeError:  # older JAX without the pipeline_mode kwarg
            pass
    return pl.BlockSpec(shape, lambda i: (0, 0))


@functools.partial(jax.jit,
                   static_argnames=("block_m", "param_dtype", "out_dtype"))
def simple_nn_classifier(x, params, *, block_m=512,
                         param_dtype=jnp.bfloat16, out_dtype=jnp.bfloat16):
    """Forward pass of SimpleNNClassifier.

    x:      (B, input_dim) float32 or bfloat16
    params: dict with w1 (in,512), b1 (512,), w2 (512,256), b2 (256,),
            w3 (256,num_classes), b3 (num_classes,)  [f32; weights are cast
            to `param_dtype` once here, accumulation stays f32 in-kernel]
    """
    B, D = x.shape
    H1 = params["w1"].shape[1]
    H2 = params["w2"].shape[1]
    C = params["w3"].shape[1]

    # ---- M-tile selection (no batch padding; ragged last tile is masked) ---
    bm = min(block_m, _round_up(B, 8))
    # Keep >= 2 grid steps when the batch is big enough to split: on v7x the
    # "parallel" axis shards across the 2 TensorCores; on v5e/v6e a second
    # step only costs ~0.35 us while tiles stay MXU-sized.
    if B > 256 and pl.cdiv(B, bm) < 2:
        bm = _round_up(pl.cdiv(B, 2), 8)
    grid_m = pl.cdiv(B, bm)

    # Lane-dense logits: pad num_classes up to 128 lanes (unmasked stores).
    # Deliberately NOT 256: fc3 is <3% of FLOPs, padding further only doubles
    # the logit store bytes.
    C_pad = _round_up(max(C, 128), 128)

    # Weights cast once to bf16 (MXU-native, halves weight HBM bytes); biases
    # stay f32 and are added post-accumulation.
    w1 = params["w1"].astype(param_dtype)
    w2 = params["w2"].astype(param_dtype)
    w3 = params["w3"].astype(param_dtype)
    b1 = params["b1"].reshape(1, H1).astype(jnp.float32)
    b2 = params["b2"].reshape(1, H2).astype(jnp.float32)
    b3 = params["b3"].reshape(1, C).astype(jnp.float32)
    if C_pad != C:
        w3 = jnp.pad(w3, ((0, 0), (0, C_pad - C)))
        b3 = jnp.pad(b3, ((0, 0), (0, C_pad - C)))

    itemsize_x = jnp.dtype(x.dtype).itemsize
    itemsize_w = jnp.dtype(param_dtype).itemsize
    itemsize_o = jnp.dtype(out_dtype).itemsize
    cost = pl.CostEstimate(
        flops=2 * B * (D * H1 + H1 * H2 + H2 * C_pad),
        transcendentals=0,
        bytes_accessed=(B * D * itemsize_x
                        + (D * H1 + H1 * H2 + H2 * C_pad) * itemsize_w
                        + (H1 + H2 + C_pad) * 4
                        + B * C_pad * itemsize_o),
    )

    out = pl.pallas_call(
        _mlp_kernel,
        out_shape=jax.ShapeDtypeStruct((B, C_pad), out_dtype),
        grid=(grid_m,),
        in_specs=[
            pl.BlockSpec((bm, D), lambda i: (i, 0)),  # x tile (double-buffered)
            _const_spec((D, H1)),                     # w1 (VMEM-resident)
            _const_spec((1, H1)),                     # b1
            _const_spec((H1, H2)),                    # w2
            _const_spec((1, H2)),                     # b2
            _const_spec((H2, C_pad)),                 # w3 (lane-padded)
            _const_spec((1, C_pad)),                  # b3 (lane-padded)
        ],
        out_specs=pl.BlockSpec((bm, C_pad), lambda i: (i, 0)),
        compiler_params=pltpu.CompilerParams(
            dimension_semantics=("parallel",),        # megacore / 2-TC sharding
            vmem_limit_bytes=32 * 1024 * 1024),
        cost_estimate=cost,
    )(x, w1, b1, w2, b2, w3, b3)

    # Slice off the padded class lanes (bf16 halves this small extra pass).
    return out[:, :C]


def init_params(key, input_dim, num_classes):
    """Deterministic synthetic parameters (shapes match the nn.Linear layers)."""
    ks = jax.random.split(key, 6)

    def lin(kw, kb, fan_in, fan_out):
        bound = 1.0 / jnp.sqrt(fan_in)
        w = jax.random.uniform(kw, (fan_in, fan_out), jnp.float32, -bound, bound)
        b = jax.random.uniform(kb, (fan_out,), jnp.float32, -bound, bound)
        return w, b

    w1, b1 = lin(ks[0], ks[1], input_dim, 512)
    w2, b2 = lin(ks[2], ks[3], 512, 256)
    w3, b3 = lin(ks[4], ks[5], 256, num_classes)
    return dict(w1=w1, b1=b1, w2=w2, b2=b2, w3=w3, b3=b3)


def reference_forward(x, p, compute_dtype=jnp.bfloat16):
    """Pure-JAX reference mirroring the kernel's dtype path (bf16 in, f32 acc)."""
    w1 = p["w1"].astype(compute_dtype)
    w2 = p["w2"].astype(compute_dtype)
    w3 = p["w3"].astype(compute_dtype)
    h1 = jnp.maximum(
        jnp.dot(x.astype(compute_dtype), w1,
                preferred_element_type=jnp.float32) + p["b1"], 0.0)
    h2 = jnp.maximum(
        jnp.dot(h1.astype(compute_dtype), w2,
                preferred_element_type=jnp.float32) + p["b2"], 0.0)
    return jnp.dot(h2.astype(compute_dtype), w3,
                   preferred_element_type=jnp.float32) + p["b3"]


if __name__ == "__main__":
    key = jax.random.PRNGKey(0)
    k_x, k_p, k_x2 = jax.random.split(key, 3)

    # Shapes consistent with the module defaults (input_dim=2048, 11 classes).
    input_dim, num_classes = 2048, 11
    params = init_params(k_p, input_dim, num_classes)

    # Case 1: small batch -> single grid step, small (16-row) tile.
    batch = 16
    x = jax.random.normal(k_x, (batch, input_dim), jnp.float32)
    out = jax.block_until_ready(simple_nn_classifier(x, params))
    ref = reference_forward(x, params)
    assert out.shape == (batch, num_classes)
    assert jnp.allclose(out.astype(jnp.float32), ref, atol=2e-2, rtol=2e-2)

    # Case 2: batch exercising the no-pad ragged-last-tile path and a 2-step
    # "parallel" grid (bm=512, grid=(2,), last tile has 88/512 valid rows).
    batch2 = 600
    x2 = jax.random.normal(k_x2, (batch2, input_dim), jnp.float32)
    out2 = jax.block_until_ready(simple_nn_classifier(x2, params))
    ref2 = reference_forward(x2, params)
    assert out2.shape == (batch2, num_classes)
    assert jnp.allclose(out2.astype(jnp.float32), ref2, atol=2e-2, rtol=2e-2)

    # Case 3: bf16 activations straight into the kernel (halves x HBM bytes;
    # the in-kernel cast becomes a no-op).  Same math as case 2.
    out3 = jax.block_until_ready(
        simple_nn_classifier(x2.astype(jnp.bfloat16), params))
    assert out3.shape == (batch2, num_classes)
    assert jnp.allclose(out3.astype(jnp.float32), ref2, atol=2e-2, rtol=2e-2)

    print("KERNEL_OK")
</pallas_src>

<mosaic_0001>
module attributes {stable_mosaic.version = 11 : i64} {
  func.func @_mlp_kernel(%arg0: i32, %arg1: memref<16x2048xf32, #tpu.memory_space<vmem>>, %arg2: memref<2048x512xbf16, #tpu.memory_space<vmem>>, %arg3: memref<1x512xf32, #tpu.memory_space<vmem>>, %arg4: memref<512x256xbf16, #tpu.memory_space<vmem>>, %arg5: memref<1x256xf32, #tpu.memory_space<vmem>>, %arg6: memref<256x128xbf16, #tpu.memory_space<vmem>>, %arg7: memref<1x128xf32, #tpu.memory_space<vmem>>, %arg8: memref<16x128xbf16, #tpu.memory_space<vmem>>) attributes {dimension_semantics = [#tpu.dimension_semantics<parallel>], iteration_bounds = array<i64: 1>, scalar_prefetch = 0 : i64, scratch_operands = 0 : i64, tpu.core_type = #tpu.core_type<tc>, window_params = [{transform_indices = @transform_0, window_bounds = array<i64: 16, 2048>}, {pipeline_mode = #tpu.pipeline_mode<synchronous>, transform_indices = @transform_1, window_bounds = array<i64: 2048, 512>}, {pipeline_mode = #tpu.pipeline_mode<synchronous>, transform_indices = @transform_2, window_bounds = array<i64: 1, 512>}, {pipeline_mode = #tpu.pipeline_mode<synchronous>, transform_indices = @transform_3, window_bounds = array<i64: 512, 256>}, {pipeline_mode = #tpu.pipeline_mode<synchronous>, transform_indices = @transform_4, window_bounds = array<i64: 1, 256>}, {pipeline_mode = #tpu.pipeline_mode<synchronous>, transform_indices = @transform_5, window_bounds = array<i64: 256, 128>}, {pipeline_mode = #tpu.pipeline_mode<synchronous>, transform_indices = @transform_6, window_bounds = array<i64: 1, 128>}, {transform_indices = @transform_7, window_bounds = array<i64: 16, 128>}]} {
    %c0 = arith.constant 0 : index
    %c0_0 = arith.constant 0 : index
    %0 = vector.load %arg1[%c0, %c0_0] : memref<16x2048xf32, #tpu.memory_space<vmem>>, vector<16x2048xf32>
    %1 = arith.truncf %0 : vector<16x2048xf32> to vector<16x2048xbf16>
    %c0_1 = arith.constant 0 : index
    %c0_2 = arith.constant 0 : index
    %2 = vector.load %arg2[%c0_1, %c0_2] : memref<2048x512xbf16, #tpu.memory_space<vmem>>, vector<2048x512xbf16>
    %cst = arith.constant dense<0.000000e+00> : vector<16x512xf32>
    %3 = tpu.matmul %1, %2, %cst {dimension_numbers = #tpu.dot_dimension_numbers<[1], [0], [0], [1], [0, 0, 1, 1], [], []>} : vector<16x2048xbf16>, vector<2048x512xbf16>, vector<16x512xf32> -> vector<16x512xf32>
    %c0_3 = arith.constant 0 : index
    %c0_4 = arith.constant 0 : index
    %4 = vector.load %arg3[%c0_3, %c0_4] : memref<1x512xf32, #tpu.memory_space<vmem>>, vector<1x512xf32>
    %5 = vector.broadcast %4 : vector<1x512xf32> to vector<16x512xf32>
    %6 = arith.addf %3, %5 : vector<16x512xf32>
    %cst_5 = arith.constant 0.000000e+00 : f32
    %7 = vector.broadcast %cst_5 : f32 to vector<16x512xf32>
    %8 = arith.maximumf %6, %7 : vector<16x512xf32>
    %9 = arith.truncf %8 : vector<16x512xf32> to vector<16x512xbf16>
    %c0_6 = arith.constant 0 : index
    %c0_7 = arith.constant 0 : index
    %10 = vector.load %arg4[%c0_6, %c0_7] : memref<512x256xbf16, #tpu.memory_space<vmem>>, vector<512x256xbf16>
    %cst_8 = arith.constant dense<0.000000e+00> : vector<16x256xf32>
    %11 = tpu.matmul %9, %10, %cst_8 {dimension_numbers = #tpu.dot_dimension_numbers<[1], [0], [0], [1], [0, 0, 1, 1], [], []>} : vector<16x512xbf16>, vector<512x256xbf16>, vector<16x256xf32> -> vector<16x256xf32>
    %c0_9 = arith.constant 0 : index
    %c0_10 = arith.constant 0 : index
    %12 = vector.load %arg5[%c0_9, %c0_10] : memref<1x256xf32, #tpu.memory_space<vmem>>, vector<1x256xf32>
    %13 = vector.broadcast %12 : vector<1x256xf32> to vector<16x256xf32>
    %14 = arith.addf %11, %13 : vector<16x256xf32>
    %cst_11 = arith.constant 0.000000e+00 : f32
    %15 = vector.broadcast %cst_11 : f32 to vector<16x256xf32>
    %16 = arith.maximumf %14, %15 : vector<16x256xf32>
    %17 = arith.truncf %16 : vector<16x256xf32> to vector<16x256xbf16>
    %c0_12 = arith.constant 0 : index
    %c0_13 = arith.constant 0 : index
    %18 = vector.load %arg6[%c0_12, %c0_13] : memref<256x128xbf16, #tpu.memory_space<vmem>>, vector<256x128xbf16>
    %cst_14 = arith.constant dense<0.000000e+00> : vector<16x128xf32>
    %19 = tpu.matmul %17, %18, %cst_14 {dimension_numbers = #tpu.dot_dimension_numbers<[1], [0], [0], [1], [0, 0, 1, 1], [], []>} : vector<16x256xbf16>, vector<256x128xbf16>, vector<16x128xf32> -> vector<16x128xf32>
    %c0_15 = arith.constant 0 : index
    %c0_16 = arith.constant 0 : index
    %20 = vector.load %arg7[%c0_15, %c0_16] : memref<1x128xf32, #tpu.memory_space<vmem>>, vector<1x128xf32>
    %21 = vector.broadcast %20 : vector<1x128xf32> to vector<16x128xf32>
    %22 = arith.addf %19, %21 : vector<16x128xf32>
    %23 = arith.truncf %22 : vector<16x128xf32> to vector<16x128xbf16>
    %c0_17 = arith.constant 0 : index
    %c0_18 = arith.constant 0 : index
    %24 = vector.load %arg8[%c0_17, %c0_18] : memref<16x128xbf16, #tpu.memory_space<vmem>>, vector<16x128xbf16>
    tpu.vector_store %arg8[%c0_17, %c0_18], %23 {strides = array<i32>} : memref<16x128xbf16, #tpu.memory_space<vmem>>, vector<16x128xbf16>,
    return
  }
  func.func @transform_0(%arg0: i32) -> (i32, i32) {
    %c0_i32 = arith.constant 0 : i32
    %c0_i32_0 = arith.constant 0 : i32
    return %arg0, %c0_i32 : i32, i32
  }
  func.func @transform_1(%arg0: i32) -> (i32, i32) {
    %c0_i32 = arith.constant 0 : i32
    %c0_i32_0 = arith.constant 0 : i32
    %c0_i32_1 = arith.constant 0 : i32
    return %c0_i32, %c0_i32_0 : i32, i32
  }
  func.func @transform_2(%arg0: i32) -> (i32, i32) {
    %c0_i32 = arith.constant 0 : i32
    %c0_i32_0 = arith.constant 0 : i32
    %c0_i32_1 = arith.constant 0 : i32
    return %c0_i32, %c0_i32_0 : i32, i32
  }
  func.func @transform_3(%arg0: i32) -> (i32, i32) {
    %c0_i32 = arith.constant 0 : i32
    %c0_i32_0 = arith.constant 0 : i32
    %c0_i32_1 = arith.constant 0 : i32
    return %c0_i32, %c0_i32_0 : i32, i32
  }
  func.func @transform_4(%arg0: i32) -> (i32, i32) {
    %c0_i32 = arith.constant 0 : i32
    %c0_i32_0 = arith.constant 0 : i32
    %c0_i32_1 = arith.constant 0 : i32
    return %c0_i32, %c0_i32_0 : i32, i32
  }
  func.func @transform_5(%arg0: i32) -> (i32, i32) {
    %c0_i32 = arith.constant 0 : i32
    %c0_i32_0 = arith.constant 0 : i32
    %c0_i32_1 = arith.constant 0 : i32
    return %c0_i32, %c0_i32_0 : i32, i32
  }
  func.func @transform_6(%arg0: i32) -> (i32, i32) {
    %c0_i32 = arith.constant 0 : i32
    %c0_i32_0 = arith.constant 0 : i32
    %c0_i32_1 = arith.constant 0 : i32
    return %c0_i32, %c0_i32_0 : i32, i32
  }
  func.func @transform_7(%arg0: i32) -> (i32, i32) {
    %c0_i32 = arith.constant 0 : i32
    %c0_i32_0 = arith.constant 0 : i32
    return %arg0, %c0_i32 : i32, i32
  }
}

</mosaic_0001>

<llo_original>
// kernel: simple_nn_classifier.1
$region0: #{simple_nn_classifier.1}
  #allocation0 [shape = 'u32[]', space=smem, size = 0x4, offset = 0x4, fixed_abs, tag = 'smem constant byte address 0x4 - core index']
  #allocation1 [shape = 'u32[144,128]{1,0:T(1,128)}', space=vmem, size = 0x12000, scoped, tag = 'internal scratch']
  %s0 = inlined_call_operand.vmem [shape: f32[16,2048], index: 0, kind: input, shape index: {}]
  %s1 = inlined_call_operand.vmem [shape: bf16[2048,512], index: 1, kind: input, shape index: {}]
  %s2 = inlined_call_operand.vmem [shape: f32[1,512], index: 2, kind: input, shape index: {}]
  %s3 = inlined_call_operand.vmem [shape: bf16[512,256], index: 3, kind: input, shape index: {}]
  %s4 = inlined_call_operand.vmem [shape: f32[1,256], index: 4, kind: input, shape index: {}]
  %s5 = inlined_call_operand.vmem [shape: bf16[256,128], index: 5, kind: input, shape index: {}]
  %s6 = inlined_call_operand.vmem [shape: f32[1,128], index: 6, kind: input, shape index: {}]
  %s7 = inlined_call_operand.hbm [shape: bf16[16,128], index: 7, kind: output, shape index: {}]
  %s8 = sld [smem:[#allocation0]]
  $region38: #{simple_nn_classifier.1} parent=0
    _
  %s10 = ssub.s32 1, %s8
  %s11 = scalar_select 0, %s10, %s8
  $region1: #{simple_nn_classifier.1} parent=0
    #allocation2 [shape = 'u8[4096]{0}', space=vmem, size = 0x1000, scoped, tag = 'output window, operand 0, single buffered']
    #allocation3 [shape = 's32[1]{0}', space=sflag, size = 0x4, scoped, tag = 'scoped memory for simple_nn_classifier.1']
    %12 = vsyncpa [#allocation3], 0
    // Predicated region
    $region2: #{simple_nn_classifier.1} parent=1 // pred_check
      _
    $region3: #{simple_nn_classifier.1} parent=1 // pred_check_branch
      %14 = sbr.rel (0) target = $region5
    $region4: #{simple_nn_classifier.1} parent=1 // pred_region
      _
    $region5: #{simple_nn_classifier.1} parent=1 // pred_fallthru
      _
    // Predicated region
    $region6: #{simple_nn_classifier.1} parent=1 // pred_check
      _
    $region7: #{simple_nn_classifier.1} parent=1 // pred_check_branch
      %16 = sbr.rel (0) target = $region9
    $region8: #{simple_nn_classifier.1} parent=1 // pred_region
      _
    $region9: #{simple_nn_classifier.1} parent=1 // pred_fallthru
      _
    // Predicated region
    $region10: #{simple_nn_classifier.1} parent=1 // pred_check
      _
    $region11: #{simple_nn_classifier.1} parent=1 // pred_check_branch
      %18 = sbr.rel (0) target = $region13
    $region12: #{simple_nn_classifier.1} parent=1 // pred_region
      _
    $region13: #{simple_nn_classifier.1} parent=1 // pred_fallthru
      _
    // Predicated region
    $region14: #{simple_nn_classifier.1} parent=1 // pred_check
      _
    $region15: #{simple_nn_classifier.1} parent=1 // pred_check_branch
      %20 = sbr.rel (0) target = $region17
    $region16: #{simple_nn_classifier.1} parent=1 // pred_region
      _
    $region17: #{simple_nn_classifier.1} parent=1 // pred_fallthru
      _
    // Predicated region
    $region18: #{simple_nn_classifier.1} parent=1 // pred_check
      _
    $region19: #{simple_nn_classifier.1} parent=1 // pred_check_branch
      %22 = sbr.rel (0) target = $region21
    $region20: #{simple_nn_classifier.1} parent=1 // pred_region
      _
    $region21: #{simple_nn_classifier.1} parent=1 // pred_fallthru
      _
    // Predicated region
    $region22: #{simple_nn_classifier.1} parent=1 // pred_check
      _
    $region23: #{simple_nn_classifier.1} parent=1 // pred_check_branch
      %24 = sbr.rel (0) target = $region25
    $region24: #{simple_nn_classifier.1} parent=1 // pred_region
      _
    $region25: #{simple_nn_classifier.1} parent=1 // pred_fallthru
      _
    // Predicated region
    $region26: #{simple_nn_classifier.1} parent=1 // pred_check
      _
    $region27: #{simple_nn_classifier.1} parent=1 // pred_check_branch
      %26 = sbr.rel (0) target = $region29
    $region28: #{simple_nn_classifier.1} parent=1 // pred_region
      _
    $region29: #{simple_nn_classifier.1} parent=1 // pred_fallthru
      _
    %v28 = vld [vmem:[%s0] sm:$0xff]
    %v29 = vld [vmem:[%s0 + $0x8] sm:$0xff]
    %v30 = vld [vmem:[%s0 + $0x10] sm:$0xff]
    %v31 = vld [vmem:[%s0 + $0x18] sm:$0xff]
    %v32 = vld [vmem:[%s0 + $0x20] sm:$0xff]
    %v33 = vld [vmem:[%s0 + $0x28] sm:$0xff]
    %v34 = vld [vmem:[%s0 + $0x30] sm:$0xff]
    %v35 = vld [vmem:[%s0 + $0x38] sm:$0xff]
    %v36 = vld [vmem:[%s0 + $0x40] sm:$0xff]
    %v37 = vld [vmem:[%s0 + $0x48] sm:$0xff]
    %v38 = vld [vmem:[%s0 + $0x50] sm:$0xff]
    %v39 = vld [vmem:[%s0 + $0x58] sm:$0xff]
    %v40 = vld [vmem:[%s0 + $0x60] sm:$0xff]
    %v41 = vld [vmem:[%s0 + $0x68] sm:$0xff]
    %v42 = vld [vmem:[%s0 + $0x70] sm:$0xff]
    %v43 = vld [vmem:[%s0 + $0x78] sm:$0xff]
    %v44 = vld [vmem:[%s0 + $0x80] sm:$0xff]
    %v45 = vld [vmem:[%s0 + $0x88] sm:$0xff]
    %v46 = vld [vmem:[%s0 + $0x90] sm:$0xff]
    %v47 = vld [vmem:[%s0 + $0x98] sm:$0xff]
    %v48 = vld [vmem:[%s0 + $0xa0] sm:$0xff]
    %v49 = vld [vmem:[%s0 + $0xa8] sm:$0xff]
    %v50 = vld [vmem:[%s0 + $0xb0] sm:$0xff]
    %v51 = vld [vmem:[%s0 + $0xb8] sm:$0xff]
    %v52 = vld [vmem:[%s0 + $0xc0] sm:$0xff]
    %v53 = vld [vmem:[%s0 + $0xc8] sm:$0xff]
    %v54 = vld [vmem:[%s0 + $0xd0] sm:$0xff]
    %v55 = vld [vmem:[%s0 + $0xd8] sm:$0xff]
    %v56 = vld [vmem:[%s0 + $0xe0] sm:$0xff]
    %v57 = vld [vmem:[%s0 + $0xe8] sm:$0xff]
    %v58 = vld [vmem:[%s0 + $0xf0] sm:$0xff]
    %v59 = vld [vmem:[%s0 + $0xf8] sm:$0xff]
    %v60 = vpack.c.bf16 %v44, %v28
    %v61 = vpack.c.bf16 %v45, %v29
    %v62 = vpack.c.bf16 %v46, %v30
    %v63 = vpack.c.bf16 %v47, %v31
    %v64 = vpack.c.bf16 %v48, %v32
    %v65 = vpack.c.bf16 %v49, %v33
    %v66 = vpack.c.bf16 %v50, %v34
    %v67 = vpack.c.bf16 %v51, %v35
    %v68 = vpack.c.bf16 %v52, %v36
    %v69 = vpack.c.bf16 %v53, %v37
    %v70 = vpack.c.bf16 %v54, %v38
    %v71 = vpack.c.bf16 %v55, %v39
    %v72 = vpack.c.bf16 %v56, %v40
    %v73 = vpack.c.bf16 %v57, %v41
    %v74 = vpack.c.bf16 %v58, %v42
    %v75 = vpack.c.bf16 %v59, %v43
    %v76 = vld [vmem:[%s1] sm:$0xff]
    %v77 = vld [vmem:[%s1 + $0x8] sm:$0xff]
    %v78 = vld [vmem:[%s1 + $0x10] sm:$0xff]
    %v79 = vld [vmem:[%s1 + $0x18] sm:$0xff]
    %v80 = vld [vmem:[%s1 + $0x20] sm:$0xff]
    %v81 = vld [vmem:[%s1 + $0x28] sm:$0xff]
    %v82 = vld [vmem:[%s1 + $0x30] sm:$0xff]
    %v83 = vld [vmem:[%s1 + $0x38] sm:$0xff]
    %v84 = vld [vmem:[%s1 + $0x40] sm:$0xff]
    %v85 = vld [vmem:[%s1 + $0x48] sm:$0xff]
    %v86 = vld [vmem:[%s1 + $0x50] sm:$0xff]
    %v87 = vld [vmem:[%s1 + $0x58] sm:$0xff]
    %v88 = vld [vmem:[%s1 + $0x60] sm:$0xff]
    %v89 = vld [vmem:[%s1 + $0x68] sm:$0xff]
    %v90 = vld [vmem:[%s1 + $0x70] sm:$0xff]
    %v91 = vld [vmem:[%s1 + $0x78] sm:$0xff]
    %v92 = vld [vmem:[%s1 + $0x80] sm:$0xff]
    %v93 = vld [vmem:[%s1 + $0x88] sm:$0xff]
    %v94 = vld [vmem:[%s1 + $0x90] sm:$0xff]
    %v95 = vld [vmem:[%s1 + $0x98] sm:$0xff]
    %v96 = vld [vmem:[%s1 + $0xa0] sm:$0xff]
    %v97 = vld [vmem:[%s1 + $0xa8] sm:$0xff]
    %v98 = vld [vmem:[%s1 + $0xb0] sm:$0xff]
    %v99 = vld [vmem:[%s1 + $0xb8] sm:$0xff]
    %v100 = vld [vmem:[%s1 + $0xc0] sm:$0xff]
    %v101 = vld [vmem:[%s1 + $0xc8] sm:$0xff]
    %v102 = vld [vmem:[%s1 + $0xd0] sm:$0xff]
    %v103 = vld [vmem:[%s1 + $0xd8] sm:$0xff]
    %v104 = vld [vmem:[%s1 + $0xe0] sm:$0xff]
    %v105 = vld [vmem:[%s1 + $0xe8] sm:$0xff]
    %v106 = vld [vmem:[%s1 + $0xf0] sm:$0xff]
    %v107 = vld [vmem:[%s1 + $0xf8] sm:$0xff]
    %v108 = vld [vmem:[%s1 + $0x100] sm:$0xff]
    %v109 = vld [vmem:[%s1 + $0x108] sm:$0xff]
    %v110 = vld [vmem:[%s1 + $0x110] sm:$0xff]
    %v111 = vld [vmem:[%s1 + $0x118] sm:$0xff]
    %v112 = vld [vmem:[%s1 + $0x120] sm:$0xff]
    %v113 = vld [vmem:[%s1 + $0x128] sm:$0xff]
    %v114 = vld [vmem:[%s1 + $0x130] sm:$0xff]
    %v115 = vld [vmem:[%s1 + $0x138] sm:$0xff]
    %v116 = vld [vmem:[%s1 + $0x140] sm:$0xff]
    %v117 = vld [vmem:[%s1 + $0x148] sm:$0xff]
    %v118 = vld [vmem:[%s1 + $0x150] sm:$0xff]
    %v119 = vld [vmem:[%s1 + $0x158] sm:$0xff]
    %v120 = vld [vmem:[%s1 + $0x160] sm:$0xff]
    %v121 = vld [vmem:[%s1 + $0x168] sm:$0xff]
    %v122 = vld [vmem:[%s1 + $0x170] sm:$0xff]
    %v123 = vld [vmem:[%s1 + $0x178] sm:$0xff]
    %v124 = vld [vmem:[%s1 + $0x180] sm:$0xff]
    %v125 = vld [vmem:[%s1 + $0x188] sm:$0xff]
    %v126 = vld [vmem:[%s1 + $0x190] sm:$0xff]
    %v127 = vld [vmem:[%s1 + $0x198] sm:$0xff]
    %v128 = vld [vmem:[%s1 + $0x1a0] sm:$0xff]
    %v129 = vld [vmem:[%s1 + $0x1a8] sm:$0xff]
    %v130 = vld [vmem:[%s1 + $0x1b0] sm:$0xff]
    %v131 = vld [vmem:[%s1 + $0x1b8] sm:$0xff]
    %v132 = vld [vmem:[%s1 + $0x1c0] sm:$0xff]
    %v133 = vld [vmem:[%s1 + $0x1c8] sm:$0xff]
    %v134 = vld [vmem:[%s1 + $0x1d0] sm:$0xff]
    %v135 = vld [vmem:[%s1 + $0x1d8] sm:$0xff]
    %v136 = vld [vmem:[%s1 + $0x1e0] sm:$0xff]
    %v137 = vld [vmem:[%s1 + $0x1e8] sm:$0xff]
    %v138 = vld [vmem:[%s1 + $0x1f0] sm:$0xff]
    %v139 = vld [vmem:[%s1 + $0x1f8] sm:$0xff]
    %v140 = vld [vmem:[%s1 + $0x200] sm:$0xff]
    %v141 = vld [vmem:[%s1 + $0x208] sm:$0xff]
    %v142 = vld [vmem:[%s1 + $0x210] sm:$0xff]
    %v143 = vld [vmem:[%s1 + $0x218] sm:$0xff]
    %v144 = vld [vmem:[%s1 + $0x220] sm:$0xff]
    %v145 = vld [vmem:[%s1 + $0x228] sm:$0xff]
    %v146 = vld [vmem:[%s1 + $0x230] sm:$0xff]
    %v147 = vld [vmem:[%s1 + $0x238] sm:$0xff]
    %v148 = vld [vmem:[%s1 + $0x240] sm:$0xff]
    %v149 = vld [vmem:[%s1 + $0x248] sm:$0xff]
    %v150 = vld [vmem:[%s1 + $0x250] sm:$0xff]
    %v151 = vld [vmem:[%s1 + $0x258] sm:$0xff]
    %v152 = vld [vmem:[%s1 + $0x260] sm:$0xff]
    %v153 = vld [vmem:[%s1 + $0x268] sm:$0xff]
    %v154 = vld [vmem:[%s1 + $0x270] sm:$0xff]
    %v155 = vld [vmem:[%s1 + $0x278] sm:$0xff]
    %v156 = vld [vmem:[%s1 + $0x280] sm:$0xff]
    %v157 = vld [vmem:[%s1 + $0x288] sm:$0xff]
    %v158 = vld [vmem:[%s1 + $0x290] sm:$0xff]
    %v159 = vld [vmem:[%s1 + $0x298] sm:$0xff]
    %v160 = vld [vmem:[%s1 + $0x2a0] sm:$0xff]
    %v161 = vld [vmem:[%s1 + $0x2a8] sm:$0xff]
    %v162 = vld [vmem:[%s1 + $0x2b0] sm:$0xff]
    %v163 = vld [vmem:[%s1 + $0x2b8] sm:$0xff]
    %v164 = vld [vmem:[%s1 + $0x2c0] sm:$0xff]
    %v165 = vld [vmem:[%s1 + $0x2c8] sm:$0xff]
    %v166 = vld [vmem:[%s1 + $0x2d0] sm:$0xff]
    %v167 = vld [vmem:[%s1 + $0x2d8] sm:$0xff]
    %v168 = vld [vmem:[%s1 + $0x2e0] sm:$0xff]
    %v169 = vld [vmem:[%s1 + $0x2e8] sm:$0xff]
    %v170 = vld [vmem:[%s1 + $0x2f0] sm:$0xff]
    %v171 = vld [vmem:[%s1 + $0x2f8] sm:$0xff]
    %v172 = vld [vmem:[%s1 + $0x300] sm:$0xff]
    %v173 = vld [vmem:[%s1 + $0x308] sm:$0xff]
    %v174 = vld [vmem:[%s1 + $0x310] sm:$0xff]
    %v175 = vld [vmem:[%s1 + $0x318] sm:$0xff]
    %v176 = vld [vmem:[%s1 + $0x320] sm:$0xff]
    %v177 = vld [vmem:[%s1 + $0x328] sm:$0xff]
    %v178 = vld [vmem:[%s1 + $0x330] sm:$0xff]
    %v179 = vld [vmem:[%s1 + $0x338] sm:$0xff]
    %v180 = vld [vmem:[%s1 + $0x340] sm:$0xff]
    %v181 = vld [vmem:[%s1 + $0x348] sm:$0xff]
    %v182 = vld [vmem:[%s1 + $0x350] sm:$0xff]
    %v183 = vld [vmem:[%s1 + $0x358] sm:$0xff]
    %v184 = vld [vmem:[%s1 + $0x360] sm:$0xff]
    %v185 = vld [vmem:[%s1 + $0x368] sm:$0xff]
    %v186 = vld [vmem:[%s1 + $0x370] sm:$0xff]
    %v187 = vld [vmem:[%s1 + $0x378] sm:$0xff]
    %v188 = vld [vmem:[%s1 + $0x380] sm:$0xff]
    %v189 = vld [vmem:[%s1 + $0x388] sm:$0xff]
    %v190 = vld [vmem:[%s1 + $0x390] sm:$0xff]
    %v191 = vld [vmem:[%s1 + $0x398] sm:$0xff]
    %v192 = vld [vmem:[%s1 + $0x3a0] sm:$0xff]
    %v193 = vld [vmem:[%s1 + $0x3a8] sm:$0xff]
    %v194 = vld [vmem:[%s1 + $0x3b0] sm:$0xff]
    %v195 = vld [vmem:[%s1 + $0x3b8] sm:$0xff]
    %v196 = vld [vmem:[%s1 + $0x3c0] sm:$0xff]
    %v197 = vld [vmem:[%s1 + $0x3c8] sm:$0xff]
    %v198 = vld [vmem:[%s1 + $0x3d0] sm:$0xff]
    %v199 = vld [vmem:[%s1 + $0x3d8] sm:$0xff]
    %v200 = vld [vmem:[%s1 + $0x3e0] sm:$0xff]
    %v201 = vld [vmem:[%s1 + $0x3e8] sm:$0xff]
    %v202 = vld [vmem:[%s1 + $0x3f0] sm:$0xff]
    %v203 = vld [vmem:[%s1 + $0x3f8] sm:$0xff]
    %v204 = vld [vmem:[%s1 + $0x400] sm:$0xff]
    %v205 = vld [vmem:[%s1 + $0x408] sm:$0xff]
    %v206 = vld [vmem:[%s1 + $0x410] sm:$0xff]
    %v207 = vld [vmem:[%s1 + $0x418] sm:$0xff]
    %v208 = vld [vmem:[%s1 + $0x420] sm:$0xff]
    %v209 = vld [vmem:[%s1 + $0x428] sm:$0xff]
    %v210 = vld [vmem:[%s1 + $0x430] sm:$0xff]
    %v211 = vld [vmem:[%s1 + $0x438] sm:$0xff]
    %v212 = vld [vmem:[%s1 + $0x440] sm:$0xff]
    %v213 = vld [vmem:[%s1 + $0x448] sm:$0xff]
    %v214 = vld [vmem:[%s1 + $0x450] sm:$0xff]
    %v215 = vld [vmem:[%s1 + $0x458] sm:$0xff]
    %v216 = vld [vmem:[%s1 + $0x460] sm:$0xff]
    %v217 = vld [vmem:[%s1 + $0x468] sm:$0xff]
    %v218 = vld [vmem:[%s1 + $0x470] sm:$0xff]
    %v219 = vld [vmem:[%s1 + $0x478] sm:$0xff]
    %v220 = vld [vmem:[%s1 + $0x480] sm:$0xff]
    %v221 = vld [vmem:[%s1 + $0x488] sm:$0xff]
    %v222 = vld [vmem:[%s1 + $0x490] sm:$0xff]
    %v223 = vld [vmem:[%s1 + $0x498] sm:$0xff]
    %v224 = vld [vmem:[%s1 + $0x4a0] sm:$0xff]
    %v225 = vld [vmem:[%s1 + $0x4a8] sm:$0xff]
    %v226 = vld [vmem:[%s1 + $0x4b0] sm:$0xff]
    %v227 = vld [vmem:[%s1 + $0x4b8] sm:$0xff]
    %v228 = vld [vmem:[%s1 + $0x4c0] sm:$0xff]
    %v229 = vld [vmem:[%s1 + $0x4c8] sm:$0xff]
    %v230 = vld [vmem:[%s1 + $0x4d0] sm:$0xff]
    %v231 = vld [vmem:[%s1 + $0x4d8] sm:$0xff]
    %v232 = vld [vmem:[%s1 + $0x4e0] sm:$0xff]
    %v233 = vld [vmem:[%s1 + $0x4e8] sm:$0xff]
    %v234 = vld [vmem:[%s1 + $0x4f0] sm:$0xff]
    %v235 = vld [vmem:[%s1 + $0x4f8] sm:$0xff]
    %v236 = vld [vmem:[%s1 + $0x500] sm:$0xff]
    %v237 = vld [vmem:[%s1 + $0x508] sm:$0xff]
    %v238 = vld [vmem:[%s1 + $0x510] sm:$0xff]
    %v239 = vld [vmem:[%s1 + $0x518] sm:$0xff]
    %v240 = vld [vmem:[%s1 + $0x520] sm:$0xff]
    %v241 = vld [vmem:[%s1 + $0x528] sm:$0xff]
    %v242 = vld [vmem:[%s1 + $0x530] sm:$0xff]
    %v243 = vld [vmem:[%s1 + $0x538] sm:$0xff]
    %v244 = vld [vmem:[%s1 + $0x540] sm:$0xff]
    %v245 = vld [vmem:[%s1 + $0x548] sm:$0xff]
    %v246 = vld [vmem:[%s1 + $0x550] sm:$0xff]
    %v247 = vld [vmem:[%s1 + $0x558] sm:$0xff]
    %v248 = vld [vmem:[%s1 + $0x560] sm:$0xff]
    %v249 = vld [vmem:[%s1 + $0x568] sm:$0xff]
    %v250 = vld [vmem:[%s1 + $0x570] sm:$0xff]
    %v251 = vld [vmem:[%s1 + $0x578] sm:$0xff]
    %v252 = vld [vmem:[%s1 + $0x580] sm:$0xff]
    %v253 = vld [vmem:[%s1 + $0x588] sm:$0xff]
    %v254 = vld [vmem:[%s1 + $0x590] sm:$0xff]
    %v255 = vld [vmem:[%s1 + $0x598] sm:$0xff]
    %v256 = vld [vmem:[%s1 + $0x5a0] sm:$0xff]
    %v257 = vld [vmem:[%s1 + $0x5a8] sm:$0xff]
    %v258 = vld [vmem:[%s1 + $0x5b0] sm:$0xff]
    %v259 = vld [vmem:[%s1 + $0x5b8] sm:$0xff]
    %v260 = vld [vmem:[%s1 + $0x5c0] sm:$0xff]
    %v261 = vld [vmem:[%s1 + $0x5c8] sm:$0xff]
    %v262 = vld [vmem:[%s1 + $0x5d0] sm:$0xff]
    %v263 = vld [vmem:[%s1 + $0x5d8] sm:$0xff]
    %v264 = vld [vmem:[%s1 + $0x5e0] sm:$0xff]
    %v265 = vld [vmem:[%s1 + $0x5e8] sm:$0xff]
    %v266 = vld [vmem:[%s1 + $0x5f0] sm:$0xff]
    %v267 = vld [vmem:[%s1 + $0x5f8] sm:$0xff]
    %v268 = vld [vmem:[%s1 + $0x600] sm:$0xff]
    %v269 = vld [vmem:[%s1 + $0x608] sm:$0xff]
    %v270 = vld [vmem:[%s1 + $0x610] sm:$0xff]
    %v271 = vld [vmem:[%s1 + $0x618] sm:$0xff]
    %v272 = vld [vmem:[%s1 + $0x620] sm:$0xff]
    %v273 = vld [vmem:[%s1 + $0x628] sm:$0xff]
    %v274 = vld [vmem:[%s1 + $0x630] sm:$0xff]
    %v275 = vld [vmem:[%s1 + $0x638] sm:$0xff]
    %v276 = vld [vmem:[%s1 + $0x640] sm:$0xff]
    %v277 = vld [vmem:[%s1 + $0x648] sm:$0xff]
    %v278 = vld [vmem:[%s1 + $0x650] sm:$0xff]
    %v279 = vld [vmem:[%s1 + $0x658] sm:$0xff]
    %v280 = vld [vmem:[%s1 + $0x660] sm:$0xff]
    %v281 = vld [vmem:[%s1 + $0x668] sm:$0xff]
    %v282 = vld [vmem:[%s1 + $0x670] sm:$0xff]
    %v283 = vld [vmem:[%s1 + $0x678] sm:$0xff]
    %v284 = vld [vmem:[%s1 + $0x680] sm:$0xff]
    %v285 = vld [vmem:[%s1 + $0x688] sm:$0xff]
    %v286 = vld [vmem:[%s1 + $0x690] sm:$0xff]
    %v287 = vld [vmem:[%s1 + $0x698] sm:$0xff]
    %v288 = vld [vmem:[%s1 + $0x6a0] sm:$0xff]
    %v289 = vld [vmem:[%s1 + $0x6a8] sm:$0xff]
    %v290 = vld [vmem:[%s1 + $0x6b0] sm:$0xff]
    %v291 = vld [vmem:[%s1 + $0x6b8] sm:$0xff]
    %v292 = vld [vmem:[%s1 + $0x6c0] sm:$0xff]
    %v293 = vld [vmem:[%s1 + $0x6c8] sm:$0xff]
    %v294 = vld [vmem:[%s1 + $0x6d0] sm:$0xff]
    %v295 = vld [vmem:[%s1 + $0x6d8] sm:$0xff]
    %v296 = vld [vmem:[%s1 + $0x6e0] sm:$0xff]
    %v297 = vld [vmem:[%s1 + $0x6e8] sm:$0xff]
    %v298 = vld [vmem:[%s1 + $0x6f0] sm:$0xff]
    %v299 = vld [vmem:[%s1 + $0x6f8] sm:$0xff]
    %v300 = vld [vmem:[%s1 + $0x700] sm:$0xff]
    %v301 = vld [vmem:[%s1 + $0x708] sm:$0xff]
    %v302 = vld [vmem:[%s1 + $0x710] sm:$0xff]
    %v303 = vld [vmem:[%s1 + $0x718] sm:$0xff]
    %v304 = vld [vmem:[%s1 + $0x720] sm:$0xff]
    %v305 = vld [vmem:[%s1 + $0x728] sm:$0xff]
    %v306 = vld [vmem:[%s1 + $0x730] sm:$0xff]
    %v307 = vld [vmem:[%s1 + $0x738] sm:$0xff]
    %v308 = vld [vmem:[%s1 + $0x740] sm:$0xff]
    %v309 = vld [vmem:[%s1 + $0x748] sm:$0xff]
    %v310 = vld [vmem:[%s1 + $0x750] sm:$0xff]
    %v311 = vld [vmem:[%s1 + $0x758] sm:$0xff]
    %v312 = vld [vmem:[%s1 + $0x760] sm:$0xff]
    %v313 = vld [vmem:[%s1 + $0x768] sm:$0xff]
    %v314 = vld [vmem:[%s1 + $0x770] sm:$0xff]
    %v315 = vld [vmem:[%s1 + $0x778] sm:$0xff]
    %v316 = vld [vmem:[%s1 + $0x780] sm:$0xff]
    %v317 = vld [vmem:[%s1 + $0x788] sm:$0xff]
    %v318 = vld [vmem:[%s1 + $0x790] sm:$0xff]
    %v319 = vld [vmem:[%s1 + $0x798] sm:$0xff]
    %v320 = vld [vmem:[%s1 + $0x7a0] sm:$0xff]
    %v321 = vld [vmem:[%s1 + $0x7a8] sm:$0xff]
    %v322 = vld [vmem:[%s1 + $0x7b0] sm:$0xff]
    %v323 = vld [vmem:[%s1 + $0x7b8] sm:$0xff]
    %v324 = vld [vmem:[%s1 + $0x7c0] sm:$0xff]
    %v325 = vld [vmem:[%s1 + $0x7c8] sm:$0xff]
    %v326 = vld [vmem:[%s1 + $0x7d0] sm:$0xff]
    %v327 = vld [vmem:[%s1 + $0x7d8] sm:$0xff]
    %v328 = vld [vmem:[%s1 + $0x7e0] sm:$0xff]
    %v329 = vld [vmem:[%s1 + $0x7e8] sm:$0xff]
    %v330 = vld [vmem:[%s1 + $0x7f0] sm:$0xff]
    %v331 = vld [vmem:[%s1 + $0x7f8] sm:$0xff]
    %v332 = vld [vmem:[%s1 + $0x800] sm:$0xff]
    %v333 = vld [vmem:[%s1 + $0x808] sm:$0xff]
    %v334 = vld [vmem:[%s1 + $0x810] sm:$0xff]
    %v335 = vld [vmem:[%s1 + $0x818] sm:$0xff]
    %v336 = vld [vmem:[%s1 + $0x820] sm:$0xff]
    %v337 = vld [vmem:[%s1 + $0x828] sm:$0xff]
    %v338 = vld [vmem:[%s1 + $0x830] sm:$0xff]
    %v339 = vld [vmem:[%s1 + $0x838] sm:$0xff]
    %v340 = vld [vmem:[%s1 + $0x840] sm:$0xff]
    %v341 = vld [vmem:[%s1 + $0x848] sm:$0xff]
    %v342 = vld [vmem:[%s1 + $0x850] sm:$0xff]
    %v343 = vld [vmem:[%s1 + $0x858] sm:$0xff]
    %v344 = vld [vmem:[%s1 + $0x860] sm:$0xff]
    %v345 = vld [vmem:[%s1 + $0x868] sm:$0xff]
    %v346 = vld [vmem:[%s1 + $0x870] sm:$0xff]
    %v347 = vld [vmem:[%s1 + $0x878] sm:$0xff]
    %v348 = vld [vmem:[%s1 + $0x880] sm:$0xff]
    %v349 = vld [vmem:[%s1 + $0x888] sm:$0xff]
    %v350 = vld [vmem:[%s1 + $0x890] sm:$0xff]
    %v351 = vld [vmem:[%s1 + $0x898] sm:$0xff]
    %v352 = vld [vmem:[%s1 + $0x8a0] sm:$0xff]
    %v353 = vld [vmem:[%s1 + $0x8a8] sm:$0xff]
    %v354 = vld [vmem:[%s1 + $0x8b0] sm:$0xff]
    %v355 = vld [vmem:[%s1 + $0x8b8] sm:$0xff]
    %v356 = vld [vmem:[%s1 + $0x8c0] sm:$0xff]
    %v357 = vld [vmem:[%s1 + $0x8c8] sm:$0xff]
    %v358 = vld [vmem:[%s1 + $0x8d0] sm:$0xff]
    %v359 = vld [vmem:[%s1 + $0x8d8] sm:$0xff]
    %v360 = vld [vmem:[%s1 + $0x8e0] sm:$0xff]
    %v361 = vld [vmem:[%s1 + $0x8e8] sm:$0xff]
    %v362 = vld [vmem:[%s1 + $0x8f0] sm:$0xff]
    %v363 = vld [vmem:[%s1 + $0x8f8] sm:$0xff]
    %v364 = vld [vmem:[%s1 + $0x900] sm:$0xff]
    %v365 = vld [vmem:[%s1 + $0x908] sm:$0xff]
    %v366 = vld [vmem:[%s1 + $0x910] sm:$0xff]
    %v367 = vld [vmem:[%s1 + $0x918] sm:$0xff]
    %v368 = vld [vmem:[%s1 + $0x920] sm:$0xff]
    %v369 = vld [vmem:[%s1 + $0x928] sm:$0xff]
    %v370 = vld [vmem:[%s1 + $0x930] sm:$0xff]
    %v371 = vld [vmem:[%s1 + $0x938] sm:$0xff]
    %v372 = vld [vmem:[%s1 + $0x940] sm:$0xff]
    %v373 = vld [vmem:[%s1 + $0x948] sm:$0xff]
    %v374 = vld [vmem:[%s1 + $0x950] sm:$0xff]
    %v375 = vld [vmem:[%s1 + $0x958] sm:$0xff]
    %v376 = vld [vmem:[%s1 + $0x960] sm:$0xff]
    %v377 = vld [vmem:[%s1 + $0x968] sm:$0xff]
    %v378 = vld [vmem:[%s1 + $0x970] sm:$0xff]
    %v379 = vld [vmem:[%s1 + $0x978] sm:$0xff]
    %v380 = vld [vmem:[%s1 + $0x980] sm:$0xff]
    %v381 = vld [vmem:[%s1 + $0x988] sm:$0xff]
    %v382 = vld [vmem:[%s1 + $0x990] sm:$0xff]
    %v383 = vld [vmem:[%s1 + $0x998] sm:$0xff]
    %v384 = vld [vmem:[%s1 + $0x9a0] sm:$0xff]
    %v385 = vld [vmem:[%s1 + $0x9a8] sm:$0xff]
    %v386 = vld [vmem:[%s1 + $0x9b0] sm:$0xff]
    %v387 = vld [vmem:[%s1 + $0x9b8] sm:$0xff]
    %v388 = vld [vmem:[%s1 + $0x9c0] sm:$0xff]
    %v389 = vld [vmem:[%s1 + $0x9c8] sm:$0xff]
    %v390 = vld [vmem:[%s1 + $0x9d0] sm:$0xff]
    %v391 = vld [vmem:[%s1 + $0x9d8] sm:$0xff]
    %v392 = vld [vmem:[%s1 + $0x9e0] sm:$0xff]
    %v393 = vld [vmem:[%s1 + $0x9e8] sm:$0xff]
    %v394 = vld [vmem:[%s1 + $0x9f0] sm:$0xff]
    %v395 = vld [vmem:[%s1 + $0x9f8] sm:$0xff]
    %v396 = vld [vmem:[%s1 + $0xa00] sm:$0xff]
    %v397 = vld [vmem:[%s1 + $0xa08] sm:$0xff]
    %v398 = vld [vmem:[%s1 + $0xa10] sm:$0xff]
    %v399 = vld [vmem:[%s1 + $0xa18] sm:$0xff]
    %v400 = vld [vmem:[%s1 + $0xa20] sm:$0xff]
    %v401 = vld [vmem:[%s1 + $0xa28] sm:$0xff]
    %v402 = vld [vmem:[%s1 + $0xa30] sm:$0xff]
    %v403 = vld [vmem:[%s1 + $0xa38] sm:$0xff]
    %v404 = vld [vmem:[%s1 + $0xa40] sm:$0xff]
    %v405 = vld [vmem:[%s1 + $0xa48] sm:$0xff]
    %v406 = vld [vmem:[%s1 + $0xa50] sm:$0xff]
    %v407 = vld [vmem:[%s1 + $0xa58] sm:$0xff]
    %v408 = vld [vmem:[%s1 + $0xa60] sm:$0xff]
    %v409 = vld [vmem:[%s1 + $0xa68] sm:$0xff]
    %v410 = vld [vmem:[%s1 + $0xa70] sm:$0xff]
    %v411 = vld [vmem:[%s1 + $0xa78] sm:$0xff]
    %v412 = vld [vmem:[%s1 + $0xa80] sm:$0xff]
    %v413 = vld [vmem:[%s1 + $0xa88] sm:$0xff]
    %v414 = vld [vmem:[%s1 + $0xa90] sm:$0xff]
    %v415 = vld [vmem:[%s1 + $0xa98] sm:$0xff]
    %v416 = vld [vmem:[%s1 + $0xaa0] sm:$0xff]
    %v417 = vld [vmem:[%s1 + $0xaa8] sm:$0xff]
    %v418 = vld [vmem:[%s1 + $0xab0] sm:$0xff]
    %v419 = vld [vmem:[%s1 + $0xab8] sm:$0xff]
    %v420 = vld [vmem:[%s1 + $0xac0] sm:$0xff]
    %v421 = vld [vmem:[%s1 + $0xac8] sm:$0xff]
    %v422 = vld [vmem:[%s1 + $0xad0] sm:$0xff]
    %v423 = vld [vmem:[%s1 + $0xad8] sm:$0xff]
    %v424 = vld [vmem:[%s1 + $0xae0] sm:$0xff]
    %v425 = vld [vmem:[%s1 + $0xae8] sm:$0xff]
    %v426 = vld [vmem:[%s1 + $0xaf0] sm:$0xff]
    %v427 = vld [vmem:[%s1 + $0xaf8] sm:$0xff]
    %v428 = vld [vmem:[%s1 + $0xb00] sm:$0xff]
    %v429 = vld [vmem:[%s1 + $0xb08] sm:$0xff]
    %v430 = vld [vmem:[%s1 + $0xb10] sm:$0xff]
    %v431 = vld [vmem:[%s1 + $0xb18] sm:$0xff]
    %v432 = vld [vmem:[%s1 + $0xb20] sm:$0xff]
    %v433 = vld [vmem:[%s1 + $0xb28] sm:$0xff]
    %v434 = vld [vmem:[%s1 + $0xb30] sm:$0xff]
    %v435 = vld [vmem:[%s1 + $0xb38] sm:$0xff]
    %v436 = vld [vmem:[%s1 + $0xb40] sm:$0xff]
    %v437 = vld [vmem:[%s1 + $0xb48] sm:$0xff]
    %v438 = vld [vmem:[%s1 + $0xb50] sm:$0xff]
    %v439 = vld [vmem:[%s1 + $0xb58] sm:$0xff]
    %v440 = vld [vmem:[%s1 + $0xb60] sm:$0xff]
    %v441 = vld [vmem:[%s1 + $0xb68] sm:$0xff]
    %v442 = vld [vmem:[%s1 + $0xb70] sm:$0xff]
    %v443 = vld [vmem:[%s1 + $0xb78] sm:$0xff]
    %v444 = vld [vmem:[%s1 + $0xb80] sm:$0xff]
    %v445 = vld [vmem:[%s1 + $0xb88] sm:$0xff]
    %v446 = vld [vmem:[%s1 + $0xb90] sm:$0xff]
    %v447 = vld [vmem:[%s1 + $0xb98] sm:$0xff]
    %v448 = vld [vmem:[%s1 + $0xba0] sm:$0xff]
    %v449 = vld [vmem:[%s1 + $0xba8] sm:$0xff]
    %v450 = vld [vmem:[%s1 + $0xbb0] sm:$0xff]
    %v451 = vld [vmem:[%s1 + $0xbb8] sm:$0xff]
    %v452 = vld [vmem:[%s1 + $0xbc0] sm:$0xff]
    %v453 = vld [vmem:[%s1 + $0xbc8] sm:$0xff]
    %v454 = vld [vmem:[%s1 + $0xbd0] sm:$0xff]
    %v455 = vld [vmem:[%s1 + $0xbd8] sm:$0xff]
    %v456 = vld [vmem:[%s1 + $0xbe0] sm:$0xff]
    %v457 = vld [vmem:[%s1 + $0xbe8] sm:$0xff]
    %v458 = vld [vmem:[%s1 + $0xbf0] sm:$0xff]
    %v459 = vld [vmem:[%s1 + $0xbf8] sm:$0xff]
    %v460 = vld [vmem:[%s1 + $0xc00] sm:$0xff]
    %v461 = vld [vmem:[%s1 + $0xc08] sm:$0xff]
    %v462 = vld [vmem:[%s1 + $0xc10] sm:$0xff]
    %v463 = vld [vmem:[%s1 + $0xc18] sm:$0xff]
    %v464 = vld [vmem:[%s1 + $0xc20] sm:$0xff]
    %v465 = vld [vmem:[%s1 + $0xc28] sm:$0xff]
    %v466 = vld [vmem:[%s1 + $0xc30] sm:$0xff]
    %v467 = vld [vmem:[%s1 + $0xc38] sm:$0xff]
    %v468 = vld [vmem:[%s1 + $0xc40] sm:$0xff]
    %v469 = vld [vmem:[%s1 + $0xc48] sm:$0xff]
    %v470 = vld [vmem:[%s1 + $0xc50] sm:$0xff]
    %v471 = vld [vmem:[%s1 + $0xc58] sm:$0xff]
    %v472 = vld [vmem:[%s1 + $0xc60] sm:$0xff]
    %v473 = vld [vmem:[%s1 + $0xc68] sm:$0xff]
    %v474 = vld [vmem:[%s1 + $0xc70] sm:$0xff]
    %v475 = vld [vmem:[%s1 + $0xc78] sm:$0xff]
    %v476 = vld [vmem:[%s1 + $0xc80] sm:$0xff]
    %v477 = vld [vmem:[%s1 + $0xc88] sm:$0xff]
    %v478 = vld [vmem:[%s1 + $0xc90] sm:$0xff]
    %v479 = vld [vmem:[%s1 + $0xc98] sm:$0xff]
    %v480 = vld [vmem:[%s1 + $0xca0] sm:$0xff]
    %v481 = vld [vmem:[%s1 + $0xca8] sm:$0xff]
    %v482 = vld [vmem:[%s1 + $0xcb0] sm:$0xff]
    %v483 = vld [vmem:[%s1 + $0xcb8] sm:$0xff]
    %v484 = vld [vmem:[%s1 + $0xcc0] sm:$0xff]
    %v485 = vld [vmem:[%s1 + $0xcc8] sm:$0xff]
    %v486 = vld [vmem:[%s1 + $0xcd0] sm:$0xff]
    %v487 = vld [vmem:[%s1 + $0xcd8] sm:$0xff]
    %v488 = vld [vmem:[%s1 + $0xce0] sm:$0xff]
    %v489 = vld [vmem:[%s1 + $0xce8] sm:$0xff]
    %v490 = vld [vmem:[%s1 + $0xcf0] sm:$0xff]
    %v491 = vld [vmem:[%s1 + $0xcf8] sm:$0xff]
    %v492 = vld [vmem:[%s1 + $0xd00] sm:$0xff]
    %v493 = vld [vmem:[%s1 + $0xd08] sm:$0xff]
    %v494 = vld [vmem:[%s1 + $0xd10] sm:$0xff]
    %v495 = vld [vmem:[%s1 + $0xd18] sm:$0xff]
    %v496 = vld [vmem:[%s1 + $0xd20] sm:$0xff]
    %v497 = vld [vmem:[%s1 + $0xd28] sm:$0xff]
    %v498 = vld [vmem:[%s1 + $0xd30] sm:$0xff]
    %v499 = vld [vmem:[%s1 + $0xd38] sm:$0xff]
    %v500 = vld [vmem:[%s1 + $0xd40] sm:$0xff]
    %v501 = vld [vmem:[%s1 + $0xd48] sm:$0xff]
    %v502 = vld [vmem:[%s1 + $0xd50] sm:$0xff]
    %v503 = vld [vmem:[%s1 + $0xd58] sm:$0xff]
    %v504 = vld [vmem:[%s1 + $0xd60] sm:$0xff]
    %v505 = vld [vmem:[%s1 + $0xd68] sm:$0xff]
    %v506 = vld [vmem:[%s1 + $0xd70] sm:$0xff]
    %v507 = vld [vmem:[%s1 + $0xd78] sm:$0xff]
    %v508 = vld [vmem:[%s1 + $0xd80] sm:$0xff]
    %v509 = vld [vmem:[%s1 + $0xd88] sm:$0xff]
    %v510 = vld [vmem:[%s1 + $0xd90] sm:$0xff]
    %v511 = vld [vmem:[%s1 + $0xd98] sm:$0xff]
    %v512 = vld [vmem:[%s1 + $0xda0] sm:$0xff]
    %v513 = vld [vmem:[%s1 + $0xda8] sm:$0xff]
    %v514 = vld [vmem:[%s1 + $0xdb0] sm:$0xff]
    %v515 = vld [vmem:[%s1 + $0xdb8] sm:$0xff]
    %v516 = vld [vmem:[%s1 + $0xdc0] sm:$0xff]
    %v517 = vld [vmem:[%s1 + $0xdc8] sm:$0xff]
    %v518 = vld [vmem:[%s1 + $0xdd0] sm:$0xff]
    %v519 = vld [vmem:[%s1 + $0xdd8] sm:$0xff]
    %v520 = vld [vmem:[%s1 + $0xde0] sm:$0xff]
    %v521 = vld [vmem:[%s1 + $0xde8] sm:$0xff]
    %v522 = vld [vmem:[%s1 + $0xdf0] sm:$0xff]
    %v523 = vld [vmem:[%s1 + $0xdf8] sm:$0xff]
    %v524 = vld [vmem:[%s1 + $0xe00] sm:$0xff]
    %v525 = vld [vmem:[%s1 + $0xe08] sm:$0xff]
    %v526 = vld [vmem:[%s1 + $0xe10] sm:$0xff]
    %v527 = vld [vmem:[%s1 + $0xe18] sm:$0xff]
    %v528 = vld [vmem:[%s1 + $0xe20] sm:$0xff]
    %v529 = vld [vmem:[%s1 + $0xe28] sm:$0xff]
    %v530 = vld [vmem:[%s1 + $0xe30] sm:$0xff]
    %v531 = vld [vmem:[%s1 + $0xe38] sm:$0xff]
    %v532 = vld [vmem:[%s1 + $0xe40] sm:$0xff]
    %v533 = vld [vmem:[%s1 + $0xe48] sm:$0xff]
    %v534 = vld [vmem:[%s1 + $0xe50] sm:$0xff]
    %v535 = vld [vmem:[%s1 + $0xe58] sm:$0xff]
    %v536 = vld [vmem:[%s1 + $0xe60] sm:$0xff]
    %v537 = vld [vmem:[%s1 + $0xe68] sm:$0xff]
    %v538 = vld [vmem:[%s1 + $0xe70] sm:$0xff]
    %v539 = vld [vmem:[%s1 + $0xe78] sm:$0xff]
    %v540 = vld [vmem:[%s1 + $0xe80] sm:$0xff]
    %v541 = vld [vmem:[%s1 + $0xe88] sm:$0xff]
    %v542 = vld [vmem:[%s1 + $0xe90] sm:$0xff]
    %v543 = vld [vmem:[%s1 + $0xe98] sm:$0xff]
    %v544 = vld [vmem:[%s1 + $0xea0] sm:$0xff]
    %v545 = vld [vmem:[%s1 + $0xea8] sm:$0xff]
    %v546 = vld [vmem:[%s1 + $0xeb0] sm:$0xff]
    %v547 = vld [vmem:[%s1 + $0xeb8] sm:$0xff]
    %v548 = vld [vmem:[%s1 + $0xec0] sm:$0xff]
    %v549 = vld [vmem:[%s1 + $0xec8] sm:$0xff]
    %v550 = vld [vmem:[%s1 + $0xed0] sm:$0xff]
    %v551 = vld [vmem:[%s1 + $0xed8] sm:$0xff]
    %v552 = vld [vmem:[%s1 + $0xee0] sm:$0xff]
    %v553 = vld [vmem:[%s1 + $0xee8] sm:$0xff]
    %v554 = vld [vmem:[%s1 + $0xef0] sm:$0xff]
    %v555 = vld [vmem:[%s1 + $0xef8] sm:$0xff]
    %v556 = vld [vmem:[%s1 + $0xf00] sm:$0xff]
    %v557 = vld [vmem:[%s1 + $0xf08] sm:$0xff]
    %v558 = vld [vmem:[%s1 + $0xf10] sm:$0xff]
    %v559 = vld [vmem:[%s1 + $0xf18] sm:$0xff]
    %v560 = vld [vmem:[%s1 + $0xf20] sm:$0xff]
    %v561 = vld [vmem:[%s1 + $0xf28] sm:$0xff]
    %v562 = vld [vmem:[%s1 + $0xf30] sm:$0xff]
    %v563 = vld [vmem:[%s1 + $0xf38] sm:$0xff]
    %v564 = vld [vmem:[%s1 + $0xf40] sm:$0xff]
    %v565 = vld [vmem:[%s1 + $0xf48] sm:$0xff]
    %v566 = vld [vmem:[%s1 + $0xf50] sm:$0xff]
    %v567 = vld [vmem:[%s1 + $0xf58] sm:$0xff]
    %v568 = vld [vmem:[%s1 + $0xf60] sm:$0xff]
    %v569 = vld [vmem:[%s1 + $0xf68] sm:$0xff]
    %v570 = vld [vmem:[%s1 + $0xf70] sm:$0xff]
    %v571 = vld [vmem:[%s1 + $0xf78] sm:$0xff]
    %v572 = vld [vmem:[%s1 + $0xf80] sm:$0xff]
    %v573 = vld [vmem:[%s1 + $0xf88] sm:$0xff]
    %v574 = vld [vmem:[%s1 + $0xf90] sm:$0xff]
    %v575 = vld [vmem:[%s1 + $0xf98] sm:$0xff]
    %v576 = vld [vmem:[%s1 + $0xfa0] sm:$0xff]
    %v577 = vld [vmem:[%s1 + $0xfa8] sm:$0xff]
    %v578 = vld [vmem:[%s1 + $0xfb0] sm:$0xff]
    %v579 = vld [vmem:[%s1 + $0xfb8] sm:$0xff]
    %v580 = vld [vmem:[%s1 + $0xfc0] sm:$0xff]
    %v581 = vld [vmem:[%s1 + $0xfc8] sm:$0xff]
    %v582 = vld [vmem:[%s1 + $0xfd0] sm:$0xff]
    %v583 = vld [vmem:[%s1 + $0xfd8] sm:$0xff]
    %v584 = vld [vmem:[%s1 + $0xfe0] sm:$0xff]
    %v585 = vld [vmem:[%s1 + $0xfe8] sm:$0xff]
    %v586 = vld [vmem:[%s1 + $0xff0] sm:$0xff]
    %v587 = vld [vmem:[%s1 + $0xff8] sm:$0xff]
    %v588 = vld [vmem:[%s2] sm:$0xf]
    %v590 = vlaneseq
    %v591 = vshrl.u32 %v590, 7
    %v592 = vsub.s32 0, %v591
    %v593 = vrot.slane %v588, %v592
    %v594 = vlaneseq
    %v595 = vshrl.u32 %v594, 7
    %v596 = vsub.s32 1, %v595
    %v597 = vrot.slane %v588, %v596
    %v598 = vlaneseq
    %v599 = vshrl.u32 %v598, 7
    %v600 = vsub.s32 2, %v599
    %v601 = vrot.slane %v588, %v600
    %v602 = vlaneseq
    %v603 = vshrl.u32 %v602, 7
    %v604 = vsub.s32 3, %v603
    %v605 = vrot.slane %v588, %v604
    %v1122 = vunpack.c.l.b16 %v76
    %v1123 = vunpack.c.h.b16 %v76
    %v1124 = vunpack.c.l.b16 %v77
    %v1125 = vunpack.c.h.b16 %v77
    %v1126 = vunpack.c.l.b16 %v78
    %v1127 = vunpack.c.h.b16 %v78
    %v1128 = vunpack.c.l.b16 %v79
    %v1129 = vunpack.c.h.b16 %v79
    %v1130 = vunpack.c.l.b16 %v80
    %v1131 = vunpack.c.h.b16 %v80
    %v1132 = vunpack.c.l.b16 %v81
    %v1133 = vunpack.c.h.b16 %v81
    %v1134 = vunpack.c.l.b16 %v82
    %v1135 = vunpack.c.h.b16 %v82
    %v1136 = vunpack.c.l.b16 %v83
    %v1137 = vunpack.c.h.b16 %v83
    %v1138 = vunpack.c.l.b16 %v84
    %v1139 = vunpack.c.h.b16 %v84
    %v1140 = vunpack.c.l.b16 %v85
    %v1141 = vunpack.c.h.b16 %v85
    %v1142 = vunpack.c.l.b16 %v86
    %v1143 = vunpack.c.h.b16 %v86
    %v1144 = vunpack.c.l.b16 %v87
    %v1145 = vunpack.c.h.b16 %v87
    %v1146 = vunpack.c.l.b16 %v88
    %v1147 = vunpack.c.h.b16 %v88
    %v1148 = vunpack.c.l.b16 %v89
    %v1149 = vunpack.c.h.b16 %v89
    %v1150 = vunpack.c.l.b16 %v90
    %v1151 = vunpack.c.h.b16 %v90
    %v1152 = vunpack.c.l.b16 %v91
    %v1153 = vunpack.c.h.b16 %v91
    %v1154 = vunpack.c.l.b16 %v92
    %v1155 = vunpack.c.h.b16 %v92
    %v1156 = vunpack.c.l.b16 %v93
    %v1157 = vunpack.c.h.b16 %v93
    %v1158 = vunpack.c.l.b16 %v94
    %v1159 = vunpack.c.h.b16 %v94
    %v1160 = vunpack.c.l.b16 %v95
    %v1161 = vunpack.c.h.b16 %v95
    %v1162 = vunpack.c.l.b16 %v96
    %v1163 = vunpack.c.h.b16 %v96
    %v1164 = vunpack.c.l.b16 %v97
    %v1165 = vunpack.c.h.b16 %v97
    %v1166 = vunpack.c.l.b16 %v98
    %v1167 = vunpack.c.h.b16 %v98
    %v1168 = vunpack.c.l.b16 %v99
    %v1169 = vunpack.c.h.b16 %v99
    %v1170 = vunpack.c.l.b16 %v100
    %v1171 = vunpack.c.h.b16 %v100
    %v1172 = vunpack.c.l.b16 %v101
    %v1173 = vunpack.c.h.b16 %v101
    %v1174 = vunpack.c.l.b16 %v102
    %v1175 = vunpack.c.h.b16 %v102
    %v1176 = vunpack.c.l.b16 %v103
    %v1177 = vunpack.c.h.b16 %v103
    %v1178 = vunpack.c.l.b16 %v104
    %v1179 = vunpack.c.h.b16 %v104
    %v1180 = vunpack.c.l.b16 %v105
    %v1181 = vunpack.c.h.b16 %v105
    %v1182 = vunpack.c.l.b16 %v106
    %v1183 = vunpack.c.h.b16 %v106
    %v1184 = vunpack.c.l.b16 %v107
    %v1185 = vunpack.c.h.b16 %v107
    %v1186 = vunpack.c.l.b16 %v108
    %v1187 = vunpack.c.h.b16 %v108
    %v1188 = vunpack.c.l.b16 %v109
    %v1189 = vunpack.c.h.b16 %v109
    %v1190 = vunpack.c.l.b16 %v110
    %v1191 = vunpack.c.h.b16 %v110
    %v1192 = vunpack.c.l.b16 %v111
    %v1193 = vunpack.c.h.b16 %v111
    %v1194 = vunpack.c.l.b16 %v112
    %v1195 = vunpack.c.h.b16 %v112
    %v1196 = vunpack.c.l.b16 %v113
    %v1197 = vunpack.c.h.b16 %v113
    %v1198 = vunpack.c.l.b16 %v114
    %v1199 = vunpack.c.h.b16 %v114
    %v1200 = vunpack.c.l.b16 %v115
    %v1201 = vunpack.c.h.b16 %v115
    %v1202 = vunpack.c.l.b16 %v116
    %v1203 = vunpack.c.h.b16 %v116
    %v1204 = vunpack.c.l.b16 %v117
    %v1205 = vunpack.c.h.b16 %v117
    %v1206 = vunpack.c.l.b16 %v118
    %v1207 = vunpack.c.h.b16 %v118
    %v1208 = vunpack.c.l.b16 %v119
    %v1209 = vunpack.c.h.b16 %v119
    %v1210 = vunpack.c.l.b16 %v120
    %v1211 = vunpack.c.h.b16 %v120
    %v1212 = vunpack.c.l.b16 %v121
    %v1213 = vunpack.c.h.b16 %v121
    %v1214 = vunpack.c.l.b16 %v122
    %v1215 = vunpack.c.h.b16 %v122
    %v1216 = vunpack.c.l.b16 %v123
    %v1217 = vunpack.c.h.b16 %v123
    %v1218 = vunpack.c.l.b16 %v124
    %v1219 = vunpack.c.h.b16 %v124
    %v1220 = vunpack.c.l.b16 %v125
    %v1221 = vunpack.c.h.b16 %v125
    %v1222 = vunpack.c.l.b16 %v126
    %v1223 = vunpack.c.h.b16 %v126
    %v1224 = vunpack.c.l.b16 %v127
    %v1225 = vunpack.c.h.b16 %v127
    %v1226 = vunpack.c.l.b16 %v128
    %v1227 = vunpack.c.h.b16 %v128
    %v1228 = vunpack.c.l.b16 %v129
    %v1229 = vunpack.c.h.b16 %v129
    %v1230 = vunpack.c.l.b16 %v130
    %v1231 = vunpack.c.h.b16 %v130
    %v1232 = vunpack.c.l.b16 %v131
    %v1233 = vunpack.c.h.b16 %v131
    %v1234 = vunpack.c.l.b16 %v132
    %v1235 = vunpack.c.h.b16 %v132
    %v1236 = vunpack.c.l.b16 %v133
    %v1237 = vunpack.c.h.b16 %v133
    %v1238 = vunpack.c.l.b16 %v134
    %v1239 = vunpack.c.h.b16 %v134
    %v1240 = vunpack.c.l.b16 %v135
    %v1241 = vunpack.c.h.b16 %v135
    %v1242 = vunpack.c.l.b16 %v136
    %v1243 = vunpack.c.h.b16 %v136
    %v1244 = vunpack.c.l.b16 %v137
    %v1245 = vunpack.c.h.b16 %v137
    %v1246 = vunpack.c.l.b16 %v138
    %v1247 = vunpack.c.h.b16 %v138
    %v1248 = vunpack.c.l.b16 %v139
    %v1249 = vunpack.c.h.b16 %v139
    %v1250 = vunpack.c.l.b16 %v140
    %v1251 = vunpack.c.h.b16 %v140
    %v1252 = vunpack.c.l.b16 %v141
    %v1253 = vunpack.c.h.b16 %v141
    %v1254 = vunpack.c.l.b16 %v142
    %v1255 = vunpack.c.h.b16 %v142
    %v1256 = vunpack.c.l.b16 %v143
    %v1257 = vunpack.c.h.b16 %v143
    %v1258 = vunpack.c.l.b16 %v144
    %v1259 = vunpack.c.h.b16 %v144
    %v1260 = vunpack.c.l.b16 %v145
    %v1261 = vunpack.c.h.b16 %v145
    %v1262 = vunpack.c.l.b16 %v146
    %v1263 = vunpack.c.h.b16 %v146
    %v1264 = vunpack.c.l.b16 %v147
    %v1265 = vunpack.c.h.b16 %v147
    %v1266 = vunpack.c.l.b16 %v148
    %v1267 = vunpack.c.h.b16 %v148
    %v1268 = vunpack.c.l.b16 %v149
    %v1269 = vunpack.c.h.b16 %v149
    %v1270 = vunpack.c.l.b16 %v150
    %v1271 = vunpack.c.h.b16 %v150
    %v1272 = vunpack.c.l.b16 %v151
    %v1273 = vunpack.c.h.b16 %v151
    %v1274 = vunpack.c.l.b16 %v152
    %v1275 = vunpack.c.h.b16 %v152
    %v1276 = vunpack.c.l.b16 %v153
    %v1277 = vunpack.c.h.b16 %v153
    %v1278 = vunpack.c.l.b16 %v154
    %v1279 = vunpack.c.h.b16 %v154
    %v1280 = vunpack.c.l.b16 %v155
    %v1281 = vunpack.c.h.b16 %v155
    %v1282 = vunpack.c.l.b16 %v156
    %v1283 = vunpack.c.h.b16 %v156
    %v1284 = vunpack.c.l.b16 %v157
    %v1285 = vunpack.c.h.b16 %v157
    %v1286 = vunpack.c.l.b16 %v158
    %v1287 = vunpack.c.h.b16 %v158
    %v1288 = vunpack.c.l.b16 %v159
    %v1289 = vunpack.c.h.b16 %v159
    %v1290 = vunpack.c.l.b16 %v160
    %v1291 = vunpack.c.h.b16 %v160
    %v1292 = vunpack.c.l.b16 %v161
    %v1293 = vunpack.c.h.b16 %v161
    %v1294 = vunpack.c.l.b16 %v162
    %v1295 = vunpack.c.h.b16 %v162
    %v1296 = vunpack.c.l.b16 %v163
    %v1297 = vunpack.c.h.b16 %v163
    %v1298 = vunpack.c.l.b16 %v164
    %v1299 = vunpack.c.h.b16 %v164
    %v1300 = vunpack.c.l.b16 %v165
    %v1301 = vunpack.c.h.b16 %v165
    %v1302 = vunpack.c.l.b16 %v166
    %v1303 = vunpack.c.h.b16 %v166
    %v1304 = vunpack.c.l.b16 %v167
    %v1305 = vunpack.c.h.b16 %v167
    %v1306 = vunpack.c.l.b16 %v168
    %v1307 = vunpack.c.h.b16 %v168
    %v1308 = vunpack.c.l.b16 %v169
    %v1309 = vunpack.c.h.b16 %v169
    %v1310 = vunpack.c.l.b16 %v170
    %v1311 = vunpack.c.h.b16 %v170
    %v1312 = vunpack.c.l.b16 %v171
    %v1313 = vunpack.c.h.b16 %v171
    %v1314 = vunpack.c.l.b16 %v172
    %v1315 = vunpack.c.h.b16 %v172
    %v1316 = vunpack.c.l.b16 %v173
    %v1317 = vunpack.c.h.b16 %v173
    %v1318 = vunpack.c.l.b16 %v174
    %v1319 = vunpack.c.h.b16 %v174
    %v1320 = vunpack.c.l.b16 %v175
    %v1321 = vunpack.c.h.b16 %v175
    %v1322 = vunpack.c.l.b16 %v176
    %v1323 = vunpack.c.h.b16 %v176
    %v1324 = vunpack.c.l.b16 %v177
    %v1325 = vunpack.c.h.b16 %v177
    %v1326 = vunpack.c.l.b16 %v178
    %v1327 = vunpack.c.h.b16 %v178
    %v1328 = vunpack.c.l.b16 %v179
    %v1329 = vunpack.c.h.b16 %v179
    %v1330 = vunpack.c.l.b16 %v180
    %v1331 = vunpack.c.h.b16 %v180
    %v1332 = vunpack.c.l.b16 %v181
    %v1333 = vunpack.c.h.b16 %v181
    %v1334 = vunpack.c.l.b16 %v182
    %v1335 = vunpack.c.h.b16 %v182
    %v1336 = vunpack.c.l.b16 %v183
    %v1337 = vunpack.c.h.b16 %v183
    %v1338 = vunpack.c.l.b16 %v184
    %v1339 = vunpack.c.h.b16 %v184
    %v1340 = vunpack.c.l.b16 %v185
    %v1341 = vunpack.c.h.b16 %v185
    %v1342 = vunpack.c.l.b16 %v186
    %v1343 = vunpack.c.h.b16 %v186
    %v1344 = vunpack.c.l.b16 %v187
    %v1345 = vunpack.c.h.b16 %v187
    %v1346 = vunpack.c.l.b16 %v188
    %v1347 = vunpack.c.h.b16 %v188
    %v1348 = vunpack.c.l.b16 %v189
    %v1349 = vunpack.c.h.b16 %v189
    %v1350 = vunpack.c.l.b16 %v190
    %v1351 = vunpack.c.h.b16 %v190
    %v1352 = vunpack.c.l.b16 %v191
    %v1353 = vunpack.c.h.b16 %v191
    %v1354 = vunpack.c.l.b16 %v192
    %v1355 = vunpack.c.h.b16 %v192
    %v1356 = vunpack.c.l.b16 %v193
    %v1357 = vunpack.c.h.b16 %v193
    %v1358 = vunpack.c.l.b16 %v194
    %v1359 = vunpack.c.h.b16 %v194
    %v1360 = vunpack.c.l.b16 %v195
    %v1361 = vunpack.c.h.b16 %v195
    %v1362 = vunpack.c.l.b16 %v196
    %v1363 = vunpack.c.h.b16 %v196
    %v1364 = vunpack.c.l.b16 %v197
    %v1365 = vunpack.c.h.b16 %v197
    %v1366 = vunpack.c.l.b16 %v198
    %v1367 = vunpack.c.h.b16 %v198
    %v1368 = vunpack.c.l.b16 %v199
    %v1369 = vunpack.c.h.b16 %v199
    %v1370 = vunpack.c.l.b16 %v200
    %v1371 = vunpack.c.h.b16 %v200
    %v1372 = vunpack.c.l.b16 %v201
    %v1373 = vunpack.c.h.b16 %v201
    %v1374 = vunpack.c.l.b16 %v202
    %v1375 = vunpack.c.h.b16 %v202
    %v1376 = vunpack.c.l.b16 %v203
    %v1377 = vunpack.c.h.b16 %v203
    %v1378 = vunpack.c.l.b16 %v204
    %v1379 = vunpack.c.h.b16 %v204
    %v1380 = vunpack.c.l.b16 %v205
    %v1381 = vunpack.c.h.b16 %v205
    %v1382 = vunpack.c.l.b16 %v206
    %v1383 = vunpack.c.h.b16 %v206
    %v1384 = vunpack.c.l.b16 %v207
    %v1385 = vunpack.c.h.b16 %v207
    %v1386 = vunpack.c.l.b16 %v208
    %v1387 = vunpack.c.h.b16 %v208
    %v1388 = vunpack.c.l.b16 %v209
    %v1389 = vunpack.c.h.b16 %v209
    %v1390 = vunpack.c.l.b16 %v210
    %v1391 = vunpack.c.h.b16 %v210
    %v1392 = vunpack.c.l.b16 %v211
    %v1393 = vunpack.c.h.b16 %v211
    %v1394 = vunpack.c.l.b16 %v212
    %v1395 = vunpack.c.h.b16 %v212
    %v1396 = vunpack.c.l.b16 %v213
    %v1397 = vunpack.c.h.b16 %v213
    %v1398 = vunpack.c.l.b16 %v214
    %v1399 = vunpack.c.h.b16 %v214
    %v1400 = vunpack.c.l.b16 %v215
    %v1401 = vunpack.c.h.b16 %v215
    %v1402 = vunpack.c.l.b16 %v216
    %v1403 = vunpack.c.h.b16 %v216
    %v1404 = vunpack.c.l.b16 %v217
    %v1405 = vunpack.c.h.b16 %v217
    %v1406 = vunpack.c.l.b16 %v218
    %v1407 = vunpack.c.h.b16 %v218
    %v1408 = vunpack.c.l.b16 %v219
    %v1409 = vunpack.c.h.b16 %v219
    %v1410 = vunpack.c.l.b16 %v220
    %v1411 = vunpack.c.h.b16 %v220
    %v1412 = vunpack.c.l.b16 %v221
    %v1413 = vunpack.c.h.b16 %v221
    %v1414 = vunpack.c.l.b16 %v222
    %v1415 = vunpack.c.h.b16 %v222
    %v1416 = vunpack.c.l.b16 %v223
    %v1417 = vunpack.c.h.b16 %v223
    %v1418 = vunpack.c.l.b16 %v224
    %v1419 = vunpack.c.h.b16 %v224
    %v1420 = vunpack.c.l.b16 %v225
    %v1421 = vunpack.c.h.b16 %v225
    %v1422 = vunpack.c.l.b16 %v226
    %v1423 = vunpack.c.h.b16 %v226
    %v1424 = vunpack.c.l.b16 %v227
    %v1425 = vunpack.c.h.b16 %v227
    %v1426 = vunpack.c.l.b16 %v228
    %v1427 = vunpack.c.h.b16 %v228
    %v1428 = vunpack.c.l.b16 %v229
    %v1429 = vunpack.c.h.b16 %v229
    %v1430 = vunpack.c.l.b16 %v230
    %v1431 = vunpack.c.h.b16 %v230
    %v1432 = vunpack.c.l.b16 %v231
    %v1433 = vunpack.c.h.b16 %v231
    %v1434 = vunpack.c.l.b16 %v232
    %v1435 = vunpack.c.h.b16 %v232
    %v1436 = vunpack.c.l.b16 %v233
    %v1437 = vunpack.c.h.b16 %v233
    %v1438 = vunpack.c.l.b16 %v234
    %v1439 = vunpack.c.h.b16 %v234
    %v1440 = vunpack.c.l.b16 %v235
    %v1441 = vunpack.c.h.b16 %v235
    %v1442 = vunpack.c.l.b16 %v236
    %v1443 = vunpack.c.h.b16 %v236
    %v1444 = vunpack.c.l.b16 %v237
    %v1445 = vunpack.c.h.b16 %v237
    %v1446 = vunpack.c.l.b16 %v238
    %v1447 = vunpack.c.h.b16 %v238
    %v1448 = vunpack.c.l.b16 %v239
    %v1449 = vunpack.c.h.b16 %v239
    %v1450 = vunpack.c.l.b16 %v240
    %v1451 = vunpack.c.h.b16 %v240
    %v1452 = vunpack.c.l.b16 %v241
    %v1453 = vunpack.c.h.b16 %v241
    %v1454 = vunpack.c.l.b16 %v242
    %v1455 = vunpack.c.h.b16 %v242
    %v1456 = vunpack.c.l.b16 %v243
    %v1457 = vunpack.c.h.b16 %v243
    %v1458 = vunpack.c.l.b16 %v244
    %v1459 = vunpack.c.h.b16 %v244
    %v1460 = vunpack.c.l.b16 %v245
    %v1461 = vunpack.c.h.b16 %v245
    %v1462 = vunpack.c.l.b16 %v246
    %v1463 = vunpack.c.h.b16 %v246
    %v1464 = vunpack.c.l.b16 %v247
    %v1465 = vunpack.c.h.b16 %v247
    %v1466 = vunpack.c.l.b16 %v248
    %v1467 = vunpack.c.h.b16 %v248
    %v1468 = vunpack.c.l.b16 %v249
    %v1469 = vunpack.c.h.b16 %v249
    %v1470 = vunpack.c.l.b16 %v250
    %v1471 = vunpack.c.h.b16 %v250
    %v1472 = vunpack.c.l.b16 %v251
    %v1473 = vunpack.c.h.b16 %v251
    %v1474 = vunpack.c.l.b16 %v252
    %v1475 = vunpack.c.h.b16 %v252
    %v1476 = vunpack.c.l.b16 %v253
    %v1477 = vunpack.c.h.b16 %v253
    %v1478 = vunpack.c.l.b16 %v254
    %v1479 = vunpack.c.h.b16 %v254
    %v1480 = vunpack.c.l.b16 %v255
    %v1481 = vunpack.c.h.b16 %v255
    %v1482 = vunpack.c.l.b16 %v256
    %v1483 = vunpack.c.h.b16 %v256
    %v1484 = vunpack.c.l.b16 %v257
    %v1485 = vunpack.c.h.b16 %v257
    %v1486 = vunpack.c.l.b16 %v258
    %v1487 = vunpack.c.h.b16 %v258
    %v1488 = vunpack.c.l.b16 %v259
    %v1489 = vunpack.c.h.b16 %v259
    %v1490 = vunpack.c.l.b16 %v260
    %v1491 = vunpack.c.h.b16 %v260
    %v1492 = vunpack.c.l.b16 %v261
    %v1493 = vunpack.c.h.b16 %v261
    %v1494 = vunpack.c.l.b16 %v262
    %v1495 = vunpack.c.h.b16 %v262
    %v1496 = vunpack.c.l.b16 %v263
    %v1497 = vunpack.c.h.b16 %v263
    %v1498 = vunpack.c.l.b16 %v264
    %v1499 = vunpack.c.h.b16 %v264
    %v1500 = vunpack.c.l.b16 %v265
    %v1501 = vunpack.c.h.b16 %v265
    %v1502 = vunpack.c.l.b16 %v266
    %v1503 = vunpack.c.h.b16 %v266
    %v1504 = vunpack.c.l.b16 %v267
    %v1505 = vunpack.c.h.b16 %v267
    %v1506 = vunpack.c.l.b16 %v268
    %v1507 = vunpack.c.h.b16 %v268
    %v1508 = vunpack.c.l.b16 %v269
    %v1509 = vunpack.c.h.b16 %v269
    %v1510 = vunpack.c.l.b16 %v270
    %v1511 = vunpack.c.h.b16 %v270
    %v1512 = vunpack.c.l.b16 %v271
    %v1513 = vunpack.c.h.b16 %v271
    %v1514 = vunpack.c.l.b16 %v272
    %v1515 = vunpack.c.h.b16 %v272
    %v1516 = vunpack.c.l.b16 %v273
    %v1517 = vunpack.c.h.b16 %v273
    %v1518 = vunpack.c.l.b16 %v274
    %v1519 = vunpack.c.h.b16 %v274
    %v1520 = vunpack.c.l.b16 %v275
    %v1521 = vunpack.c.h.b16 %v275
    %v1522 = vunpack.c.l.b16 %v276
    %v1523 = vunpack.c.h.b16 %v276
    %v1524 = vunpack.c.l.b16 %v277
    %v1525 = vunpack.c.h.b16 %v277
    %v1526 = vunpack.c.l.b16 %v278
    %v1527 = vunpack.c.h.b16 %v278
    %v1528 = vunpack.c.l.b16 %v279
    %v1529 = vunpack.c.h.b16 %v279
    %v1530 = vunpack.c.l.b16 %v280
    %v1531 = vunpack.c.h.b16 %v280
    %v1532 = vunpack.c.l.b16 %v281
    %v1533 = vunpack.c.h.b16 %v281
    %v1534 = vunpack.c.l.b16 %v282
    %v1535 = vunpack.c.h.b16 %v282
    %v1536 = vunpack.c.l.b16 %v283
    %v1537 = vunpack.c.h.b16 %v283
    %v1538 = vunpack.c.l.b16 %v284
    %v1539 = vunpack.c.h.b16 %v284
    %v1540 = vunpack.c.l.b16 %v285
    %v1541 = vunpack.c.h.b16 %v285
    %v1542 = vunpack.c.l.b16 %v286
    %v1543 = vunpack.c.h.b16 %v286
    %v1544 = vunpack.c.l.b16 %v287
    %v1545 = vunpack.c.h.b16 %v287
    %v1546 = vunpack.c.l.b16 %v288
    %v1547 = vunpack.c.h.b16 %v288
    %v1548 = vunpack.c.l.b16 %v289
    %v1549 = vunpack.c.h.b16 %v289
    %v1550 = vunpack.c.l.b16 %v290
    %v1551 = vunpack.c.h.b16 %v290
    %v1552 = vunpack.c.l.b16 %v291
    %v1553 = vunpack.c.h.b16 %v291
    %v1554 = vunpack.c.l.b16 %v292
    %v1555 = vunpack.c.h.b16 %v292
    %v1556 = vunpack.c.l.b16 %v293
    %v1557 = vunpack.c.h.b16 %v293
    %v1558 = vunpack.c.l.b16 %v294
    %v1559 = vunpack.c.h.b16 %v294
    %v1560 = vunpack.c.l.b16 %v295
    %v1561 = vunpack.c.h.b16 %v295
    %v1562 = vunpack.c.l.b16 %v296
    %v1563 = vunpack.c.h.b16 %v296
    %v1564 = vunpack.c.l.b16 %v297
    %v1565 = vunpack.c.h.b16 %v297
    %v1566 = vunpack.c.l.b16 %v298
    %v1567 = vunpack.c.h.b16 %v298
    %v1568 = vunpack.c.l.b16 %v299
    %v1569 = vunpack.c.h.b16 %v299
    %v1570 = vunpack.c.l.b16 %v300
    %v1571 = vunpack.c.h.b16 %v300
    %v1572 = vunpack.c.l.b16 %v301
    %v1573 = vunpack.c.h.b16 %v301
    %v1574 = vunpack.c.l.b16 %v302
    %v1575 = vunpack.c.h.b16 %v302
    %v1576 = vunpack.c.l.b16 %v303
    %v1577 = vunpack.c.h.b16 %v303
    %v1578 = vunpack.c.l.b16 %v304
    %v1579 = vunpack.c.h.b16 %v304
    %v1580 = vunpack.c.l.b16 %v305
    %v1581 = vunpack.c.h.b16 %v305
    %v1582 = vunpack.c.l.b16 %v306
    %v1583 = vunpack.c.h.b16 %v306
    %v1584 = vunpack.c.l.b16 %v307
    %v1585 = vunpack.c.h.b16 %v307
    %v1586 = vunpack.c.l.b16 %v308
    %v1587 = vunpack.c.h.b16 %v308
    %v1588 = vunpack.c.l.b16 %v309
    %v1589 = vunpack.c.h.b16 %v309
    %v1590 = vunpack.c.l.b16 %v310
    %v1591 = vunpack.c.h.b16 %v310
    %v1592 = vunpack.c.l.b16 %v311
    %v1593 = vunpack.c.h.b16 %v311
    %v1594 = vunpack.c.l.b16 %v312
    %v1595 = vunpack.c.h.b16 %v312
    %v1596 = vunpack.c.l.b16 %v313
    %v1597 = vunpack.c.h.b16 %v313
    %v1598 = vunpack.c.l.b16 %v314
    %v1599 = vunpack.c.h.b16 %v314
    %v1600 = vunpack.c.l.b16 %v315
    %v1601 = vunpack.c.h.b16 %v315
    %v1602 = vunpack.c.l.b16 %v316
    %v1603 = vunpack.c.h.b16 %v316
    %v1604 = vunpack.c.l.b16 %v317
    %v1605 = vunpack.c.h.b16 %v317
    %v1606 = vunpack.c.l.b16 %v318
    %v1607 = vunpack.c.h.b16 %v318
    %v1608 = vunpack.c.l.b16 %v319
    %v1609 = vunpack.c.h.b16 %v319
    %v1610 = vunpack.c.l.b16 %v320
    %v1611 = vunpack.c.h.b16 %v320
    %v1612 = vunpack.c.l.b16 %v321
    %v1613 = vunpack.c.h.b16 %v321
    %v1614 = vunpack.c.l.b16 %v322
    %v1615 = vunpack.c.h.b16 %v322
    %v1616 = vunpack.c.l.b16 %v323
    %v1617 = vunpack.c.h.b16 %v323
    %v1618 = vunpack.c.l.b16 %v324
    %v1619 = vunpack.c.h.b16 %v324
    %v1620 = vunpack.c.l.b16 %v325
    %v1621 = vunpack.c.h.b16 %v325
    %v1622 = vunpack.c.l.b16 %v326
    %v1623 = vunpack.c.h.b16 %v326
    %v1624 = vunpack.c.l.b16 %v327
    %v1625 = vunpack.c.h.b16 %v327
    %v1626 = vunpack.c.l.b16 %v328
    %v1627 = vunpack.c.h.b16 %v328
    %v1628 = vunpack.c.l.b16 %v329
    %v1629 = vunpack.c.h.b16 %v329
    %v1630 = vunpack.c.l.b16 %v330
    %v1631 = vunpack.c.h.b16 %v330
    %v1632 = vunpack.c.l.b16 %v331
    %v1633 = vunpack.c.h.b16 %v331
    %v1634 = vunpack.c.l.b16 %v332
    %v1635 = vunpack.c.h.b16 %v332
    %v1636 = vunpack.c.l.b16 %v333
    %v1637 = vunpack.c.h.b16 %v333
    %v1638 = vunpack.c.l.b16 %v334
    %v1639 = vunpack.c.h.b16 %v334
    %v1640 = vunpack.c.l.b16 %v335
    %v1641 = vunpack.c.h.b16 %v335
    %v1642 = vunpack.c.l.b16 %v336
    %v1643 = vunpack.c.h.b16 %v336
    %v1644 = vunpack.c.l.b16 %v337
    %v1645 = vunpack.c.h.b16 %v337
    %v1646 = vunpack.c.l.b16 %v338
    %v1647 = vunpack.c.h.b16 %v338
    %v1648 = vunpack.c.l.b16 %v339
    %v1649 = vunpack.c.h.b16 %v339
    %v1650 = vunpack.c.l.b16 %v340
    %v1651 = vunpack.c.h.b16 %v340
    %v1652 = vunpack.c.l.b16 %v341
    %v1653 = vunpack.c.h.b16 %v341
    %v1654 = vunpack.c.l.b16 %v342
    %v1655 = vunpack.c.h.b16 %v342
    %v1656 = vunpack.c.l.b16 %v343
    %v1657 = vunpack.c.h.b16 %v343
    %v1658 = vunpack.c.l.b16 %v344
    %v1659 = vunpack.c.h.b16 %v344
    %v1660 = vunpack.c.l.b16 %v345
    %v1661 = vunpack.c.h.b16 %v345
    %v1662 = vunpack.c.l.b16 %v346
    %v1663 = vunpack.c.h.b16 %v346
    %v1664 = vunpack.c.l.b16 %v347
    %v1665 = vunpack.c.h.b16 %v347
    %v1666 = vunpack.c.l.b16 %v348
    %v1667 = vunpack.c.h.b16 %v348
    %v1668 = vunpack.c.l.b16 %v349
    %v1669 = vunpack.c.h.b16 %v349
    %v1670 = vunpack.c.l.b16 %v350
    %v1671 = vunpack.c.h.b16 %v350
    %v1672 = vunpack.c.l.b16 %v351
    %v1673 = vunpack.c.h.b16 %v351
    %v1674 = vunpack.c.l.b16 %v352
    %v1675 = vunpack.c.h.b16 %v352
    %v1676 = vunpack.c.l.b16 %v353
    %v1677 = vunpack.c.h.b16 %v353
    %v1678 = vunpack.c.l.b16 %v354
    %v1679 = vunpack.c.h.b16 %v354
    %v1680 = vunpack.c.l.b16 %v355
    %v1681 = vunpack.c.h.b16 %v355
    %v1682 = vunpack.c.l.b16 %v356
    %v1683 = vunpack.c.h.b16 %v356
    %v1684 = vunpack.c.l.b16 %v357
    %v1685 = vunpack.c.h.b16 %v357
    %v1686 = vunpack.c.l.b16 %v358
    %v1687 = vunpack.c.h.b16 %v358
    %v1688 = vunpack.c.l.b16 %v359
    %v1689 = vunpack.c.h.b16 %v359
    %v1690 = vunpack.c.l.b16 %v360
    %v1691 = vunpack.c.h.b16 %v360
    %v1692 = vunpack.c.l.b16 %v361
    %v1693 = vunpack.c.h.b16 %v361
    %v1694 = vunpack.c.l.b16 %v362
    %v1695 = vunpack.c.h.b16 %v362
    %v1696 = vunpack.c.l.b16 %v363
    %v1697 = vunpack.c.h.b16 %v363
    %v1698 = vunpack.c.l.b16 %v364
    %v1699 = vunpack.c.h.b16 %v364
    %v1700 = vunpack.c.l.b16 %v365
    %v1701 = vunpack.c.h.b16 %v365
    %v1702 = vunpack.c.l.b16 %v366
    %v1703 = vunpack.c.h.b16 %v366
    %v1704 = vunpack.c.l.b16 %v367
    %v1705 = vunpack.c.h.b16 %v367
    %v1706 = vunpack.c.l.b16 %v368
    %v1707 = vunpack.c.h.b16 %v368
    %v1708 = vunpack.c.l.b16 %v369
    %v1709 = vunpack.c.h.b16 %v369
    %v1710 = vunpack.c.l.b16 %v370
    %v1711 = vunpack.c.h.b16 %v370
    %v1712 = vunpack.c.l.b16 %v371
    %v1713 = vunpack.c.h.b16 %v371
    %v1714 = vunpack.c.l.b16 %v372
    %v1715 = vunpack.c.h.b16 %v372
    %v1716 = vunpack.c.l.b16 %v373
    %v1717 = vunpack.c.h.b16 %v373
    %v1718 = vunpack.c.l.b16 %v374
    %v1719 = vunpack.c.h.b16 %v374
    %v1720 = vunpack.c.l.b16 %v375
    %v1721 = vunpack.c.h.b16 %v375
    %v1722 = vunpack.c.l.b16 %v376
    %v1723 = vunpack.c.h.b16 %v376
    %v1724 = vunpack.c.l.b16 %v377
    %v1725 = vunpack.c.h.b16 %v377
    %v1726 = vunpack.c.l.b16 %v378
    %v1727 = vunpack.c.h.b16 %v378
    %v1728 = vunpack.c.l.b16 %v379
    %v1729 = vunpack.c.h.b16 %v379
    %v1730 = vunpack.c.l.b16 %v380
    %v1731 = vunpack.c.h.b16 %v380
    %v1732 = vunpack.c.l.b16 %v381
    %v1733 = vunpack.c.h.b16 %v381
    %v1734 = vunpack.c.l.b16 %v382
    %v1735 = vunpack.c.h.b16 %v382
    %v1736 = vunpack.c.l.b16 %v383
    %v1737 = vunpack.c.h.b16 %v383
    %v1738 = vunpack.c.l.b16 %v384
    %v1739 = vunpack.c.h.b16 %v384
    %v1740 = vunpack.c.l.b16 %v385
    %v1741 = vunpack.c.h.b16 %v385
    %v1742 = vunpack.c.l.b16 %v386
    %v1743 = vunpack.c.h.b16 %v386
    %v1744 = vunpack.c.l.b16 %v387
    %v1745 = vunpack.c.h.b16 %v387
    %v1746 = vunpack.c.l.b16 %v388
    %v1747 = vunpack.c.h.b16 %v388
    %v1748 = vunpack.c.l.b16 %v389
    %v1749 = vunpack.c.h.b16 %v389
    %v1750 = vunpack.c.l.b16 %v390
    %v1751 = vunpack.c.h.b16 %v390
    %v1752 = vunpack.c.l.b16 %v391
    %v1753 = vunpack.c.h.b16 %v391
    %v1754 = vunpack.c.l.b16 %v392
    %v1755 = vunpack.c.h.b16 %v392
    %v1756 = vunpack.c.l.b16 %v393
    %v1757 = vunpack.c.h.b16 %v393
    %v1758 = vunpack.c.l.b16 %v394
    %v1759 = vunpack.c.h.b16 %v394
    %v1760 = vunpack.c.l.b16 %v395
    %v1761 = vunpack.c.h.b16 %v395
    %v1762 = vunpack.c.l.b16 %v396
    %v1763 = vunpack.c.h.b16 %v396
    %v1764 = vunpack.c.l.b16 %v397
    %v1765 = vunpack.c.h.b16 %v397
    %v1766 = vunpack.c.l.b16 %v398
    %v1767 = vunpack.c.h.b16 %v398
    %v1768 = vunpack.c.l.b16 %v399
    %v1769 = vunpack.c.h.b16 %v399
    %v1770 = vunpack.c.l.b16 %v400
    %v1771 = vunpack.c.h.b16 %v400
    %v1772 = vunpack.c.l.b16 %v401
    %v1773 = vunpack.c.h.b16 %v401
    %v1774 = vunpack.c.l.b16 %v402
    %v1775 = vunpack.c.h.b16 %v402
    %v1776 = vunpack.c.l.b16 %v403
    %v1777 = vunpack.c.h.b16 %v403
    %v1778 = vunpack.c.l.b16 %v404
    %v1779 = vunpack.c.h.b16 %v404
    %v1780 = vunpack.c.l.b16 %v405
    %v1781 = vunpack.c.h.b16 %v405
    %v1782 = vunpack.c.l.b16 %v406
    %v1783 = vunpack.c.h.b16 %v406
    %v1784 = vunpack.c.l.b16 %v407
    %v1785 = vunpack.c.h.b16 %v407
    %v1786 = vunpack.c.l.b16 %v408
    %v1787 = vunpack.c.h.b16 %v408
    %v1788 = vunpack.c.l.b16 %v409
    %v1789 = vunpack.c.h.b16 %v409
    %v1790 = vunpack.c.l.b16 %v410
    %v1791 = vunpack.c.h.b16 %v410
    %v1792 = vunpack.c.l.b16 %v411
    %v1793 = vunpack.c.h.b16 %v411
    %v1794 = vunpack.c.l.b16 %v412
    %v1795 = vunpack.c.h.b16 %v412
    %v1796 = vunpack.c.l.b16 %v413
    %v1797 = vunpack.c.h.b16 %v413
    %v1798 = vunpack.c.l.b16 %v414
    %v1799 = vunpack.c.h.b16 %v414
    %v1800 = vunpack.c.l.b16 %v415
    %v1801 = vunpack.c.h.b16 %v415
    %v1802 = vunpack.c.l.b16 %v416
    %v1803 = vunpack.c.h.b16 %v416
    %v1804 = vunpack.c.l.b16 %v417
    %v1805 = vunpack.c.h.b16 %v417
    %v1806 = vunpack.c.l.b16 %v418
    %v1807 = vunpack.c.h.b16 %v418
    %v1808 = vunpack.c.l.b16 %v419
    %v1809 = vunpack.c.h.b16 %v419
    %v1810 = vunpack.c.l.b16 %v420
    %v1811 = vunpack.c.h.b16 %v420
    %v1812 = vunpack.c.l.b16 %v421
    %v1813 = vunpack.c.h.b16 %v421
    %v1814 = vunpack.c.l.b16 %v422
    %v1815 = vunpack.c.h.b16 %v422
    %v1816 = vunpack.c.l.b16 %v423
    %v1817 = vunpack.c.h.b16 %v423
    %v1818 = vunpack.c.l.b16 %v424
    %v1819 = vunpack.c.h.b16 %v424
    %v1820 = vunpack.c.l.b16 %v425
    %v1821 = vunpack.c.h.b16 %v425
    %v1822 = vunpack.c.l.b16 %v426
    %v1823 = vunpack.c.h.b16 %v426
    %v1824 = vunpack.c.l.b16 %v427
    %v1825 = vunpack.c.h.b16 %v427
    %v1826 = vunpack.c.l.b16 %v428
    %v1827 = vunpack.c.h.b16 %v428
    %v1828 = vunpack.c.l.b16 %v429
    %v1829 = vunpack.c.h.b16 %v429
    %v1830 = vunpack.c.l.b16 %v430
    %v1831 = vunpack.c.h.b16 %v430
    %v1832 = vunpack.c.l.b16 %v431
    %v1833 = vunpack.c.h.b16 %v431
    %v1834 = vunpack.c.l.b16 %v432
    %v1835 = vunpack.c.h.b16 %v432
    %v1836 = vunpack.c.l.b16 %v433
    %v1837 = vunpack.c.h.b16 %v433
    %v1838 = vunpack.c.l.b16 %v434
    %v1839 = vunpack.c.h.b16 %v434
    %v1840 = vunpack.c.l.b16 %v435
    %v1841 = vunpack.c.h.b16 %v435
    %v1842 = vunpack.c.l.b16 %v436
    %v1843 = vunpack.c.h.b16 %v436
    %v1844 = vunpack.c.l.b16 %v437
    %v1845 = vunpack.c.h.b16 %v437
    %v1846 = vunpack.c.l.b16 %v438
    %v1847 = vunpack.c.h.b16 %v438
    %v1848 = vunpack.c.l.b16 %v439
    %v1849 = vunpack.c.h.b16 %v439
    %v1850 = vunpack.c.l.b16 %v440
    %v1851 = vunpack.c.h.b16 %v440
    %v1852 = vunpack.c.l.b16 %v441
    %v1853 = vunpack.c.h.b16 %v441
    %v1854 = vunpack.c.l.b16 %v442
    %v1855 = vunpack.c.h.b16 %v442
    %v1856 = vunpack.c.l.b16 %v443
    %v1857 = vunpack.c.h.b16 %v443
    %v1858 = vunpack.c.l.b16 %v444
    %v1859 = vunpack.c.h.b16 %v444
    %v1860 = vunpack.c.l.b16 %v445
    %v1861 = vunpack.c.h.b16 %v445
    %v1862 = vunpack.c.l.b16 %v446
    %v1863 = vunpack.c.h.b16 %v446
    %v1864 = vunpack.c.l.b16 %v447
    %v1865 = vunpack.c.h.b16 %v447
    %v1866 = vunpack.c.l.b16 %v448
    %v1867 = vunpack.c.h.b16 %v448
    %v1868 = vunpack.c.l.b16 %v449
    %v1869 = vunpack.c.h.b16 %v449
    %v1870 = vunpack.c.l.b16 %v450
    %v1871 = vunpack.c.h.b16 %v450
    %v1872 = vunpack.c.l.b16 %v451
    %v1873 = vunpack.c.h.b16 %v451
    %v1874 = vunpack.c.l.b16 %v452
    %v1875 = vunpack.c.h.b16 %v452
    %v1876 = vunpack.c.l.b16 %v453
    %v1877 = vunpack.c.h.b16 %v453
    %v1878 = vunpack.c.l.b16 %v454
    %v1879 = vunpack.c.h.b16 %v454
    %v1880 = vunpack.c.l.b16 %v455
    %v1881 = vunpack.c.h.b16 %v455
    %v1882 = vunpack.c.l.b16 %v456
    %v1883 = vunpack.c.h.b16 %v456
    %v1884 = vunpack.c.l.b16 %v457
    %v1885 = vunpack.c.h.b16 %v457
    %v1886 = vunpack.c.l.b16 %v458
    %v1887 = vunpack.c.h.b16 %v458
    %v1888 = vunpack.c.l.b16 %v459
    %v1889 = vunpack.c.h.b16 %v459
    %v1890 = vunpack.c.l.b16 %v460
    %v1891 = vunpack.c.h.b16 %v460
    %v1892 = vunpack.c.l.b16 %v461
    %v1893 = vunpack.c.h.b16 %v461
    %v1894 = vunpack.c.l.b16 %v462
    %v1895 = vunpack.c.h.b16 %v462
    %v1896 = vunpack.c.l.b16 %v463
    %v1897 = vunpack.c.h.b16 %v463
    %v1898 = vunpack.c.l.b16 %v464
    %v1899 = vunpack.c.h.b16 %v464
    %v1900 = vunpack.c.l.b16 %v465
    %v1901 = vunpack.c.h.b16 %v465
    %v1902 = vunpack.c.l.b16 %v466
    %v1903 = vunpack.c.h.b16 %v466
    %v1904 = vunpack.c.l.b16 %v467
    %v1905 = vunpack.c.h.b16 %v467
    %v1906 = vunpack.c.l.b16 %v468
    %v1907 = vunpack.c.h.b16 %v468
    %v1908 = vunpack.c.l.b16 %v469
    %v1909 = vunpack.c.h.b16 %v469
    %v1910 = vunpack.c.l.b16 %v470
    %v1911 = vunpack.c.h.b16 %v470
    %v1912 = vunpack.c.l.b16 %v471
    %v1913 = vunpack.c.h.b16 %v471
    %v1914 = vunpack.c.l.b16 %v472
    %v1915 = vunpack.c.h.b16 %v472
    %v1916 = vunpack.c.l.b16 %v473
    %v1917 = vunpack.c.h.b16 %v473
    %v1918 = vunpack.c.l.b16 %v474
    %v1919 = vunpack.c.h.b16 %v474
    %v1920 = vunpack.c.l.b16 %v475
    %v1921 = vunpack.c.h.b16 %v475
    %v1922 = vunpack.c.l.b16 %v476
    %v1923 = vunpack.c.h.b16 %v476
    %v1924 = vunpack.c.l.b16 %v477
    %v1925 = vunpack.c.h.b16 %v477
    %v1926 = vunpack.c.l.b16 %v478
    %v1927 = vunpack.c.h.b16 %v478
    %v1928 = vunpack.c.l.b16 %v479
    %v1929 = vunpack.c.h.b16 %v479
    %v1930 = vunpack.c.l.b16 %v480
    %v1931 = vunpack.c.h.b16 %v480
    %v1932 = vunpack.c.l.b16 %v481
    %v1933 = vunpack.c.h.b16 %v481
    %v1934 = vunpack.c.l.b16 %v482
    %v1935 = vunpack.c.h.b16 %v482
    %v1936 = vunpack.c.l.b16 %v483
    %v1937 = vunpack.c.h.b16 %v483
    %v1938 = vunpack.c.l.b16 %v484
    %v1939 = vunpack.c.h.b16 %v484
    %v1940 = vunpack.c.l.b16 %v485
    %v1941 = vunpack.c.h.b16 %v485
    %v1942 = vunpack.c.l.b16 %v486
    %v1943 = vunpack.c.h.b16 %v486
    %v1944 = vunpack.c.l.b16 %v487
    %v1945 = vunpack.c.h.b16 %v487
    %v1946 = vunpack.c.l.b16 %v488
    %v1947 = vunpack.c.h.b16 %v488
    %v1948 = vunpack.c.l.b16 %v489
    %v1949 = vunpack.c.h.b16 %v489
    %v1950 = vunpack.c.l.b16 %v490
    %v1951 = vunpack.c.h.b16 %v490
    %v1952 = vunpack.c.l.b16 %v491
    %v1953 = vunpack.c.h.b16 %v491
    %v1954 = vunpack.c.l.b16 %v492
    %v1955 = vunpack.c.h.b16 %v492
    %v1956 = vunpack.c.l.b16 %v493
    %v1957 = vunpack.c.h.b16 %v493
    %v1958 = vunpack.c.l.b16 %v494
    %v1959 = vunpack.c.h.b16 %v494
    %v1960 = vunpack.c.l.b16 %v495
    %v1961 = vunpack.c.h.b16 %v495
    %v1962 = vunpack.c.l.b16 %v496
    %v1963 = vunpack.c.h.b16 %v496
    %v1964 = vunpack.c.l.b16 %v497
    %v1965 = vunpack.c.h.b16 %v497
    %v1966 = vunpack.c.l.b16 %v498
    %v1967 = vunpack.c.h.b16 %v498
    %v1968 = vunpack.c.l.b16 %v499
    %v1969 = vunpack.c.h.b16 %v499
    %v1970 = vunpack.c.l.b16 %v500
    %v1971 = vunpack.c.h.b16 %v500
    %v1972 = vunpack.c.l.b16 %v501
    %v1973 = vunpack.c.h.b16 %v501
    %v1974 = vunpack.c.l.b16 %v502
    %v1975 = vunpack.c.h.b16 %v502
    %v1976 = vunpack.c.l.b16 %v503
    %v1977 = vunpack.c.h.b16 %v503
    %v1978 = vunpack.c.l.b16 %v504
    %v1979 = vunpack.c.h.b16 %v504
    %v1980 = vunpack.c.l.b16 %v505
    %v1981 = vunpack.c.h.b16 %v505
    %v1982 = vunpack.c.l.b16 %v506
    %v1983 = vunpack.c.h.b16 %v506
    %v1984 = vunpack.c.l.b16 %v507
    %v1985 = vunpack.c.h.b16 %v507
    %v1986 = vunpack.c.l.b16 %v508
    %v1987 = vunpack.c.h.b16 %v508
    %v1988 = vunpack.c.l.b16 %v509
    %v1989 = vunpack.c.h.b16 %v509
    %v1990 = vunpack.c.l.b16 %v510
    %v1991 = vunpack.c.h.b16 %v510
    %v1992 = vunpack.c.l.b16 %v511
    %v1993 = vunpack.c.h.b16 %v511
    %v1994 = vunpack.c.l.b16 %v512
    %v1995 = vunpack.c.h.b16 %v512
    %v1996 = vunpack.c.l.b16 %v513
    %v1997 = vunpack.c.h.b16 %v513
    %v1998 = vunpack.c.l.b16 %v514
    %v1999 = vunpack.c.h.b16 %v514
    %v2000 = vunpack.c.l.b16 %v515
    %v2001 = vunpack.c.h.b16 %v515
    %v2002 = vunpack.c.l.b16 %v516
    %v2003 = vunpack.c.h.b16 %v516
    %v2004 = vunpack.c.l.b16 %v517
    %v2005 = vunpack.c.h.b16 %v517
    %v2006 = vunpack.c.l.b16 %v518
    %v2007 = vunpack.c.h.b16 %v518
    %v2008 = vunpack.c.l.b16 %v519
    %v2009 = vunpack.c.h.b16 %v519
    %v2010 = vunpack.c.l.b16 %v520
    %v2011 = vunpack.c.h.b16 %v520
    %v2012 = vunpack.c.l.b16 %v521
    %v2013 = vunpack.c.h.b16 %v521
    %v2014 = vunpack.c.l.b16 %v522
    %v2015 = vunpack.c.h.b16 %v522
    %v2016 = vunpack.c.l.b16 %v523
    %v2017 = vunpack.c.h.b16 %v523
    %v2018 = vunpack.c.l.b16 %v524
    %v2019 = vunpack.c.h.b16 %v524
    %v2020 = vunpack.c.l.b16 %v525
    %v2021 = vunpack.c.h.b16 %v525
    %v2022 = vunpack.c.l.b16 %v526
    %v2023 = vunpack.c.h.b16 %v526
    %v2024 = vunpack.c.l.b16 %v527
    %v2025 = vunpack.c.h.b16 %v527
    %v2026 = vunpack.c.l.b16 %v528
    %v2027 = vunpack.c.h.b16 %v528
    %v2028 = vunpack.c.l.b16 %v529
    %v2029 = vunpack.c.h.b16 %v529
    %v2030 = vunpack.c.l.b16 %v530
    %v2031 = vunpack.c.h.b16 %v530
    %v2032 = vunpack.c.l.b16 %v531
    %v2033 = vunpack.c.h.b16 %v531
    %v2034 = vunpack.c.l.b16 %v532
    %v2035 = vunpack.c.h.b16 %v532
    %v2036 = vunpack.c.l.b16 %v533
    %v2037 = vunpack.c.h.b16 %v533
    %v2038 = vunpack.c.l.b16 %v534
    %v2039 = vunpack.c.h.b16 %v534
    %v2040 = vunpack.c.l.b16 %v535
    %v2041 = vunpack.c.h.b16 %v535
    %v2042 = vunpack.c.l.b16 %v536
    %v2043 = vunpack.c.h.b16 %v536
    %v2044 = vunpack.c.l.b16 %v537
    %v2045 = vunpack.c.h.b16 %v537
    %v2046 = vunpack.c.l.b16 %v538
    %v2047 = vunpack.c.h.b16 %v538
    %v2048 = vunpack.c.l.b16 %v539
    %v2049 = vunpack.c.h.b16 %v539
    %v2050 = vunpack.c.l.b16 %v540
    %v2051 = vunpack.c.h.b16 %v540
    %v2052 = vunpack.c.l.b16 %v541
    %v2053 = vunpack.c.h.b16 %v541
    %v2054 = vunpack.c.l.b16 %v542
    %v2055 = vunpack.c.h.b16 %v542
    %v2056 = vunpack.c.l.b16 %v543
    %v2057 = vunpack.c.h.b16 %v543
    %v2058 = vunpack.c.l.b16 %v544
    %v2059 = vunpack.c.h.b16 %v544
    %v2060 = vunpack.c.l.b16 %v545
    %v2061 = vunpack.c.h.b16 %v545
    %v2062 = vunpack.c.l.b16 %v546
    %v2063 = vunpack.c.h.b16 %v546
    %v2064 = vunpack.c.l.b16 %v547
    %v2065 = vunpack.c.h.b16 %v547
    %v2066 = vunpack.c.l.b16 %v548
    %v2067 = vunpack.c.h.b16 %v548
    %v2068 = vunpack.c.l.b16 %v549
    %v2069 = vunpack.c.h.b16 %v549
    %v2070 = vunpack.c.l.b16 %v550
    %v2071 = vunpack.c.h.b16 %v550
    %v2072 = vunpack.c.l.b16 %v551
    %v2073 = vunpack.c.h.b16 %v551
    %v2074 = vunpack.c.l.b16 %v552
    %v2075 = vunpack.c.h.b16 %v552
    %v2076 = vunpack.c.l.b16 %v553
    %v2077 = vunpack.c.h.b16 %v553
    %v2078 = vunpack.c.l.b16 %v554
    %v2079 = vunpack.c.h.b16 %v554
    %v2080 = vunpack.c.l.b16 %v555
    %v2081 = vunpack.c.h.b16 %v555
    %v2082 = vunpack.c.l.b16 %v556
    %v2083 = vunpack.c.h.b16 %v556
    %v2084 = vunpack.c.l.b16 %v557
    %v2085 = vunpack.c.h.b16 %v557
    %v2086 = vunpack.c.l.b16 %v558
    %v2087 = vunpack.c.h.b16 %v558
    %v2088 = vunpack.c.l.b16 %v559
    %v2089 = vunpack.c.h.b16 %v559
    %v2090 = vunpack.c.l.b16 %v560
    %v2091 = vunpack.c.h.b16 %v560
    %v2092 = vunpack.c.l.b16 %v561
    %v2093 = vunpack.c.h.b16 %v561
    %v2094 = vunpack.c.l.b16 %v562
    %v2095 = vunpack.c.h.b16 %v562
    %v2096 = vunpack.c.l.b16 %v563
    %v2097 = vunpack.c.h.b16 %v563
    %v2098 = vunpack.c.l.b16 %v564
    %v2099 = vunpack.c.h.b16 %v564
    %v2100 = vunpack.c.l.b16 %v565
    %v2101 = vunpack.c.h.b16 %v565
    %v2102 = vunpack.c.l.b16 %v566
    %v2103 = vunpack.c.h.b16 %v566
    %v2104 = vunpack.c.l.b16 %v567
    %v2105 = vunpack.c.h.b16 %v567
    %v2106 = vunpack.c.l.b16 %v568
    %v2107 = vunpack.c.h.b16 %v568
    %v2108 = vunpack.c.l.b16 %v569
    %v2109 = vunpack.c.h.b16 %v569
    %v2110 = vunpack.c.l.b16 %v570
    %v2111 = vunpack.c.h.b16 %v570
    %v2112 = vunpack.c.l.b16 %v571
    %v2113 = vunpack.c.h.b16 %v571
    %v2114 = vunpack.c.l.b16 %v572
    %v2115 = vunpack.c.h.b16 %v572
    %v2116 = vunpack.c.l.b16 %v573
    %v2117 = vunpack.c.h.b16 %v573
    %v2118 = vunpack.c.l.b16 %v574
    %v2119 = vunpack.c.h.b16 %v574
    %v2120 = vunpack.c.l.b16 %v575
    %v2121 = vunpack.c.h.b16 %v575
    %v2122 = vunpack.c.l.b16 %v576
    %v2123 = vunpack.c.h.b16 %v576
    %v2124 = vunpack.c.l.b16 %v577
    %v2125 = vunpack.c.h.b16 %v577
    %v2126 = vunpack.c.l.b16 %v578
    %v2127 = vunpack.c.h.b16 %v578
    %v2128 = vunpack.c.l.b16 %v579
    %v2129 = vunpack.c.h.b16 %v579
    %v2130 = vunpack.c.l.b16 %v580
    %v2131 = vunpack.c.h.b16 %v580
    %v2132 = vunpack.c.l.b16 %v581
    %v2133 = vunpack.c.h.b16 %v581
    %v2134 = vunpack.c.l.b16 %v582
    %v2135 = vunpack.c.h.b16 %v582
    %v2136 = vunpack.c.l.b16 %v583
    %v2137 = vunpack.c.h.b16 %v583
    %v2138 = vunpack.c.l.b16 %v584
    %v2139 = vunpack.c.h.b16 %v584
    %v2140 = vunpack.c.l.b16 %v585
    %v2141 = vunpack.c.h.b16 %v585
    %v2142 = vunpack.c.l.b16 %v586
    %v2143 = vunpack.c.h.b16 %v586
    %v2144 = vunpack.c.l.b16 %v587
    %v2145 = vunpack.c.h.b16 %v587
    %v2146 = vpack.c.b16 %v1126, %v1122
    %v2147 = vpack.c.b16 %v1127, %v1123
    %v2148 = vpack.c.b16 %v1128, %v1124
    %v2149 = vpack.c.b16 %v1129, %v1125
    %v2150 = vpack.c.b16 %v1134, %v1130
    %v2151 = vpack.c.b16 %v1135, %v1131
    %v2152 = vpack.c.b16 %v1136, %v1132
    %v2153 = vpack.c.b16 %v1137, %v1133
    %v2154 = vpack.c.b16 %v1142, %v1138
    %v2155 = vpack.c.b16 %v1143, %v1139
    %v2156 = vpack.c.b16 %v1144, %v1140
    %v2157 = vpack.c.b16 %v1145, %v1141
    %v2158 = vpack.c.b16 %v1150, %v1146
    %v2159 = vpack.c.b16 %v1151, %v1147
    %v2160 = vpack.c.b16 %v1152, %v1148
    %v2161 = vpack.c.b16 %v1153, %v1149
    %v2162 = vpack.c.b16 %v1158, %v1154
    %v2163 = vpack.c.b16 %v1159, %v1155
    %v2164 = vpack.c.b16 %v1160, %v1156
    %v2165 = vpack.c.b16 %v1161, %v1157
    %v2166 = vpack.c.b16 %v1166, %v1162
    %v2167 = vpack.c.b16 %v1167, %v1163
    %v2168 = vpack.c.b16 %v1168, %v1164
    %v2169 = vpack.c.b16 %v1169, %v1165
    %v2170 = vpack.c.b16 %v1174, %v1170
    %v2171 = vpack.c.b16 %v1175, %v1171
    %v2172 = vpack.c.b16 %v1176, %v1172
    %v2173 = vpack.c.b16 %v1177, %v1173
    %v2174 = vpack.c.b16 %v1182, %v1178
    %v2175 = vpack.c.b16 %v1183, %v1179
    %v2176 = vpack.c.b16 %v1184, %v1180
    %v2177 = vpack.c.b16 %v1185, %v1181
    %v2178 = vpack.c.b16 %v1190, %v1186
    %v2179 = vpack.c.b16 %v1191, %v1187
    %v2180 = vpack.c.b16 %v1192, %v1188
    %v2181 = vpack.c.b16 %v1193, %v1189
    %v2182 = vpack.c.b16 %v1198, %v1194
    %v2183 = vpack.c.b16 %v1199, %v1195
    %v2184 = vpack.c.b16 %v1200, %v1196
    %v2185 = vpack.c.b16 %v1201, %v1197
    %v2186 = vpack.c.b16 %v1206, %v1202
    %v2187 = vpack.c.b16 %v1207, %v1203
    %v2188 = vpack.c.b16 %v1208, %v1204
    %v2189 = vpack.c.b16 %v1209, %v1205
    %v2190 = vpack.c.b16 %v1214, %v1210
    %v2191 = vpack.c.b16 %v1215, %v1211
    %v2192 = vpack.c.b16 %v1216, %v1212
    %v2193 = vpack.c.b16 %v1217, %v1213
    %v2194 = vpack.c.b16 %v1222, %v1218
    %v2195 = vpack.c.b16 %v1223, %v1219
    %v2196 = vpack.c.b16 %v1224, %v1220
    %v2197 = vpack.c.b16 %v1225, %v1221
    %v2198 = vpack.c.b16 %v1230, %v1226
    %v2199 = vpack.c.b16 %v1231, %v1227
    %v2200 = vpack.c.b16 %v1232, %v1228
    %v2201 = vpack.c.b16 %v1233, %v1229
    %v2202 = vpack.c.b16 %v1238, %v1234
    %v2203 = vpack.c.b16 %v1239, %v1235
    %v2204 = vpack.c.b16 %v1240, %v1236
    %v2205 = vpack.c.b16 %v1241, %v1237
    %v2206 = vpack.c.b16 %v1246, %v1242
    %v2207 = vpack.c.b16 %v1247, %v1243
    %v2208 = vpack.c.b16 %v1248, %v1244
    %v2209 = vpack.c.b16 %v1249, %v1245
    %v2210 = vpack.c.b16 %v1254, %v1250
    %v2211 = vpack.c.b16 %v1255, %v1251
    %v2212 = vpack.c.b16 %v1256, %v1252
    %v2213 = vpack.c.b16 %v1257, %v1253
    %v2214 = vpack.c.b16 %v1262, %v1258
    %v2215 = vpack.c.b16 %v1263, %v1259
    %v2216 = vpack.c.b16 %v1264, %v1260
    %v2217 = vpack.c.b16 %v1265, %v1261
    %v2218 = vpack.c.b16 %v1270, %v1266
    %v2219 = vpack.c.b16 %v1271, %v1267
    %v2220 = vpack.c.b16 %v1272, %v1268
    %v2221 = vpack.c.b16 %v1273, %v1269
    %v2222 = vpack.c.b16 %v1278, %v1274
    %v2223 = vpack.c.b16 %v1279, %v1275
    %v2224 = vpack.c.b16 %v1280, %v1276
    %v2225 = vpack.c.b16 %v1281, %v1277
    %v2226 = vpack.c.b16 %v1286, %v1282
    %v2227 = vpack.c.b16 %v1287, %v1283
    %v2228 = vpack.c.b16 %v1288, %v1284
    %v2229 = vpack.c.b16 %v1289, %v1285
    %v2230 = vpack.c.b16 %v1294, %v1290
    %v2231 = vpack.c.b16 %v1295, %v1291
    %v2232 = vpack.c.b16 %v1296, %v1292
    %v2233 = vpack.c.b16 %v1297, %v1293
    %v2234 = vpack.c.b16 %v1302, %v1298
    %v2235 = vpack.c.b16 %v1303, %v1299
    %v2236 = vpack.c.b16 %v1304, %v1300
    %v2237 = vpack.c.b16 %v1305, %v1301
    %v2238 = vpack.c.b16 %v1310, %v1306
    %v2239 = vpack.c.b16 %v1311, %v1307
    %v2240 = vpack.c.b16 %v1312, %v1308
    %v2241 = vpack.c.b16 %v1313, %v1309
    %v2242 = vpack.c.b16 %v1318, %v1314
    %v2243 = vpack.c.b16 %v1319, %v1315
    %v2244 = vpack.c.b16 %v1320, %v1316
    %v2245 = vpack.c.b16 %v1321, %v1317
    %v2246 = vpack.c.b16 %v1326, %v1322
    %v2247 = vpack.c.b16 %v1327, %v1323
    %v2248 = vpack.c.b16 %v1328, %v1324
    %v2249 = vpack.c.b16 %v1329, %v1325
    %v2250 = vpack.c.b16 %v1334, %v1330
    %v2251 = vpack.c.b16 %v1335, %v1331
    %v2252 = vpack.c.b16 %v1336, %v1332
    %v2253 = vpack.c.b16 %v1337, %v1333
    %v2254 = vpack.c.b16 %v1342, %v1338
    %v2255 = vpack.c.b16 %v1343, %v1339
    %v2256 = vpack.c.b16 %v1344, %v1340
    %v2257 = vpack.c.b16 %v1345, %v1341
    %v2258 = vpack.c.b16 %v1350, %v1346
    %v2259 = vpack.c.b16 %v1351, %v1347
    %v2260 = vpack.c.b16 %v1352, %v1348
    %v2261 = vpack.c.b16 %v1353, %v1349
    %v2262 = vpack.c.b16 %v1358, %v1354
    %v2263 = vpack.c.b16 %v1359, %v1355
    %v2264 = vpack.c.b16 %v1360, %v1356
    %v2265 = vpack.c.b16 %v1361, %v1357
    %v2266 = vpack.c.b16 %v1366, %v1362
    %v2267 = vpack.c.b16 %v1367, %v1363
    %v2268 = vpack.c.b16 %v1368, %v1364
    %v2269 = vpack.c.b16 %v1369, %v1365
    %v2270 = vpack.c.b16 %v1374, %v1370
    %v2271 = vpack.c.b16 %v1375, %v1371
    %v2272 = vpack.c.b16 %v1376, %v1372
    %v2273 = vpack.c.b16 %v1377, %v1373
    %v2274 = vpack.c.b16 %v1382, %v1378
    %v2275 = vpack.c.b16 %v1383, %v1379
    %v2276 = vpack.c.b16 %v1384, %v1380
    %v2277 = vpack.c.b16 %v1385, %v1381
    %v2278 = vpack.c.b16 %v1390, %v1386
    %v2279 = vpack.c.b16 %v1391, %v1387
    %v2280 = vpack.c.b16 %v1392, %v1388
    %v2281 = vpack.c.b16 %v1393, %v1389
    %v2282 = vpack.c.b16 %v1398, %v1394
    %v2283 = vpack.c.b16 %v1399, %v1395
    %v2284 = vpack.c.b16 %v1400, %v1396
    %v2285 = vpack.c.b16 %v1401, %v1397
    %v2286 = vpack.c.b16 %v1406, %v1402
    %v2287 = vpack.c.b16 %v1407, %v1403
    %v2288 = vpack.c.b16 %v1408, %v1404
    %v2289 = vpack.c.b16 %v1409, %v1405
    %v2290 = vpack.c.b16 %v1414, %v1410
    %v2291 = vpack.c.b16 %v1415, %v1411
    %v2292 = vpack.c.b16 %v1416, %v1412
    %v2293 = vpack.c.b16 %v1417, %v1413
    %v2294 = vpack.c.b16 %v1422, %v1418
    %v2295 = vpack.c.b16 %v1423, %v1419
    %v2296 = vpack.c.b16 %v1424, %v1420
    %v2297 = vpack.c.b16 %v1425, %v1421
    %v2298 = vpack.c.b16 %v1430, %v1426
    %v2299 = vpack.c.b16 %v1431, %v1427
    %v2300 = vpack.c.b16 %v1432, %v1428
    %v2301 = vpack.c.b16 %v1433, %v1429
    %v2302 = vpack.c.b16 %v1438, %v1434
    %v2303 = vpack.c.b16 %v1439, %v1435
    %v2304 = vpack.c.b16 %v1440, %v1436
    %v2305 = vpack.c.b16 %v1441, %v1437
    %v2306 = vpack.c.b16 %v1446, %v1442
    %v2307 = vpack.c.b16 %v1447, %v1443
    %v2308 = vpack.c.b16 %v1448, %v1444
    %v2309 = vpack.c.b16 %v1449, %v1445
    %v2310 = vpack.c.b16 %v1454, %v1450
    %v2311 = vpack.c.b16 %v1455, %v1451
    %v2312 = vpack.c.b16 %v1456, %v1452
    %v2313 = vpack.c.b16 %v1457, %v1453
    %v2314 = vpack.c.b16 %v1462, %v1458
    %v2315 = vpack.c.b16 %v1463, %v1459
    %v2316 = vpack.c.b16 %v1464, %v1460
    %v2317 = vpack.c.b16 %v1465, %v1461
    %v2318 = vpack.c.b16 %v1470, %v1466
    %v2319 = vpack.c.b16 %v1471, %v1467
    %v2320 = vpack.c.b16 %v1472, %v1468
    %v2321 = vpack.c.b16 %v1473, %v1469
    %v2322 = vpack.c.b16 %v1478, %v1474
    %v2323 = vpack.c.b16 %v1479, %v1475
    %v2324 = vpack.c.b16 %v1480, %v1476
    %v2325 = vpack.c.b16 %v1481, %v1477
    %v2326 = vpack.c.b16 %v1486, %v1482
    %v2327 = vpack.c.b16 %v1487, %v1483
    %v2328 = vpack.c.b16 %v1488, %v1484
    %v2329 = vpack.c.b16 %v1489, %v1485
    %v2330 = vpack.c.b16 %v1494, %v1490
    %v2331 = vpack.c.b16 %v1495, %v1491
    %v2332 = vpack.c.b16 %v1496, %v1492
    %v2333 = vpack.c.b16 %v1497, %v1493
    %v2334 = vpack.c.b16 %v1502, %v1498
    %v2335 = vpack.c.b16 %v1503, %v1499
    %v2336 = vpack.c.b16 %v1504, %v1500
    %v2337 = vpack.c.b16 %v1505, %v1501
    %v2338 = vpack.c.b16 %v1510, %v1506
    %v2339 = vpack.c.b16 %v1511, %v1507
    %v2340 = vpack.c.b16 %v1512, %v1508
    %v2341 = vpack.c.b16 %v1513, %v1509
    %v2342 = vpack.c.b16 %v1518, %v1514
    %v2343 = vpack.c.b16 %v1519, %v1515
    %v2344 = vpack.c.b16 %v1520, %v1516
    %v2345 = vpack.c.b16 %v1521, %v1517
    %v2346 = vpack.c.b16 %v1526, %v1522
    %v2347 = vpack.c.b16 %v1527, %v1523
    %v2348 = vpack.c.b16 %v1528, %v1524
    %v2349 = vpack.c.b16 %v1529, %v1525
    %v2350 = vpack.c.b16 %v1534, %v1530
    %v2351 = vpack.c.b16 %v1535, %v1531
    %v2352 = vpack.c.b16 %v1536, %v1532
    %v2353 = vpack.c.b16 %v1537, %v1533
    %v2354 = vpack.c.b16 %v1542, %v1538
    %v2355 = vpack.c.b16 %v1543, %v1539
    %v2356 = vpack.c.b16 %v1544, %v1540
    %v2357 = vpack.c.b16 %v1545, %v1541
    %v2358 = vpack.c.b16 %v1550, %v1546
    %v2359 = vpack.c.b16 %v1551, %v1547
    %v2360 = vpack.c.b16 %v1552, %v1548
    %v2361 = vpack.c.b16 %v1553, %v1549
    %v2362 = vpack.c.b16 %v1558, %v1554
    %v2363 = vpack.c.b16 %v1559, %v1555
    %v2364 = vpack.c.b16 %v1560, %v1556
    %v2365 = vpack.c.b16 %v1561, %v1557
    %v2366 = vpack.c.b16 %v1566, %v1562
    %v2367 = vpack.c.b16 %v1567, %v1563
    %v2368 = vpack.c.b16 %v1568, %v1564
    %v2369 = vpack.c.b16 %v1569, %v1565
    %v2370 = vpack.c.b16 %v1574, %v1570
    %v2371 = vpack.c.b16 %v1575, %v1571
    %v2372 = vpack.c.b16 %v1576, %v1572
    %v2373 = vpack.c.b16 %v1577, %v1573
    %v2374 = vpack.c.b16 %v1582, %v1578
    %v2375 = vpack.c.b16 %v1583, %v1579
    %v2376 = vpack.c.b16 %v1584, %v1580
    %v2377 = vpack.c.b16 %v1585, %v1581
    %v2378 = vpack.c.b16 %v1590, %v1586
    %v2379 = vpack.c.b16 %v1591, %v1587
    %v2380 = vpack.c.b16 %v1592, %v1588
    %v2381 = vpack.c.b16 %v1593, %v1589
    %v2382 = vpack.c.b16 %v1598, %v1594
    %v2383 = vpack.c.b16 %v1599, %v1595
    %v2384 = vpack.c.b16 %v1600, %v1596
    %v2385 = vpack.c.b16 %v1601, %v1597
    %v2386 = vpack.c.b16 %v1606, %v1602
    %v2387 = vpack.c.b16 %v1607, %v1603
    %v2388 = vpack.c.b16 %v1608, %v1604
    %v2389 = vpack.c.b16 %v1609, %v1605
    %v2390 = vpack.c.b16 %v1614, %v1610
    %v2391 = vpack.c.b16 %v1615, %v1611
    %v2392 = vpack.c.b16 %v1616, %v1612
    %v2393 = vpack.c.b16 %v1617, %v1613
    %v2394 = vpack.c.b16 %v1622, %v1618
    %v2395 = vpack.c.b16 %v1623, %v1619
    %v2396 = vpack.c.b16 %v1624, %v1620
    %v2397 = vpack.c.b16 %v1625, %v1621
    %v2398 = vpack.c.b16 %v1630, %v1626
    %v2399 = vpack.c.b16 %v1631, %v1627
    %v2400 = vpack.c.b16 %v1632, %v1628
    %v2401 = vpack.c.b16 %v1633, %v1629
    %v2402 = vpack.c.b16 %v1638, %v1634
    %v2403 = vpack.c.b16 %v1639, %v1635
    %v2404 = vpack.c.b16 %v1640, %v1636
    %v2405 = vpack.c.b16 %v1641, %v1637
    %v2406 = vpack.c.b16 %v1646, %v1642
    %v2407 = vpack.c.b16 %v1647, %v1643
    %v2408 = vpack.c.b16 %v1648, %v1644
    %v2409 = vpack.c.b16 %v1649, %v1645
    %v2410 = vpack.c.b16 %v1654, %v1650
    %v2411 = vpack.c.b16 %v1655, %v1651
    %v2412 = vpack.c.b16 %v1656, %v1652
    %v2413 = vpack.c.b16 %v1657, %v1653
    %v2414 = vpack.c.b16 %v1662, %v1658
    %v2415 = vpack.c.b16 %v1663, %v1659
    %v2416 = vpack.c.b16 %v1664, %v1660
    %v2417 = vpack.c.b16 %v1665, %v1661
    %v2418 = vpack.c.b16 %v1670, %v1666
    %v2419 = vpack.c.b16 %v1671, %v1667
    %v2420 = vpack.c.b16 %v1672, %v1668
    %v2421 = vpack.c.b16 %v1673, %v1669
    %v2422 = vpack.c.b16 %v1678, %v1674
    %v2423 = vpack.c.b16 %v1679, %v1675
    %v2424 = vpack.c.b16 %v1680, %v1676
    %v2425 = vpack.c.b16 %v1681, %v1677
    %v2426 = vpack.c.b16 %v1686, %v1682
    %v2427 = vpack.c.b16 %v1687, %v1683
    %v2428 = vpack.c.b16 %v1688, %v1684
    %v2429 = vpack.c.b16 %v1689, %v1685
    %v2430 = vpack.c.b16 %v1694, %v1690
    %v2431 = vpack.c.b16 %v1695, %v1691
    %v2432 = vpack.c.b16 %v1696, %v1692
    %v2433 = vpack.c.b16 %v1697, %v1693
    %v2434 = vpack.c.b16 %v1702, %v1698
    %v2435 = vpack.c.b16 %v1703, %v1699
    %v2436 = vpack.c.b16 %v1704, %v1700
    %v2437 = vpack.c.b16 %v1705, %v1701
    %v2438 = vpack.c.b16 %v1710, %v1706
    %v2439 = vpack.c.b16 %v1711, %v1707
    %v2440 = vpack.c.b16 %v1712, %v1708
    %v2441 = vpack.c.b16 %v1713, %v1709
    %v2442 = vpack.c.b16 %v1718, %v1714
    %v2443 = vpack.c.b16 %v1719, %v1715
    %v2444 = vpack.c.b16 %v1720, %v1716
    %v2445 = vpack.c.b16 %v1721, %v1717
    %v2446 = vpack.c.b16 %v1726, %v1722
    %v2447 = vpack.c.b16 %v1727, %v1723
    %v2448 = vpack.c.b16 %v1728, %v1724
    %v2449 = vpack.c.b16 %v1729, %v1725
    %v2450 = vpack.c.b16 %v1734, %v1730
    %v2451 = vpack.c.b16 %v1735, %v1731
    %v2452 = vpack.c.b16 %v1736, %v1732
    %v2453 = vpack.c.b16 %v1737, %v1733
    %v2454 = vpack.c.b16 %v1742, %v1738
    %v2455 = vpack.c.b16 %v1743, %v1739
    %v2456 = vpack.c.b16 %v1744, %v1740
    %v2457 = vpack.c.b16 %v1745, %v1741
    %v2458 = vpack.c.b16 %v1750, %v1746
    %v2459 = vpack.c.b16 %v1751, %v1747
    %v2460 = vpack.c.b16 %v1752, %v1748
    %v2461 = vpack.c.b16 %v1753, %v1749
    %v2462 = vpack.c.b16 %v1758, %v1754
    %v2463 = vpack.c.b16 %v1759, %v1755
    %v2464 = vpack.c.b16 %v1760, %v1756
    %v2465 = vpack.c.b16 %v1761, %v1757
    %v2466 = vpack.c.b16 %v1766, %v1762
    %v2467 = vpack.c.b16 %v1767, %v1763
    %v2468 = vpack.c.b16 %v1768, %v1764
    %v2469 = vpack.c.b16 %v1769, %v1765
    %v2470 = vpack.c.b16 %v1774, %v1770
    %v2471 = vpack.c.b16 %v1775, %v1771
    %v2472 = vpack.c.b16 %v1776, %v1772
    %v2473 = vpack.c.b16 %v1777, %v1773
    %v2474 = vpack.c.b16 %v1782, %v1778
    %v2475 = vpack.c.b16 %v1783, %v1779
    %v2476 = vpack.c.b16 %v1784, %v1780
    %v2477 = vpack.c.b16 %v1785, %v1781
    %v2478 = vpack.c.b16 %v1790, %v1786
    %v2479 = vpack.c.b16 %v1791, %v1787
    %v2480 = vpack.c.b16 %v1792, %v1788
    %v2481 = vpack.c.b16 %v1793, %v1789
    %v2482 = vpack.c.b16 %v1798, %v1794
    %v2483 = vpack.c.b16 %v1799, %v1795
    %v2484 = vpack.c.b16 %v1800, %v1796
    %v2485 = vpack.c.b16 %v1801, %v1797
    %v2486 = vpack.c.b16 %v1806, %v1802
    %v2487 = vpack.c.b16 %v1807, %v1803
    %v2488 = vpack.c.b16 %v1808, %v1804
    %v2489 = vpack.c.b16 %v1809, %v1805
    %v2490 = vpack.c.b16 %v1814, %v1810
    %v2491 = vpack.c.b16 %v1815, %v1811
    %v2492 = vpack.c.b16 %v1816, %v1812
    %v2493 = vpack.c.b16 %v1817, %v1813
    %v2494 = vpack.c.b16 %v1822, %v1818
    %v2495 = vpack.c.b16 %v1823, %v1819
    %v2496 = vpack.c.b16 %v1824, %v1820
    %v2497 = vpack.c.b16 %v1825, %v1821
    %v2498 = vpack.c.b16 %v1830, %v1826
    %v2499 = vpack.c.b16 %v1831, %v1827
    %v2500 = vpack.c.b16 %v1832, %v1828
    %v2501 = vpack.c.b16 %v1833, %v1829
    %v2502 = vpack.c.b16 %v1838, %v1834
    %v2503 = vpack.c.b16 %v1839, %v1835
    %v2504 = vpack.c.b16 %v1840, %v1836
    %v2505 = vpack.c.b16 %v1841, %v1837
    %v2506 = vpack.c.b16 %v1846, %v1842
    %v2507 = vpack.c.b16 %v1847, %v1843
    %v2508 = vpack.c.b16 %v1848, %v1844
    %v2509 = vpack.c.b16 %v1849, %v1845
    %v2510 = vpack.c.b16 %v1854, %v1850
    %v2511 = vpack.c.b16 %v1855, %v1851
    %v2512 = vpack.c.b16 %v1856, %v1852
    %v2513 = vpack.c.b16 %v1857, %v1853
    %v2514 = vpack.c.b16 %v1862, %v1858
    %v2515 = vpack.c.b16 %v1863, %v1859
    %v2516 = vpack.c.b16 %v1864, %v1860
    %v2517 = vpack.c.b16 %v1865, %v1861
    %v2518 = vpack.c.b16 %v1870, %v1866
    %v2519 = vpack.c.b16 %v1871, %v1867
    %v2520 = vpack.c.b16 %v1872, %v1868
    %v2521 = vpack.c.b16 %v1873, %v1869
    %v2522 = vpack.c.b16 %v1878, %v1874
    %v2523 = vpack.c.b16 %v1879, %v1875
    %v2524 = vpack.c.b16 %v1880, %v1876
    %v2525 = vpack.c.b16 %v1881, %v1877
    %v2526 = vpack.c.b16 %v1886, %v1882
    %v2527 = vpack.c.b16 %v1887, %v1883
    %v2528 = vpack.c.b16 %v1888, %v1884
    %v2529 = vpack.c.b16 %v1889, %v1885
    %v2530 = vpack.c.b16 %v1894, %v1890
    %v2531 = vpack.c.b16 %v1895, %v1891
    %v2532 = vpack.c.b16 %v1896, %v1892
    %v2533 = vpack.c.b16 %v1897, %v1893
    %v2534 = vpack.c.b16 %v1902, %v1898
    %v2535 = vpack.c.b16 %v1903, %v1899
    %v2536 = vpack.c.b16 %v1904, %v1900
    %v2537 = vpack.c.b16 %v1905, %v1901
    %v2538 = vpack.c.b16 %v1910, %v1906
    %v2539 = vpack.c.b16 %v1911, %v1907
    %v2540 = vpack.c.b16 %v1912, %v1908
    %v2541 = vpack.c.b16 %v1913, %v1909
    %v2542 = vpack.c.b16 %v1918, %v1914
    %v2543 = vpack.c.b16 %v1919, %v1915
    %v2544 = vpack.c.b16 %v1920, %v1916
    %v2545 = vpack.c.b16 %v1921, %v1917
    %v2546 = vpack.c.b16 %v1926, %v1922
    %v2547 = vpack.c.b16 %v1927, %v1923
    %v2548 = vpack.c.b16 %v1928, %v1924
    %v2549 = vpack.c.b16 %v1929, %v1925
    %v2550 = vpack.c.b16 %v1934, %v1930
    %v2551 = vpack.c.b16 %v1935, %v1931
    %v2552 = vpack.c.b16 %v1936, %v1932
    %v2553 = vpack.c.b16 %v1937, %v1933
    %v2554 = vpack.c.b16 %v1942, %v1938
    %v2555 = vpack.c.b16 %v1943, %v1939
    %v2556 = vpack.c.b16 %v1944, %v1940
    %v2557 = vpack.c.b16 %v1945, %v1941
    %v2558 = vpack.c.b16 %v1950, %v1946
    %v2559 = vpack.c.b16 %v1951, %v1947
    %v2560 = vpack.c.b16 %v1952, %v1948
    %v2561 = vpack.c.b16 %v1953, %v1949
    %v2562 = vpack.c.b16 %v1958, %v1954
    %v2563 = vpack.c.b16 %v1959, %v1955
    %v2564 = vpack.c.b16 %v1960, %v1956
    %v2565 = vpack.c.b16 %v1961, %v1957
    %v2566 = vpack.c.b16 %v1966, %v1962
    %v2567 = vpack.c.b16 %v1967, %v1963
    %v2568 = vpack.c.b16 %v1968, %v1964
    %v2569 = vpack.c.b16 %v1969, %v1965
    %v2570 = vpack.c.b16 %v1974, %v1970
    %v2571 = vpack.c.b16 %v1975, %v1971
    %v2572 = vpack.c.b16 %v1976, %v1972
    %v2573 = vpack.c.b16 %v1977, %v1973
    %v2574 = vpack.c.b16 %v1982, %v1978
    %v2575 = vpack.c.b16 %v1983, %v1979
    %v2576 = vpack.c.b16 %v1984, %v1980
    %v2577 = vpack.c.b16 %v1985, %v1981
    %v2578 = vpack.c.b16 %v1990, %v1986
    %v2579 = vpack.c.b16 %v1991, %v1987
    %v2580 = vpack.c.b16 %v1992, %v1988
    %v2581 = vpack.c.b16 %v1993, %v1989
    %v2582 = vpack.c.b16 %v1998, %v1994
    %v2583 = vpack.c.b16 %v1999, %v1995
    %v2584 = vpack.c.b16 %v2000, %v1996
    %v2585 = vpack.c.b16 %v2001, %v1997
    %v2586 = vpack.c.b16 %v2006, %v2002
    %v2587 = vpack.c.b16 %v2007, %v2003
    %v2588 = vpack.c.b16 %v2008, %v2004
    %v2589 = vpack.c.b16 %v2009, %v2005
    %v2590 = vpack.c.b16 %v2014, %v2010
    %v2591 = vpack.c.b16 %v2015, %v2011
    %v2592 = vpack.c.b16 %v2016, %v2012
    %v2593 = vpack.c.b16 %v2017, %v2013
    %v2594 = vpack.c.b16 %v2022, %v2018
    %v2595 = vpack.c.b16 %v2023, %v2019
    %v2596 = vpack.c.b16 %v2024, %v2020
    %v2597 = vpack.c.b16 %v2025, %v2021
    %v2598 = vpack.c.b16 %v2030, %v2026
    %v2599 = vpack.c.b16 %v2031, %v2027
    %v2600 = vpack.c.b16 %v2032, %v2028
    %v2601 = vpack.c.b16 %v2033, %v2029
    %v2602 = vpack.c.b16 %v2038, %v2034
    %v2603 = vpack.c.b16 %v2039, %v2035
    %v2604 = vpack.c.b16 %v2040, %v2036
    %v2605 = vpack.c.b16 %v2041, %v2037
    %v2606 = vpack.c.b16 %v2046, %v2042
    %v2607 = vpack.c.b16 %v2047, %v2043
    %v2608 = vpack.c.b16 %v2048, %v2044
    %v2609 = vpack.c.b16 %v2049, %v2045
    %v2610 = vpack.c.b16 %v2054, %v2050
    %v2611 = vpack.c.b16 %v2055, %v2051
    %v2612 = vpack.c.b16 %v2056, %v2052
    %v2613 = vpack.c.b16 %v2057, %v2053
    %v2614 = vpack.c.b16 %v2062, %v2058
    %v2615 = vpack.c.b16 %v2063, %v2059
    %v2616 = vpack.c.b16 %v2064, %v2060
    %v2617 = vpack.c.b16 %v2065, %v2061
    %v2618 = vpack.c.b16 %v2070, %v2066
    %v2619 = vpack.c.b16 %v2071, %v2067
    %v2620 = vpack.c.b16 %v2072, %v2068
    %v2621 = vpack.c.b16 %v2073, %v2069
    %v2622 = vpack.c.b16 %v2078, %v2074
    %v2623 = vpack.c.b16 %v2079, %v2075
    %v2624 = vpack.c.b16 %v2080, %v2076
    %v2625 = vpack.c.b16 %v2081, %v2077
    %v2626 = vpack.c.b16 %v2086, %v2082
    %v2627 = vpack.c.b16 %v2087, %v2083
    %v2628 = vpack.c.b16 %v2088, %v2084
    %v2629 = vpack.c.b16 %v2089, %v2085
    %v2630 = vpack.c.b16 %v2094, %v2090
    %v2631 = vpack.c.b16 %v2095, %v2091
    %v2632 = vpack.c.b16 %v2096, %v2092
    %v2633 = vpack.c.b16 %v2097, %v2093
    %v2634 = vpack.c.b16 %v2102, %v2098
    %v2635 = vpack.c.b16 %v2103, %v2099
    %v2636 = vpack.c.b16 %v2104, %v2100
    %v2637 = vpack.c.b16 %v2105, %v2101
    %v2638 = vpack.c.b16 %v2110, %v2106
    %v2639 = vpack.c.b16 %v2111, %v2107
    %v2640 = vpack.c.b16 %v2112, %v2108
    %v2641 = vpack.c.b16 %v2113, %v2109
    %v2642 = vpack.c.b16 %v2118, %v2114
    %v2643 = vpack.c.b16 %v2119, %v2115
    %v2644 = vpack.c.b16 %v2120, %v2116
    %v2645 = vpack.c.b16 %v2121, %v2117
    %v2646 = vpack.c.b16 %v2126, %v2122
    %v2647 = vpack.c.b16 %v2127, %v2123
    %v2648 = vpack.c.b16 %v2128, %v2124
    %v2649 = vpack.c.b16 %v2129, %v2125
    %v2650 = vpack.c.b16 %v2134, %v2130
    %v2651 = vpack.c.b16 %v2135, %v2131
    %v2652 = vpack.c.b16 %v2136, %v2132
    %v2653 = vpack.c.b16 %v2137, %v2133
    %v2654 = vpack.c.b16 %v2142, %v2138
    %v2655 = vpack.c.b16 %v2143, %v2139
    %v2656 = vpack.c.b16 %v2144, %v2140
    %v2657 = vpack.c.b16 %v2145, %v2141
    %3170 = vmatprep.subr.bf16.mxu0 %v2147
    %3171 = vmatpush1.bf16.msra.mxu0 %v2146
    %3172 = vmatprep.subr.bf16.mxu0 %v2151
    %3173 = vmatpush1.bf16.msra.mxu0 %v2150
    %3174 = vmatprep.subr.bf16.mxu0 %v2155
    %3175 = vmatpush1.bf16.msra.mxu0 %v2154
    %3176 = vmatprep.subr.bf16.mxu0 %v2159
    %3177 = vmatpush1.bf16.msra.mxu0 %v2158
    %3178 = vmatprep.subr.bf16.mxu0 %v2163
    %3179 = vmatpush1.bf16.msra.mxu0 %v2162
    %3180 = vmatprep.subr.bf16.mxu0 %v2167
    %3181 = vmatpush1.bf16.msra.mxu0 %v2166
    %3182 = vmatprep.subr.bf16.mxu0 %v2171
    %3183 = vmatpush1.bf16.msra.mxu0 %v2170
    %3184 = vmatprep.subr.bf16.mxu0 %v2175
    %3185 = vmatpush1.bf16.msra.mxu0 %v2174
    %3186 = vmatprep.subr.bf16.mxu0 %v2179
    %3187 = vmatpush1.bf16.msra.mxu0 %v2178
    %3188 = vmatprep.subr.bf16.mxu0 %v2183
    %3189 = vmatpush1.bf16.msra.mxu0 %v2182
    %3190 = vmatprep.subr.bf16.mxu0 %v2187
    %3191 = vmatpush1.bf16.msra.mxu0 %v2186
    %3192 = vmatprep.subr.bf16.mxu0 %v2191
    %3193 = vmatpush1.bf16.msra.mxu0 %v2190
    %3194 = vmatprep.subr.bf16.mxu0 %v2195
    %3195 = vmatpush1.bf16.msra.mxu0 %v2194
    %3196 = vmatprep.subr.bf16.mxu0 %v2199
    %3197 = vmatpush1.bf16.msra.mxu0 %v2198
    %3198 = vmatprep.subr.bf16.mxu0 %v2203
    %3199 = vmatpush1.bf16.msra.mxu0 %v2202
    %3200 = vmatprep.subr.bf16.mxu0 %v2207
    %3201 = vmatpush1.bf16.msra.mxu0 %v2206
    %3202 = vmatprep.mubr.bf16.mxu0 %v61
    %3203 = vmatmul.mubr.bf16.gmra.mrb[0].mxu0 %v60
    %v3204 = vpop.f32.mrb[0].mxu0
    %v3205 = vadd.f32 %v593, %v3204
    %v3206 = vpop.f32.mrb[0].mxu0
    %v3207 = vadd.f32 %v597, %v3206
    %v3208 = vpop.f32.mrb[0].mxu0
    %v3209 = vadd.f32 %v593, %v3208
    %v3210 = vpop.f32.mrb[0].mxu0
    %v3211 = vadd.f32 %v597, %v3210
    %3212 = vdwg.mxu0
    %3213 = vmatprep.subr.bf16.mxu0 %v2211
    %3214 = vmatpush1.bf16.msra.mxu0 %v2210
    %3215 = vmatprep.subr.bf16.mxu0 %v2215
    %3216 = vmatpush1.bf16.msra.mxu0 %v2214
    %3217 = vmatprep.subr.bf16.mxu0 %v2219
    %3218 = vmatpush1.bf16.msra.mxu0 %v2218
    %3219 = vmatprep.subr.bf16.mxu0 %v2223
    %3220 = vmatpush1.bf16.msra.mxu0 %v2222
    %3221 = vmatprep.subr.bf16.mxu0 %v2227
    %3222 = vmatpush1.bf16.msra.mxu0 %v2226
    %3223 = vmatprep.subr.bf16.mxu0 %v2231
    %3224 = vmatpush1.bf16.msra.mxu0 %v2230
    %3225 = vmatprep.subr.bf16.mxu0 %v2235
    %3226 = vmatpush1.bf16.msra.mxu0 %v2234
    %3227 = vmatprep.subr.bf16.mxu0 %v2239
    %3228 = vmatpush1.bf16.msra.mxu0 %v2238
    %3229 = vmatprep.subr.bf16.mxu0 %v2243
    %3230 = vmatpush1.bf16.msra.mxu0 %v2242
    %3231 = vmatprep.subr.bf16.mxu0 %v2247
    %3232 = vmatpush1.bf16.msra.mxu0 %v2246
    %3233 = vmatprep.subr.bf16.mxu0 %v2251
    %3234 = vmatpush1.bf16.msra.mxu0 %v2250
    %3235 = vmatprep.subr.bf16.mxu0 %v2255
    %3236 = vmatpush1.bf16.msra.mxu0 %v2254
    %3237 = vmatprep.subr.bf16.mxu0 %v2259
    %3238 = vmatpush1.bf16.msra.mxu0 %v2258
    %3239 = vmatprep.subr.bf16.mxu0 %v2263
    %3240 = vmatpush1.bf16.msra.mxu0 %v2262
    %3241 = vmatprep.subr.bf16.mxu0 %v2267
    %3242 = vmatpush1.bf16.msra.mxu0 %v2266
    %3243 = vmatprep.subr.bf16.mxu0 %v2271
    %3244 = vmatpush1.bf16.msra.mxu0 %v2270
    %3245 = vmatprep.mubr.bf16.mxu0 %v63
    %3246 = vmatmul.mubr.bf16.gmra.mrb[0].mxu0 %v62
    %v3247 = vpop.f32.mrb[0].mxu0
    %v3248 = vadd.f32 %v3205, %v3247
    %v3249 = vpop.f32.mrb[0].mxu0
    %v3250 = vadd.f32 %v3207, %v3249
    %v3251 = vpop.f32.mrb[0].mxu0
    %v3252 = vadd.f32 %v3209, %v3251
    %v3253 = vpop.f32.mrb[0].mxu0
    %v3254 = vadd.f32 %v3211, %v3253
    %3255 = vdwg.mxu0
    %3256 = vmatprep.subr.bf16.mxu0 %v2275
    %3257 = vmatpush1.bf16.msra.mxu0 %v2274
    %3258 = vmatprep.subr.bf16.mxu0 %v2279
    %3259 = vmatpush1.bf16.msra.mxu0 %v2278
    %3260 = vmatprep.subr.bf16.mxu0 %v2283
    %3261 = vmatpush1.bf16.msra.mxu0 %v2282
    %3262 = vmatprep.subr.bf16.mxu0 %v2287
    %3263 = vmatpush1.bf16.msra.mxu0 %v2286
    %3264 = vmatprep.subr.bf16.mxu0 %v2291
    %3265 = vmatpush1.bf16.msra.mxu0 %v2290
    %3266 = vmatprep.subr.bf16.mxu0 %v2295
    %3267 = vmatpush1.bf16.msra.mxu0 %v2294
    %3268 = vmatprep.subr.bf16.mxu0 %v2299
    %3269 = vmatpush1.bf16.msra.mxu0 %v2298
    %3270 = vmatprep.subr.bf16.mxu0 %v2303
    %3271 = vmatpush1.bf16.msra.mxu0 %v2302
    %3272 = vmatprep.subr.bf16.mxu0 %v2307
    %3273 = vmatpush1.bf16.msra.mxu0 %v2306
    %3274 = vmatprep.subr.bf16.mxu0 %v2311
    %3275 = vmatpush1.bf16.msra.mxu0 %v2310
    %3276 = vmatprep.subr.bf16.mxu0 %v2315
    %3277 = vmatpush1.bf16.msra.mxu0 %v2314
    %3278 = vmatprep.subr.bf16.mxu0 %v2319
    %3279 = vmatpush1.bf16.msra.mxu0 %v2318
    %3280 = vmatprep.subr.bf16.mxu0 %v2323
    %3281 = vmatpush1.bf16.msra.mxu0 %v2322
    %3282 = vmatprep.subr.bf16.mxu0 %v2327
    %3283 = vmatpush1.bf16.msra.mxu0 %v2326
    %3284 = vmatprep.subr.bf16.mxu0 %v2331
    %3285 = vmatpush1.bf16.msra.mxu0 %v2330
    %3286 = vmatprep.subr.bf16.mxu0 %v2335
    %3287 = vmatpush1.bf16.msra.mxu0 %v2334
    %3288 = vmatprep.mubr.bf16.mxu0 %v65
    %3289 = vmatmul.mubr.bf16.gmra.mrb[0].mxu0 %v64
    %v3290 = vpop.f32.mrb[0].mxu0
    %v3291 = vadd.f32 %v3248, %v3290
    %v3292 = vpop.f32.mrb[0].mxu0
    %v3293 = vadd.f32 %v3250, %v3292
    %v3294 = vpop.f32.mrb[0].mxu0
    %v3295 = vadd.f32 %v3252, %v3294
    %v3296 = vpop.f32.mrb[0].mxu0
    %v3297 = vadd.f32 %v3254, %v3296
    %3298 = vdwg.mxu0
    %3299 = vmatprep.subr.bf16.mxu0 %v2339
    %3300 = vmatpush1.bf16.msra.mxu0 %v2338
    %3301 = vmatprep.subr.bf16.mxu0 %v2343
    %3302 = vmatpush1.bf16.msra.mxu0 %v2342
    %3303 = vmatprep.subr.bf16.mxu0 %v2347
    %3304 = vmatpush1.bf16.msra.mxu0 %v2346
    %3305 = vmatprep.subr.bf16.mxu0 %v2351
    %3306 = vmatpush1.bf16.msra.mxu0 %v2350
    %3307 = vmatprep.subr.bf16.mxu0 %v2355
    %3308 = vmatpush1.bf16.msra.mxu0 %v2354
    %3309 = vmatprep.subr.bf16.mxu0 %v2359
    %3310 = vmatpush1.bf16.msra.mxu0 %v2358
    %3311 = vmatprep.subr.bf16.mxu0 %v2363
    %3312 = vmatpush1.bf16.msra.mxu0 %v2362
    %3313 = vmatprep.subr.bf16.mxu0 %v2367
    %3314 = vmatpush1.bf16.msra.mxu0 %v2366
    %3315 = vmatprep.subr.bf16.mxu0 %v2371
    %3316 = vmatpush1.bf16.msra.mxu0 %v2370
    %3317 = vmatprep.subr.bf16.mxu0 %v2375
    %3318 = vmatpush1.bf16.msra.mxu0 %v2374
    %3319 = vmatprep.subr.bf16.mxu0 %v2379
    %3320 = vmatpush1.bf16.msra.mxu0 %v2378
    %3321 = vmatprep.subr.bf16.mxu0 %v2383
    %3322 = vmatpush1.bf16.msra.mxu0 %v2382
    %3323 = vmatprep.subr.bf16.mxu0 %v2387
    %3324 = vmatpush1.bf16.msra.mxu0 %v2386
    %3325 = vmatprep.subr.bf16.mxu0 %v2391
    %3326 = vmatpush1.bf16.msra.mxu0 %v2390
    %3327 = vmatprep.subr.bf16.mxu0 %v2395
    %3328 = vmatpush1.bf16.msra.mxu0 %v2394
    %3329 = vmatprep.subr.bf16.mxu0 %v2399
    %3330 = vmatpush1.bf16.msra.mxu0 %v2398
    %3331 = vmatprep.mubr.bf16.mxu0 %v67
    %3332 = vmatmul.mubr.bf16.gmra.mrb[0].mxu0 %v66
    %v3333 = vpop.f32.mrb[0].mxu0
    %v3334 = vadd.f32 %v3291, %v3333
    %v3335 = vpop.f32.mrb[0].mxu0
    %v3336 = vadd.f32 %v3293, %v3335
    %v3337 = vpop.f32.mrb[0].mxu0
    %v3338 = vadd.f32 %v3295, %v3337
    %v3339 = vpop.f32.mrb[0].mxu0
    %v3340 = vadd.f32 %v3297, %v3339
    %3341 = vdwg.mxu0
    %3342 = vmatprep.subr.bf16.mxu0 %v2403
    %3343 = vmatpush1.bf16.msra.mxu0 %v2402
    %3344 = vmatprep.subr.bf16.mxu0 %v2407
    %3345 = vmatpush1.bf16.msra.mxu0 %v2406
    %3346 = vmatprep.subr.bf16.mxu0 %v2411
    %3347 = vmatpush1.bf16.msra.mxu0 %v2410
    %3348 = vmatprep.subr.bf16.mxu0 %v2415
    %3349 = vmatpush1.bf16.msra.mxu0 %v2414
    %3350 = vmatprep.subr.bf16.mxu0 %v2419
    %3351 = vmatpush1.bf16.msra.mxu0 %v2418
    %3352 = vmatprep.subr.bf16.mxu0 %v2423
    %3353 = vmatpush1.bf16.msra.mxu0 %v2422
    %3354 = vmatprep.subr.bf16.mxu0 %v2427
    %3355 = vmatpush1.bf16.msra.mxu0 %v2426
    %3356 = vmatprep.subr.bf16.mxu0 %v2431
    %3357 = vmatpush1.bf16.msra.mxu0 %v2430
    %3358 = vmatprep.subr.bf16.mxu0 %v2435
    %3359 = vmatpush1.bf16.msra.mxu0 %v2434
    %3360 = vmatprep.subr.bf16.mxu0 %v2439
    %3361 = vmatpush1.bf16.msra.mxu0 %v2438
    %3362 = vmatprep.subr.bf16.mxu0 %v2443
    %3363 = vmatpush1.bf16.msra.mxu0 %v2442
    %3364 = vmatprep.subr.bf16.mxu0 %v2447
    %3365 = vmatpush1.bf16.msra.mxu0 %v2446
    %3366 = vmatprep.subr.bf16.mxu0 %v2451
    %3367 = vmatpush1.bf16.msra.mxu0 %v2450
    %3368 = vmatprep.subr.bf16.mxu0 %v2455
    %3369 = vmatpush1.bf16.msra.mxu0 %v2454
    %3370 = vmatprep.subr.bf16.mxu0 %v2459
    %3371 = vmatpush1.bf16.msra.mxu0 %v2458
    %3372 = vmatprep.subr.bf16.mxu0 %v2463
    %3373 = vmatpush1.bf16.msra.mxu0 %v2462
    %3374 = vmatprep.mubr.bf16.mxu0 %v69
    %3375 = vmatmul.mubr.bf16.gmra.mrb[0].mxu0 %v68
    %v3376 = vpop.f32.mrb[0].mxu0
    %v3377 = vadd.f32 %v3334, %v3376
    %v3378 = vpop.f32.mrb[0].mxu0
    %v3379 = vadd.f32 %v3336, %v3378
    %v3380 = vpop.f32.mrb[0].mxu0
    %v3381 = vadd.f32 %v3338, %v3380
    %v3382 = vpop.f32.mrb[0].mxu0
    %v3383 = vadd.f32 %v3340, %v3382
    %3384 = vdwg.mxu0
    %3385 = vmatprep.subr.bf16.mxu0 %v2467
    %3386 = vmatpush1.bf16.msra.mxu0 %v2466
    %3387 = vmatprep.subr.bf16.mxu0 %v2471
    %3388 = vmatpush1.bf16.msra.mxu0 %v2470
    %3389 = vmatprep.subr.bf16.mxu0 %v2475
    %3390 = vmatpush1.bf16.msra.mxu0 %v2474
    %3391 = vmatprep.subr.bf16.mxu0 %v2479
    %3392 = vmatpush1.bf16.msra.mxu0 %v2478
    %3393 = vmatprep.subr.bf16.mxu0 %v2483
    %3394 = vmatpush1.bf16.msra.mxu0 %v2482
    %3395 = vmatprep.subr.bf16.mxu0 %v2487
    %3396 = vmatpush1.bf16.msra.mxu0 %v2486
    %3397 = vmatprep.subr.bf16.mxu0 %v2491
    %3398 = vmatpush1.bf16.msra.mxu0 %v2490
    %3399 = vmatprep.subr.bf16.mxu0 %v2495
    %3400 = vmatpush1.bf16.msra.mxu0 %v2494
    %3401 = vmatprep.subr.bf16.mxu0 %v2499
    %3402 = vmatpush1.bf16.msra.mxu0 %v2498
    %3403 = vmatprep.subr.bf16.mxu0 %v2503
    %3404 = vmatpush1.bf16.msra.mxu0 %v2502
    %3405 = vmatprep.subr.bf16.mxu0 %v2507
    %3406 = vmatpush1.bf16.msra.mxu0 %v2506
    %3407 = vmatprep.subr.bf16.mxu0 %v2511
    %3408 = vmatpush1.bf16.msra.mxu0 %v2510
    %3409 = vmatprep.subr.bf16.mxu0 %v2515
    %3410 = vmatpush1.bf16.msra.mxu0 %v2514
    %3411 = vmatprep.subr.bf16.mxu0 %v2519
    %3412 = vmatpush1.bf16.msra.mxu0 %v2518
    %3413 = vmatprep.subr.bf16.mxu0 %v2523
    %3414 = vmatpush1.bf16.msra.mxu0 %v2522
    %3415 = vmatprep.subr.bf16.mxu0 %v2527
    %3416 = vmatpush1.bf16.msra.mxu0 %v2526
    %3417 = vmatprep.mubr.bf16.mxu0 %v71
    %3418 = vmatmul.mubr.bf16.gmra.mrb[0].mxu0 %v70
    %v3419 = vpop.f32.mrb[0].mxu0
    %v3420 = vadd.f32 %v3377, %v3419
    %v3421 = vpop.f32.mrb[0].mxu0
    %v3422 = vadd.f32 %v3379, %v3421
    %v3423 = vpop.f32.mrb[0].mxu0
    %v3424 = vadd.f32 %v3381, %v3423
    %v3425 = vpop.f32.mrb[0].mxu0
    %v3426 = vadd.f32 %v3383, %v3425
    %3427 = vdwg.mxu0
    %3428 = vmatprep.subr.bf16.mxu0 %v2531
    %3429 = vmatpush1.bf16.msra.mxu0 %v2530
    %3430 = vmatprep.subr.bf16.mxu0 %v2535
    %3431 = vmatpush1.bf16.msra.mxu0 %v2534
    %3432 = vmatprep.subr.bf16.mxu0 %v2539
    %3433 = vmatpush1.bf16.msra.mxu0 %v2538
    %3434 = vmatprep.subr.bf16.mxu0 %v2543
    %3435 = vmatpush1.bf16.msra.mxu0 %v2542
    %3436 = vmatprep.subr.bf16.mxu0 %v2547
    %3437 = vmatpush1.bf16.msra.mxu0 %v2546
    %3438 = vmatprep.subr.bf16.mxu0 %v2551
    %3439 = vmatpush1.bf16.msra.mxu0 %v2550
    %3440 = vmatprep.subr.bf16.mxu0 %v2555
    %3441 = vmatpush1.bf16.msra.mxu0 %v2554
    %3442 = vmatprep.subr.bf16.mxu0 %v2559
    %3443 = vmatpush1.bf16.msra.mxu0 %v2558
    %3444 = vmatprep.subr.bf16.mxu0 %v2563
    %3445 = vmatpush1.bf16.msra.mxu0 %v2562
    %3446 = vmatprep.subr.bf16.mxu0 %v2567
    %3447 = vmatpush1.bf16.msra.mxu0 %v2566
    %3448 = vmatprep.subr.bf16.mxu0 %v2571
    %3449 = vmatpush1.bf16.msra.mxu0 %v2570
    %3450 = vmatprep.subr.bf16.mxu0 %v2575
    %3451 = vmatpush1.bf16.msra.mxu0 %v2574
    %3452 = vmatprep.subr.bf16.mxu0 %v2579
    %3453 = vmatpush1.bf16.msra.mxu0 %v2578
    %3454 = vmatprep.subr.bf16.mxu0 %v2583
    %3455 = vmatpush1.bf16.msra.mxu0 %v2582
    %3456 = vmatprep.subr.bf16.mxu0 %v2587
    %3457 = vmatpush1.bf16.msra.mxu0 %v2586
    %3458 = vmatprep.subr.bf16.mxu0 %v2591
    %3459 = vmatpush1.bf16.msra.mxu0 %v2590
    %3460 = vmatprep.mubr.bf16.mxu0 %v73
    %3461 = vmatmul.mubr.bf16.gmra.mrb[0].mxu0 %v72
    %v3462 = vpop.f32.mrb[0].mxu0
    %v3463 = vadd.f32 %v3420, %v3462
    %v3464 = vpop.f32.mrb[0].mxu0
    %v3465 = vadd.f32 %v3422, %v3464
    %v3466 = vpop.f32.mrb[0].mxu0
    %v3467 = vadd.f32 %v3424, %v3466
    %v3468 = vpop.f32.mrb[0].mxu0
    %v3469 = vadd.f32 %v3426, %v3468
    %3470 = vdwg.mxu0
    %3471 = vmatprep.subr.bf16.mxu0 %v2595
    %3472 = vmatpush1.bf16.msra.mxu0 %v2594
    %3473 = vmatprep.subr.bf16.mxu0 %v2599
    %3474 = vmatpush1.bf16.msra.mxu0 %v2598
    %3475 = vmatprep.subr.bf16.mxu0 %v2603
    %3476 = vmatpush1.bf16.msra.mxu0 %v2602
    %3477 = vmatprep.subr.bf16.mxu0 %v2607
    %3478 = vmatpush1.bf16.msra.mxu0 %v2606
    %3479 = vmatprep.subr.bf16.mxu0 %v2611
    %3480 = vmatpush1.bf16.msra.mxu0 %v2610
    %3481 = vmatprep.subr.bf16.mxu0 %v2615
    %3482 = vmatpush1.bf16.msra.mxu0 %v2614
    %3483 = vmatprep.subr.bf16.mxu0 %v2619
    %3484 = vmatpush1.bf16.msra.mxu0 %v2618
    %3485 = vmatprep.subr.bf16.mxu0 %v2623
    %3486 = vmatpush1.bf16.msra.mxu0 %v2622
    %3487 = vmatprep.subr.bf16.mxu0 %v2627
    %3488 = vmatpush1.bf16.msra.mxu0 %v2626
    %3489 = vmatprep.subr.bf16.mxu0 %v2631
    %3490 = vmatpush1.bf16.msra.mxu0 %v2630
    %3491 = vmatprep.subr.bf16.mxu0 %v2635
    %3492 = vmatpush1.bf16.msra.mxu0 %v2634
    %3493 = vmatprep.subr.bf16.mxu0 %v2639
    %3494 = vmatpush1.bf16.msra.mxu0 %v2638
    %3495 = vmatprep.subr.bf16.mxu0 %v2643
    %3496 = vmatpush1.bf16.msra.mxu0 %v2642
    %3497 = vmatprep.subr.bf16.mxu0 %v2647
    %3498 = vmatpush1.bf16.msra.mxu0 %v2646
    %3499 = vmatprep.subr.bf16.mxu0 %v2651
    %3500 = vmatpush1.bf16.msra.mxu0 %v2650
    %3501 = vmatprep.subr.bf16.mxu0 %v2655
    %3502 = vmatpush1.bf16.msra.mxu0 %v2654
    %3503 = vmatprep.mubr.bf16.mxu0 %v75
    %3504 = vmatmul.mubr.bf16.gmra.mrb[0].mxu0 %v74
    %v3505 = vpop.f32.mrb[0].mxu0
    %v3506 = vadd.f32 %v3463, %v3505
    %v3507 = vpop.f32.mrb[0].mxu0
    %v3508 = vadd.f32 %v3465, %v3507
    %v3509 = vpop.f32.mrb[0].mxu0
    %v3510 = vadd.f32 %v3467, %v3509
    %v3511 = vpop.f32.mrb[0].mxu0
    %v3512 = vadd.f32 %v3469, %v3511
    %3513 = vdwg.mxu0
    %3514 = vmatprep.subr.bf16.mxu0 %v2149
    %3515 = vmatpush1.bf16.msra.mxu0 %v2148
    %3516 = vmatprep.subr.bf16.mxu0 %v2153
    %3517 = vmatpush1.bf16.msra.mxu0 %v2152
    %3518 = vmatprep.subr.bf16.mxu0 %v2157
    %3519 = vmatpush1.bf16.msra.mxu0 %v2156
    %3520 = vmatprep.subr.bf16.mxu0 %v2161
    %3521 = vmatpush1.bf16.msra.mxu0 %v2160
    %3522 = vmatprep.subr.bf16.mxu0 %v2165
    %3523 = vmatpush1.bf16.msra.mxu0 %v2164
    %3524 = vmatprep.subr.bf16.mxu0 %v2169
    %3525 = vmatpush1.bf16.msra.mxu0 %v2168
    %3526 = vmatprep.subr.bf16.mxu0 %v2173
    %3527 = vmatpush1.bf16.msra.mxu0 %v2172
    %3528 = vmatprep.subr.bf16.mxu0 %v2177
    %3529 = vmatpush1.bf16.msra.mxu0 %v2176
    %3530 = vmatprep.subr.bf16.mxu0 %v2181
    %3531 = vmatpush1.bf16.msra.mxu0 %v2180
    %3532 = vmatprep.subr.bf16.mxu0 %v2185
    %3533 = vmatpush1.bf16.msra.mxu0 %v2184
    %3534 = vmatprep.subr.bf16.mxu0 %v2189
    %3535 = vmatpush1.bf16.msra.mxu0 %v2188
    %3536 = vmatprep.subr.bf16.mxu0 %v2193
    %3537 = vmatpush1.bf16.msra.mxu0 %v2192
    %3538 = vmatprep.subr.bf16.mxu0 %v2197
    %3539 = vmatpush1.bf16.msra.mxu0 %v2196
    %3540 = vmatprep.subr.bf16.mxu0 %v2201
    %3541 = vmatpush1.bf16.msra.mxu0 %v2200
    %3542 = vmatprep.subr.bf16.mxu0 %v2205
    %3543 = vmatpush1.bf16.msra.mxu0 %v2204
    %3544 = vmatprep.subr.bf16.mxu0 %v2209
    %3545 = vmatpush1.bf16.msra.mxu0 %v2208
    %3546 = vmatprep.mubr.bf16.mxu0 %v61
    %3547 = vmatmul.mubr.bf16.gmra.mrb[0].mxu0 %v60
    %v3548 = vpop.f32.mrb[0].mxu0
    %v3549 = vadd.f32 %v601, %v3548
    %v3550 = vpop.f32.mrb[0].mxu0
    %v3551 = vadd.f32 %v605, %v3550
    %v3552 = vpop.f32.mrb[0].mxu0
    %v3553 = vadd.f32 %v601, %v3552
    %v3554 = vpop.f32.mrb[0].mxu0
    %v3555 = vadd.f32 %v605, %v3554
    %3556 = vdwg.mxu0
    %3557 = vmatprep.subr.bf16.mxu0 %v2213
    %3558 = vmatpush1.bf16.msra.mxu0 %v2212
    %3559 = vmatprep.subr.bf16.mxu0 %v2217
    %3560 = vmatpush1.bf16.msra.mxu0 %v2216
    %3561 = vmatprep.subr.bf16.mxu0 %v2221
    %3562 = vmatpush1.bf16.msra.mxu0 %v2220
    %3563 = vmatprep.subr.bf16.mxu0 %v2225
    %3564 = vmatpush1.bf16.msra.mxu0 %v2224
    %3565 = vmatprep.subr.bf16.mxu0 %v2229
    %3566 = vmatpush1.bf16.msra.mxu0 %v2228
    %3567 = vmatprep.subr.bf16.mxu0 %v2233
    %3568 = vmatpush1.bf16.msra.mxu0 %v2232
    %3569 = vmatprep.subr.bf16.mxu0 %v2237
    %3570 = vmatpush1.bf16.msra.mxu0 %v2236
    %3571 = vmatprep.subr.bf16.mxu0 %v2241
    %3572 = vmatpush1.bf16.msra.mxu0 %v2240
    %3573 = vmatprep.subr.bf16.mxu0 %v2245
    %3574 = vmatpush1.bf16.msra.mxu0 %v2244
    %3575 = vmatprep.subr.bf16.mxu0 %v2249
    %3576 = vmatpush1.bf16.msra.mxu0 %v2248
    %3577 = vmatprep.subr.bf16.mxu0 %v2253
    %3578 = vmatpush1.bf16.msra.mxu0 %v2252
    %3579 = vmatprep.subr.bf16.mxu0 %v2257
    %3580 = vmatpush1.bf16.msra.mxu0 %v2256
    %3581 = vmatprep.subr.bf16.mxu0 %v2261
    %3582 = vmatpush1.bf16.msra.mxu0 %v2260
    %3583 = vmatprep.subr.bf16.mxu0 %v2265
    %3584 = vmatpush1.bf16.msra.mxu0 %v2264
    %3585 = vmatprep.subr.bf16.mxu0 %v2269
    %3586 = vmatpush1.bf16.msra.mxu0 %v2268
    %3587 = vmatprep.subr.bf16.mxu0 %v2273
    %3588 = vmatpush1.bf16.msra.mxu0 %v2272
    %3589 = vmatprep.mubr.bf16.mxu0 %v63
    %3590 = vmatmul.mubr.bf16.gmra.mrb[0].mxu0 %v62
    %v3591 = vpop.f32.mrb[0].mxu0
    %v3592 = vadd.f32 %v3549, %v3591
    %v3593 = vpop.f32.mrb[0].mxu0
    %v3594 = vadd.f32 %v3551, %v3593
    %v3595 = vpop.f32.mrb[0].mxu0
    %v3596 = vadd.f32 %v3553, %v3595
    %v3597 = vpop.f32.mrb[0].mxu0
    %v3598 = vadd.f32 %v3555, %v3597
    %3599 = vdwg.mxu0
    %3600 = vmatprep.subr.bf16.mxu0 %v2277
    %3601 = vmatpush1.bf16.msra.mxu0 %v2276
    %3602 = vmatprep.subr.bf16.mxu0 %v2281
    %3603 = vmatpush1.bf16.msra.mxu0 %v2280
    %3604 = vmatprep.subr.bf16.mxu0 %v2285
    %3605 = vmatpush1.bf16.msra.mxu0 %v2284
    %3606 = vmatprep.subr.bf16.mxu0 %v2289
    %3607 = vmatpush1.bf16.msra.mxu0 %v2288
    %3608 = vmatprep.subr.bf16.mxu0 %v2293
    %3609 = vmatpush1.bf16.msra.mxu0 %v2292
    %3610 = vmatprep.subr.bf16.mxu0 %v2297
    %3611 = vmatpush1.bf16.msra.mxu0 %v2296
    %3612 = vmatprep.subr.bf16.mxu0 %v2301
    %3613 = vmatpush1.bf16.msra.mxu0 %v2300
    %3614 = vmatprep.subr.bf16.mxu0 %v2305
    %3615 = vmatpush1.bf16.msra.mxu0 %v2304
    %3616 = vmatprep.subr.bf16.mxu0 %v2309
    %3617 = vmatpush1.bf16.msra.mxu0 %v2308
    %3618 = vmatprep.subr.bf16.mxu0 %v2313
    %3619 = vmatpush1.bf16.msra.mxu0 %v2312
    %3620 = vmatprep.subr.bf16.mxu0 %v2317
    %3621 = vmatpush1.bf16.msra.mxu0 %v2316
    %3622 = vmatprep.subr.bf16.mxu0 %v2321
    %3623 = vmatpush1.bf16.msra.mxu0 %v2320
    %3624 = vmatprep.subr.bf16.mxu0 %v2325
    %3625 = vmatpush1.bf16.msra.mxu0 %v2324
    %3626 = vmatprep.subr.bf16.mxu0 %v2329
    %3627 = vmatpush1.bf16.msra.mxu0 %v2328
    %3628 = vmatprep.subr.bf16.mxu0 %v2333
    %3629 = vmatpush1.bf16.msra.mxu0 %v2332
    %3630 = vmatprep.subr.bf16.mxu0 %v2337
    %3631 = vmatpush1.bf16.msra.mxu0 %v2336
    %3632 = vmatprep.mubr.bf16.mxu0 %v65
    %3633 = vmatmul.mubr.bf16.gmra.mrb[0].mxu0 %v64
    %v3634 = vpop.f32.mrb[0].mxu0
    %v3635 = vadd.f32 %v3592, %v3634
    %v3636 = vpop.f32.mrb[0].mxu0
    %v3637 = vadd.f32 %v3594, %v3636
    %v3638 = vpop.f32.mrb[0].mxu0
    %v3639 = vadd.f32 %v3596, %v3638
    %v3640 = vpop.f32.mrb[0].mxu0
    %v3641 = vadd.f32 %v3598, %v3640
    %3642 = vdwg.mxu0
    %3643 = vmatprep.subr.bf16.mxu0 %v2341
    %3644 = vmatpush1.bf16.msra.mxu0 %v2340
    %3645 = vmatprep.subr.bf16.mxu0 %v2345
    %3646 = vmatpush1.bf16.msra.mxu0 %v2344
    %3647 = vmatprep.subr.bf16.mxu0 %v2349
    %3648 = vmatpush1.bf16.msra.mxu0 %v2348
    %3649 = vmatprep.subr.bf16.mxu0 %v2353
    %3650 = vmatpush1.bf16.msra.mxu0 %v2352
    %3651 = vmatprep.subr.bf16.mxu0 %v2357
    %3652 = vmatpush1.bf16.msra.mxu0 %v2356
    %3653 = vmatprep.subr.bf16.mxu0 %v2361
    %3654 = vmatpush1.bf16.msra.mxu0 %v2360
    %3655 = vmatprep.subr.bf16.mxu0 %v2365
    %3656 = vmatpush1.bf16.msra.mxu0 %v2364
    %3657 = vmatprep.subr.bf16.mxu0 %v2369
    %3658 = vmatpush1.bf16.msra.mxu0 %v2368
    %3659 = vmatprep.subr.bf16.mxu0 %v2373
    %3660 = vmatpush1.bf16.msra.mxu0 %v2372
    %3661 = vmatprep.subr.bf16.mxu0 %v2377
    %3662 = vmatpush1.bf16.msra.mxu0 %v2376
    %3663 = vmatprep.subr.bf16.mxu0 %v2381
    %3664 = vmatpush1.bf16.msra.mxu0 %v2380
    %3665 = vmatprep.subr.bf16.mxu0 %v2385
    %3666 = vmatpush1.bf16.msra.mxu0 %v2384
    %3667 = vmatprep.subr.bf16.mxu0 %v2389
    %3668 = vmatpush1.bf16.msra.mxu0 %v2388
    %3669 = vmatprep.subr.bf16.mxu0 %v2393
    %3670 = vmatpush1.bf16.msra.mxu0 %v2392
    %3671 = vmatprep.subr.bf16.mxu0 %v2397
    %3672 = vmatpush1.bf16.msra.mxu0 %v2396
    %3673 = vmatprep.subr.bf16.mxu0 %v2401
    %3674 = vmatpush1.bf16.msra.mxu0 %v2400
    %3675 = vmatprep.mubr.bf16.mxu0 %v67
    %3676 = vmatmul.mubr.bf16.gmra.mrb[0].mxu0 %v66
    %v3677 = vpop.f32.mrb[0].mxu0
    %v3678 = vadd.f32 %v3635, %v3677
    %v3679 = vpop.f32.mrb[0].mxu0
    %v3680 = vadd.f32 %v3637, %v3679
    %v3681 = vpop.f32.mrb[0].mxu0
    %v3682 = vadd.f32 %v3639, %v3681
    %v3683 = vpop.f32.mrb[0].mxu0
    %v3684 = vadd.f32 %v3641, %v3683
    %3685 = vdwg.mxu0
    %3686 = vmatprep.subr.bf16.mxu0 %v2405
    %3687 = vmatpush1.bf16.msra.mxu0 %v2404
    %3688 = vmatprep.subr.bf16.mxu0 %v2409
    %3689 = vmatpush1.bf16.msra.mxu0 %v2408
    %3690 = vmatprep.subr.bf16.mxu0 %v2413
    %3691 = vmatpush1.bf16.msra.mxu0 %v2412
    %3692 = vmatprep.subr.bf16.mxu0 %v2417
    %3693 = vmatpush1.bf16.msra.mxu0 %v2416
    %3694 = vmatprep.subr.bf16.mxu0 %v2421
    %3695 = vmatpush1.bf16.msra.mxu0 %v2420
    %3696 = vmatprep.subr.bf16.mxu0 %v2425
    %3697 = vmatpush1.bf16.msra.mxu0 %v2424
    %3698 = vmatprep.subr.bf16.mxu0 %v2429
    %3699 = vmatpush1.bf16.msra.mxu0 %v2428
    %3700 = vmatprep.subr.bf16.mxu0 %v2433
    %3701 = vmatpush1.bf16.msra.mxu0 %v2432
    %3702 = vmatprep.subr.bf16.mxu0 %v2437
    %3703 = vmatpush1.bf16.msra.mxu0 %v2436
    %3704 = vmatprep.subr.bf16.mxu0 %v2441
    %3705 = vmatpush1.bf16.msra.mxu0 %v2440
    %3706 = vmatprep.subr.bf16.mxu0 %v2445
    %3707 = vmatpush1.bf16.msra.mxu0 %v2444
    %3708 = vmatprep.subr.bf16.mxu0 %v2449
    %3709 = vmatpush1.bf16.msra.mxu0 %v2448
    %3710 = vmatprep.subr.bf16.mxu0 %v2453
    %3711 = vmatpush1.bf16.msra.mxu0 %v2452
    %3712 = vmatprep.subr.bf16.mxu0 %v2457
    %3713 = vmatpush1.bf16.msra.mxu0 %v2456
    %3714 = vmatprep.subr.bf16.mxu0 %v2461
    %3715 = vmatpush1.bf16.msra.mxu0 %v2460
    %3716 = vmatprep.subr.bf16.mxu0 %v2465
    %3717 = vmatpush1.bf16.msra.mxu0 %v2464
    %3718 = vmatprep.mubr.bf16.mxu0 %v69
    %3719 = vmatmul.mubr.bf16.gmra.mrb[0].mxu0 %v68
    %v3720 = vpop.f32.mrb[0].mxu0
    %v3721 = vadd.f32 %v3678, %v3720
    %v3722 = vpop.f32.mrb[0].mxu0
    %v3723 = vadd.f32 %v3680, %v3722
    %v3724 = vpop.f32.mrb[0].mxu0
    %v3725 = vadd.f32 %v3682, %v3724
    %v3726 = vpop.f32.mrb[0].mxu0
    %v3727 = vadd.f32 %v3684, %v3726
    %3728 = vdwg.mxu0
    %3729 = vmatprep.subr.bf16.mxu0 %v2469
    %3730 = vmatpush1.bf16.msra.mxu0 %v2468
    %3731 = vmatprep.subr.bf16.mxu0 %v2473
    %3732 = vmatpush1.bf16.msra.mxu0 %v2472
    %3733 = vmatprep.subr.bf16.mxu0 %v2477
    %3734 = vmatpush1.bf16.msra.mxu0 %v2476
    %3735 = vmatprep.subr.bf16.mxu0 %v2481
    %3736 = vmatpush1.bf16.msra.mxu0 %v2480
    %3737 = vmatprep.subr.bf16.mxu0 %v2485
    %3738 = vmatpush1.bf16.msra.mxu0 %v2484
    %3739 = vmatprep.subr.bf16.mxu0 %v2489
    %3740 = vmatpush1.bf16.msra.mxu0 %v2488
    %3741 = vmatprep.subr.bf16.mxu0 %v2493
    %3742 = vmatpush1.bf16.msra.mxu0 %v2492
    %3743 = vmatprep.subr.bf16.mxu0 %v2497
    %3744 = vmatpush1.bf16.msra.mxu0 %v2496
    %3745 = vmatprep.subr.bf16.mxu0 %v2501
    %3746 = vmatpush1.bf16.msra.mxu0 %v2500
    %3747 = vmatprep.subr.bf16.mxu0 %v2505
    %3748 = vmatpush1.bf16.msra.mxu0 %v2504
    %3749 = vmatprep.subr.bf16.mxu0 %v2509
    %3750 = vmatpush1.bf16.msra.mxu0 %v2508
    %3751 = vmatprep.subr.bf16.mxu0 %v2513
    %3752 = vmatpush1.bf16.msra.mxu0 %v2512
    %3753 = vmatprep.subr.bf16.mxu0 %v2517
    %3754 = vmatpush1.bf16.msra.mxu0 %v2516
    %3755 = vmatprep.subr.bf16.mxu0 %v2521
    %3756 = vmatpush1.bf16.msra.mxu0 %v2520
    %3757 = vmatprep.subr.bf16.mxu0 %v2525
    %3758 = vmatpush1.bf16.msra.mxu0 %v2524
    %3759 = vmatprep.subr.bf16.mxu0 %v2529
    %3760 = vmatpush1.bf16.msra.mxu0 %v2528
    %3761 = vmatprep.mubr.bf16.mxu0 %v71
    %3762 = vmatmul.mubr.bf16.gmra.mrb[0].mxu0 %v70
    %v3763 = vpop.f32.mrb[0].mxu0
    %v3764 = vadd.f32 %v3721, %v3763
    %v3765 = vpop.f32.mrb[0].mxu0
    %v3766 = vadd.f32 %v3723, %v3765
    %v3767 = vpop.f32.mrb[0].mxu0
    %v3768 = vadd.f32 %v3725, %v3767
    %v3769 = vpop.f32.mrb[0].mxu0
    %v3770 = vadd.f32 %v3727, %v3769
    %3771 = vdwg.mxu0
    %3772 = vmatprep.subr.bf16.mxu0 %v2533
    %3773 = vmatpush1.bf16.msra.mxu0 %v2532
    %3774 = vmatprep.subr.bf16.mxu0 %v2537
    %3775 = vmatpush1.bf16.msra.mxu0 %v2536
    %3776 = vmatprep.subr.bf16.mxu0 %v2541
    %3777 = vmatpush1.bf16.msra.mxu0 %v2540
    %3778 = vmatprep.subr.bf16.mxu0 %v2545
    %3779 = vmatpush1.bf16.msra.mxu0 %v2544
    %3780 = vmatprep.subr.bf16.mxu0 %v2549
    %3781 = vmatpush1.bf16.msra.mxu0 %v2548
    %3782 = vmatprep.subr.bf16.mxu0 %v2553
    %3783 = vmatpush1.bf16.msra.mxu0 %v2552
    %3784 = vmatprep.subr.bf16.mxu0 %v2557
    %3785 = vmatpush1.bf16.msra.mxu0 %v2556
    %3786 = vmatprep.subr.bf16.mxu0 %v2561
    %3787 = vmatpush1.bf16.msra.mxu0 %v2560
    %3788 = vmatprep.subr.bf16.mxu0 %v2565
    %3789 = vmatpush1.bf16.msra.mxu0 %v2564
    %3790 = vmatprep.subr.bf16.mxu0 %v2569
    %3791 = vmatpush1.bf16.msra.mxu0 %v2568
    %3792 = vmatprep.subr.bf16.mxu0 %v2573
    %3793 = vmatpush1.bf16.msra.mxu0 %v2572
    %3794 = vmatprep.subr.bf16.mxu0 %v2577
    %3795 = vmatpush1.bf16.msra.mxu0 %v2576
    %3796 = vmatprep.subr.bf16.mxu0 %v2581
    %3797 = vmatpush1.bf16.msra.mxu0 %v2580
    %3798 = vmatprep.subr.bf16.mxu0 %v2585
    %3799 = vmatpush1.bf16.msra.mxu0 %v2584
    %3800 = vmatprep.subr.bf16.mxu0 %v2589
    %3801 = vmatpush1.bf16.msra.mxu0 %v2588
    %3802 = vmatprep.subr.bf16.mxu0 %v2593
    %3803 = vmatpush1.bf16.msra.mxu0 %v2592
    %3804 = vmatprep.mubr.bf16.mxu0 %v73
    %3805 = vmatmul.mubr.bf16.gmra.mrb[0].mxu0 %v72
    %v3806 = vpop.f32.mrb[0].mxu0
    %v3807 = vadd.f32 %v3764, %v3806
    %v3808 = vpop.f32.mrb[0].mxu0
    %v3809 = vadd.f32 %v3766, %v3808
    %v3810 = vpop.f32.mrb[0].mxu0
    %v3811 = vadd.f32 %v3768, %v3810
    %v3812 = vpop.f32.mrb[0].mxu0
    %v3813 = vadd.f32 %v3770, %v3812
    %3814 = vdwg.mxu0
    %3815 = vmatprep.subr.bf16.mxu0 %v2597
    %3816 = vmatpush1.bf16.msra.mxu0 %v2596
    %3817 = vmatprep.subr.bf16.mxu0 %v2601
    %3818 = vmatpush1.bf16.msra.mxu0 %v2600
    %3819 = vmatprep.subr.bf16.mxu0 %v2605
    %3820 = vmatpush1.bf16.msra.mxu0 %v2604
    %3821 = vmatprep.subr.bf16.mxu0 %v2609
    %3822 = vmatpush1.bf16.msra.mxu0 %v2608
    %3823 = vmatprep.subr.bf16.mxu0 %v2613
    %3824 = vmatpush1.bf16.msra.mxu0 %v2612
    %3825 = vmatprep.subr.bf16.mxu0 %v2617
    %3826 = vmatpush1.bf16.msra.mxu0 %v2616
    %3827 = vmatprep.subr.bf16.mxu0 %v2621
    %3828 = vmatpush1.bf16.msra.mxu0 %v2620
    %3829 = vmatprep.subr.bf16.mxu0 %v2625
    %3830 = vmatpush1.bf16.msra.mxu0 %v2624
    %3831 = vmatprep.subr.bf16.mxu0 %v2629
    %3832 = vmatpush1.bf16.msra.mxu0 %v2628
    %3833 = vmatprep.subr.bf16.mxu0 %v2633
    %3834 = vmatpush1.bf16.msra.mxu0 %v2632
    %3835 = vmatprep.subr.bf16.mxu0 %v2637
    %3836 = vmatpush1.bf16.msra.mxu0 %v2636
    %3837 = vmatprep.subr.bf16.mxu0 %v2641
    %3838 = vmatpush1.bf16.msra.mxu0 %v2640
    %3839 = vmatprep.subr.bf16.mxu0 %v2645
    %3840 = vmatpush1.bf16.msra.mxu0 %v2644
    %3841 = vmatprep.subr.bf16.mxu0 %v2649
    %3842 = vmatpush1.bf16.msra.mxu0 %v2648
    %3843 = vmatprep.subr.bf16.mxu0 %v2653
    %3844 = vmatpush1.bf16.msra.mxu0 %v2652
    %3845 = vmatprep.subr.bf16.mxu0 %v2657
    %3846 = vmatpush1.bf16.msra.mxu0 %v2656
    %3847 = vmatprep.mubr.bf16.mxu0 %v75
    %3848 = vmatmul.mubr.bf16.gmra.mrb[0].mxu0 %v74
    %v3849 = vpop.f32.mrb[0].mxu0
    %v3850 = vadd.f32 %v3807, %v3849
    %v3851 = vpop.f32.mrb[0].mxu0
    %v3852 = vadd.f32 %v3809, %v3851
    %v3853 = vpop.f32.mrb[0].mxu0
    %v3854 = vadd.f32 %v3811, %v3853
    %v3855 = vpop.f32.mrb[0].mxu0
    %v3856 = vadd.f32 %v3813, %v3855
    %3857 = vdwg.mxu0
    %v3858 = vmax.f32 %v3506, 0.0
    %v3859 = vmax.f32 %v3508, 0.0
    %v3860 = vmax.f32 %v3850, 0.0
    %v3861 = vmax.f32 %v3852, 0.0
    %v3862 = vmax.f32 %v3510, 0.0
    %v3863 = vmax.f32 %v3512, 0.0
    %v3864 = vmax.f32 %v3854, 0.0
    %v3865 = vmax.f32 %v3856, 0.0
    %v3866 = vpack.c.bf16 %v3862, %v3858
    %v3867 = vpack.c.bf16 %v3863, %v3859
    %v3868 = vpack.c.bf16 %v3864, %v3860
    %v3869 = vpack.c.bf16 %v3865, %v3861
    %v3870 = vld [vmem:[%s3] sm:$0xff]
    %v3871 = vld [vmem:[%s3 + $0x8] sm:$0xff]
    %v3872 = vld [vmem:[%s3 + $0x10] sm:$0xff]
    %v3873 = vld [vmem:[%s3 + $0x18] sm:$0xff]
    %v3874 = vld [vmem:[%s3 + $0x20] sm:$0xff]
    %v3875 = vld [vmem:[%s3 + $0x28] sm:$0xff]
    %v3876 = vld [vmem:[%s3 + $0x30] sm:$0xff]
    %v3877 = vld [vmem:[%s3 + $0x38] sm:$0xff]
    %v3878 = vld [vmem:[%s3 + $0x40] sm:$0xff]
    %v3879 = vld [vmem:[%s3 + $0x48] sm:$0xff]
    %v3880 = vld [vmem:[%s3 + $0x50] sm:$0xff]
    %v3881 = vld [vmem:[%s3 + $0x58] sm:$0xff]
    %v3882 = vld [vmem:[%s3 + $0x60] sm:$0xff]
    %v3883 = vld [vmem:[%s3 + $0x68] sm:$0xff]
    %v3884 = vld [vmem:[%s3 + $0x70] sm:$0xff]
    %v3885 = vld [vmem:[%s3 + $0x78] sm:$0xff]
    %v3886 = vld [vmem:[%s3 + $0x80] sm:$0xff]
    %v3887 = vld [vmem:[%s3 + $0x88] sm:$0xff]
    %v3888 = vld [vmem:[%s3 + $0x90] sm:$0xff]
    %v3889 = vld [vmem:[%s3 + $0x98] sm:$0xff]
    %v3890 = vld [vmem:[%s3 + $0xa0] sm:$0xff]
    %v3891 = vld [vmem:[%s3 + $0xa8] sm:$0xff]
    %v3892 = vld [vmem:[%s3 + $0xb0] sm:$0xff]
    %v3893 = vld [vmem:[%s3 + $0xb8] sm:$0xff]
    %v3894 = vld [vmem:[%s3 + $0xc0] sm:$0xff]
    %v3895 = vld [vmem:[%s3 + $0xc8] sm:$0xff]
    %v3896 = vld [vmem:[%s3 + $0xd0] sm:$0xff]
    %v3897 = vld [vmem:[%s3 + $0xd8] sm:$0xff]
    %v3898 = vld [vmem:[%s3 + $0xe0] sm:$0xff]
    %v3899 = vld [vmem:[%s3 + $0xe8] sm:$0xff]
    %v3900 = vld [vmem:[%s3 + $0xf0] sm:$0xff]
    %v3901 = vld [vmem:[%s3 + $0xf8] sm:$0xff]
    %v3902 = vld [vmem:[%s3 + $0x100] sm:$0xff]
    %v3903 = vld [vmem:[%s3 + $0x108] sm:$0xff]
    %v3904 = vld [vmem:[%s3 + $0x110] sm:$0xff]
    %v3905 = vld [vmem:[%s3 + $0x118] sm:$0xff]
    %v3906 = vld [vmem:[%s3 + $0x120] sm:$0xff]
    %v3907 = vld [vmem:[%s3 + $0x128] sm:$0xff]
    %v3908 = vld [vmem:[%s3 + $0x130] sm:$0xff]
    %v3909 = vld [vmem:[%s3 + $0x138] sm:$0xff]
    %v3910 = vld [vmem:[%s3 + $0x140] sm:$0xff]
    %v3911 = vld [vmem:[%s3 + $0x148] sm:$0xff]
    %v3912 = vld [vmem:[%s3 + $0x150] sm:$0xff]
    %v3913 = vld [vmem:[%s3 + $0x158] sm:$0xff]
    %v3914 = vld [vmem:[%s3 + $0x160] sm:$0xff]
    %v3915 = vld [vmem:[%s3 + $0x168] sm:$0xff]
    %v3916 = vld [vmem:[%s3 + $0x170] sm:$0xff]
    %v3917 = vld [vmem:[%s3 + $0x178] sm:$0xff]
    %v3918 = vld [vmem:[%s3 + $0x180] sm:$0xff]
    %v3919 = vld [vmem:[%s3 + $0x188] sm:$0xff]
    %v3920 = vld [vmem:[%s3 + $0x190] sm:$0xff]
    %v3921 = vld [vmem:[%s3 + $0x198] sm:$0xff]
    %v3922 = vld [vmem:[%s3 + $0x1a0] sm:$0xff]
    %v3923 = vld [vmem:[%s3 + $0x1a8] sm:$0xff]
    %v3924 = vld [vmem:[%s3 + $0x1b0] sm:$0xff]
    %v3925 = vld [vmem:[%s3 + $0x1b8] sm:$0xff]
    %v3926 = vld [vmem:[%s3 + $0x1c0] sm:$0xff]
    %v3927 = vld [vmem:[%s3 + $0x1c8] sm:$0xff]
    %v3928 = vld [vmem:[%s3 + $0x1d0] sm:$0xff]
    %v3929 = vld [vmem:[%s3 + $0x1d8] sm:$0xff]
    %v3930 = vld [vmem:[%s3 + $0x1e0] sm:$0xff]
    %v3931 = vld [vmem:[%s3 + $0x1e8] sm:$0xff]
    %v3932 = vld [vmem:[%s3 + $0x1f0] sm:$0xff]
    %v3933 = vld [vmem:[%s3 + $0x1f8] sm:$0xff]
    %v3934 = vld [vmem:[%s4] sm:$0x3]
    %v3936 = vlaneseq
    %v3937 = vshrl.u32 %v3936, 7
    %v3938 = vsub.s32 0, %v3937
    %v3939 = vrot.slane %v3934, %v3938
    %v3940 = vlaneseq
    %v3941 = vshrl.u32 %v3940, 7
    %v3942 = vsub.s32 1, %v3941
    %v3943 = vrot.slane %v3934, %v3942
    %v4010 = vunpack.c.l.b16 %v3870
    %v4011 = vunpack.c.h.b16 %v3870
    %v4012 = vunpack.c.l.b16 %v3871
    %v4013 = vunpack.c.h.b16 %v3871
    %v4014 = vunpack.c.l.b16 %v3872
    %v4015 = vunpack.c.h.b16 %v3872
    %v4016 = vunpack.c.l.b16 %v3873
    %v4017 = vunpack.c.h.b16 %v3873
    %v4018 = vunpack.c.l.b16 %v3874
    %v4019 = vunpack.c.h.b16 %v3874
    %v4020 = vunpack.c.l.b16 %v3875
    %v4021 = vunpack.c.h.b16 %v3875
    %v4022 = vunpack.c.l.b16 %v3876
    %v4023 = vunpack.c.h.b16 %v3876
    %v4024 = vunpack.c.l.b16 %v3877
    %v4025 = vunpack.c.h.b16 %v3877
    %v4026 = vunpack.c.l.b16 %v3878
    %v4027 = vunpack.c.h.b16 %v3878
    %v4028 = vunpack.c.l.b16 %v3879
    %v4029 = vunpack.c.h.b16 %v3879
    %v4030 = vunpack.c.l.b16 %v3880
    %v4031 = vunpack.c.h.b16 %v3880
    %v4032 = vunpack.c.l.b16 %v3881
    %v4033 = vunpack.c.h.b16 %v3881
    %v4034 = vunpack.c.l.b16 %v3882
    %v4035 = vunpack.c.h.b16 %v3882
    %v4036 = vunpack.c.l.b16 %v3883
    %v4037 = vunpack.c.h.b16 %v3883
    %v4038 = vunpack.c.l.b16 %v3884
    %v4039 = vunpack.c.h.b16 %v3884
    %v4040 = vunpack.c.l.b16 %v3885
    %v4041 = vunpack.c.h.b16 %v3885
    %v4042 = vunpack.c.l.b16 %v3886
    %v4043 = vunpack.c.h.b16 %v3886
    %v4044 = vunpack.c.l.b16 %v3887
    %v4045 = vunpack.c.h.b16 %v3887
    %v4046 = vunpack.c.l.b16 %v3888
    %v4047 = vunpack.c.h.b16 %v3888
    %v4048 = vunpack.c.l.b16 %v3889
    %v4049 = vunpack.c.h.b16 %v3889
    %v4050 = vunpack.c.l.b16 %v3890
    %v4051 = vunpack.c.h.b16 %v3890
    %v4052 = vunpack.c.l.b16 %v3891
    %v4053 = vunpack.c.h.b16 %v3891
    %v4054 = vunpack.c.l.b16 %v3892
    %v4055 = vunpack.c.h.b16 %v3892
    %v4056 = vunpack.c.l.b16 %v3893
    %v4057 = vunpack.c.h.b16 %v3893
    %v4058 = vunpack.c.l.b16 %v3894
    %v4059 = vunpack.c.h.b16 %v3894
    %v4060 = vunpack.c.l.b16 %v3895
    %v4061 = vunpack.c.h.b16 %v3895
    %v4062 = vunpack.c.l.b16 %v3896
    %v4063 = vunpack.c.h.b16 %v3896
    %v4064 = vunpack.c.l.b16 %v3897
    %v4065 = vunpack.c.h.b16 %v3897
    %v4066 = vunpack.c.l.b16 %v3898
    %v4067 = vunpack.c.h.b16 %v3898
    %v4068 = vunpack.c.l.b16 %v3899
    %v4069 = vunpack.c.h.b16 %v3899
    %v4070 = vunpack.c.l.b16 %v3900
    %v4071 = vunpack.c.h.b16 %v3900
    %v4072 = vunpack.c.l.b16 %v3901
    %v4073 = vunpack.c.h.b16 %v3901
    %v4074 = vunpack.c.l.b16 %v3902
    %v4075 = vunpack.c.h.b16 %v3902
    %v4076 = vunpack.c.l.b16 %v3903
    %v4077 = vunpack.c.h.b16 %v3903
    %v4078 = vunpack.c.l.b16 %v3904
    %v4079 = vunpack.c.h.b16 %v3904
    %v4080 = vunpack.c.l.b16 %v3905
    %v4081 = vunpack.c.h.b16 %v3905
    %v4082 = vunpack.c.l.b16 %v3906
    %v4083 = vunpack.c.h.b16 %v3906
    %v4084 = vunpack.c.l.b16 %v3907
    %v4085 = vunpack.c.h.b16 %v3907
    %v4086 = vunpack.c.l.b16 %v3908
    %v4087 = vunpack.c.h.b16 %v3908
    %v4088 = vunpack.c.l.b16 %v3909
    %v4089 = vunpack.c.h.b16 %v3909
    %v4090 = vunpack.c.l.b16 %v3910
    %v4091 = vunpack.c.h.b16 %v3910
    %v4092 = vunpack.c.l.b16 %v3911
    %v4093 = vunpack.c.h.b16 %v3911
    %v4094 = vunpack.c.l.b16 %v3912
    %v4095 = vunpack.c.h.b16 %v3912
    %v4096 = vunpack.c.l.b16 %v3913
    %v4097 = vunpack.c.h.b16 %v3913
    %v4098 = vunpack.c.l.b16 %v3914
    %v4099 = vunpack.c.h.b16 %v3914
    %v4100 = vunpack.c.l.b16 %v3915
    %v4101 = vunpack.c.h.b16 %v3915
    %v4102 = vunpack.c.l.b16 %v3916
    %v4103 = vunpack.c.h.b16 %v3916
    %v4104 = vunpack.c.l.b16 %v3917
    %v4105 = vunpack.c.h.b16 %v3917
    %v4106 = vunpack.c.l.b16 %v3918
    %v4107 = vunpack.c.h.b16 %v3918
    %v4108 = vunpack.c.l.b16 %v3919
    %v4109 = vunpack.c.h.b16 %v3919
    %v4110 = vunpack.c.l.b16 %v3920
    %v4111 = vunpack.c.h.b16 %v3920
    %v4112 = vunpack.c.l.b16 %v3921
    %v4113 = vunpack.c.h.b16 %v3921
    %v4114 = vunpack.c.l.b16 %v3922
    %v4115 = vunpack.c.h.b16 %v3922
    %v4116 = vunpack.c.l.b16 %v3923
    %v4117 = vunpack.c.h.b16 %v3923
    %v4118 = vunpack.c.l.b16 %v3924
    %v4119 = vunpack.c.h.b16 %v3924
    %v4120 = vunpack.c.l.b16 %v3925
    %v4121 = vunpack.c.h.b16 %v3925
    %v4122 = vunpack.c.l.b16 %v3926
    %v4123 = vunpack.c.h.b16 %v3926
    %v4124 = vunpack.c.l.b16 %v3927
    %v4125 = vunpack.c.h.b16 %v3927
    %v4126 = vunpack.c.l.b16 %v3928
    %v4127 = vunpack.c.h.b16 %v3928
    %v4128 = vunpack.c.l.b16 %v3929
    %v4129 = vunpack.c.h.b16 %v3929
    %v4130 = vunpack.c.l.b16 %v3930
    %v4131 = vunpack.c.h.b16 %v3930
    %v4132 = vunpack.c.l.b16 %v3931
    %v4133 = vunpack.c.h.b16 %v3931
    %v4134 = vunpack.c.l.b16 %v3932
    %v4135 = vunpack.c.h.b16 %v3932
    %v4136 = vunpack.c.l.b16 %v3933
    %v4137 = vunpack.c.h.b16 %v3933
    %v4138 = vpack.c.b16 %v4012, %v4010
    %v4139 = vpack.c.b16 %v4013, %v4011
    %v4140 = vpack.c.b16 %v4016, %v4014
    %v4141 = vpack.c.b16 %v4017, %v4015
    %v4142 = vpack.c.b16 %v4020, %v4018
    %v4143 = vpack.c.b16 %v4021, %v4019
    %v4144 = vpack.c.b16 %v4024, %v4022
    %v4145 = vpack.c.b16 %v4025, %v4023
    %v4146 = vpack.c.b16 %v4028, %v4026
    %v4147 = vpack.c.b16 %v4029, %v4027
    %v4148 = vpack.c.b16 %v4032, %v4030
    %v4149 = vpack.c.b16 %v4033, %v4031
    %v4150 = vpack.c.b16 %v4036, %v4034
    %v4151 = vpack.c.b16 %v4037, %v4035
    %v4152 = vpack.c.b16 %v4040, %v4038
    %v4153 = vpack.c.b16 %v4041, %v4039
    %v4154 = vpack.c.b16 %v4044, %v4042
    %v4155 = vpack.c.b16 %v4045, %v4043
    %v4156 = vpack.c.b16 %v4048, %v4046
    %v4157 = vpack.c.b16 %v4049, %v4047
    %v4158 = vpack.c.b16 %v4052, %v4050
    %v4159 = vpack.c.b16 %v4053, %v4051
    %v4160 = vpack.c.b16 %v4056, %v4054
    %v4161 = vpack.c.b16 %v4057, %v4055
    %v4162 = vpack.c.b16 %v4060, %v4058
    %v4163 = vpack.c.b16 %v4061, %v4059
    %v4164 = vpack.c.b16 %v4064, %v4062
    %v4165 = vpack.c.b16 %v4065, %v4063
    %v4166 = vpack.c.b16 %v4068, %v4066
    %v4167 = vpack.c.b16 %v4069, %v4067
    %v4168 = vpack.c.b16 %v4072, %v4070
    %v4169 = vpack.c.b16 %v4073, %v4071
    %v4170 = vpack.c.b16 %v4076, %v4074
    %v4171 = vpack.c.b16 %v4077, %v4075
    %v4172 = vpack.c.b16 %v4080, %v4078
    %v4173 = vpack.c.b16 %v4081, %v4079
    %v4174 = vpack.c.b16 %v4084, %v4082
    %v4175 = vpack.c.b16 %v4085, %v4083
    %v4176 = vpack.c.b16 %v4088, %v4086
    %v4177 = vpack.c.b16 %v4089, %v4087
    %v4178 = vpack.c.b16 %v4092, %v4090
    %v4179 = vpack.c.b16 %v4093, %v4091
    %v4180 = vpack.c.b16 %v4096, %v4094
    %v4181 = vpack.c.b16 %v4097, %v4095
    %v4182 = vpack.c.b16 %v4100, %v4098
    %v4183 = vpack.c.b16 %v4101, %v4099
    %v4184 = vpack.c.b16 %v4104, %v4102
    %v4185 = vpack.c.b16 %v4105, %v4103
    %v4186 = vpack.c.b16 %v4108, %v4106
    %v4187 = vpack.c.b16 %v4109, %v4107
    %v4188 = vpack.c.b16 %v4112, %v4110
    %v4189 = vpack.c.b16 %v4113, %v4111
    %v4190 = vpack.c.b16 %v4116, %v4114
    %v4191 = vpack.c.b16 %v4117, %v4115
    %v4192 = vpack.c.b16 %v4120, %v4118
    %v4193 = vpack.c.b16 %v4121, %v4119
    %v4194 = vpack.c.b16 %v4124, %v4122
    %v4195 = vpack.c.b16 %v4125, %v4123
    %v4196 = vpack.c.b16 %v4128, %v4126
    %v4197 = vpack.c.b16 %v4129, %v4127
    %v4198 = vpack.c.b16 %v4132, %v4130
    %v4199 = vpack.c.b16 %v4133, %v4131
    %v4200 = vpack.c.b16 %v4136, %v4134
    %v4201 = vpack.c.b16 %v4137, %v4135
    %4266 = vmatprep.subr.bf16.mxu0 %v4139
    %4267 = vmatpush1.bf16.msra.mxu0 %v4138
    %4268 = vmatprep.subr.bf16.mxu0 %v4141
    %4269 = vmatpush1.bf16.msra.mxu0 %v4140
    %4270 = vmatprep.subr.bf16.mxu0 %v4143
    %4271 = vmatpush1.bf16.msra.mxu0 %v4142
    %4272 = vmatprep.subr.bf16.mxu0 %v4145
    %4273 = vmatpush1.bf16.msra.mxu0 %v4144
    %4274 = vmatprep.subr.bf16.mxu0 %v4147
    %4275 = vmatpush1.bf16.msra.mxu0 %v4146
    %4276 = vmatprep.subr.bf16.mxu0 %v4149
    %4277 = vmatpush1.bf16.msra.mxu0 %v4148
    %4278 = vmatprep.subr.bf16.mxu0 %v4151
    %4279 = vmatpush1.bf16.msra.mxu0 %v4150
    %4280 = vmatprep.subr.bf16.mxu0 %v4153
    %4281 = vmatpush1.bf16.msra.mxu0 %v4152
    %4282 = vmatprep.subr.bf16.mxu0 %v4155
    %4283 = vmatpush1.bf16.msra.mxu0 %v4154
    %4284 = vmatprep.subr.bf16.mxu0 %v4157
    %4285 = vmatpush1.bf16.msra.mxu0 %v4156
    %4286 = vmatprep.subr.bf16.mxu0 %v4159
    %4287 = vmatpush1.bf16.msra.mxu0 %v4158
    %4288 = vmatprep.subr.bf16.mxu0 %v4161
    %4289 = vmatpush1.bf16.msra.mxu0 %v4160
    %4290 = vmatprep.subr.bf16.mxu0 %v4163
    %4291 = vmatpush1.bf16.msra.mxu0 %v4162
    %4292 = vmatprep.subr.bf16.mxu0 %v4165
    %4293 = vmatpush1.bf16.msra.mxu0 %v4164
    %4294 = vmatprep.subr.bf16.mxu0 %v4167
    %4295 = vmatpush1.bf16.msra.mxu0 %v4166
    %4296 = vmatprep.subr.bf16.mxu0 %v4169
    %4297 = vmatpush1.bf16.msra.mxu0 %v4168
    %4298 = vmatprep.mubr.bf16.mxu0 %v3867
    %4299 = vmatmul.mubr.bf16.gmra.mrb[0].mxu0 %v3866
    %v4300 = vpop.f32.mrb[0].mxu0
    %v4301 = vadd.f32 %v3939, %v4300
    %v4302 = vpop.f32.mrb[0].mxu0
    %v4303 = vadd.f32 %v3943, %v4302
    %v4304 = vpop.f32.mrb[0].mxu0
    %v4305 = vadd.f32 %v3939, %v4304
    %v4306 = vpop.f32.mrb[0].mxu0
    %v4307 = vadd.f32 %v3943, %v4306
    %4308 = vdwg.mxu0
    %4309 = vmatprep.subr.bf16.mxu0 %v4171
    %4310 = vmatpush1.bf16.msra.mxu0 %v4170
    %4311 = vmatprep.subr.bf16.mxu0 %v4173
    %4312 = vmatpush1.bf16.msra.mxu0 %v4172
    %4313 = vmatprep.subr.bf16.mxu0 %v4175
    %4314 = vmatpush1.bf16.msra.mxu0 %v4174
    %4315 = vmatprep.subr.bf16.mxu0 %v4177
    %4316 = vmatpush1.bf16.msra.mxu0 %v4176
    %4317 = vmatprep.subr.bf16.mxu0 %v4179
    %4318 = vmatpush1.bf16.msra.mxu0 %v4178
    %4319 = vmatprep.subr.bf16.mxu0 %v4181
    %4320 = vmatpush1.bf16.msra.mxu0 %v4180
    %4321 = vmatprep.subr.bf16.mxu0 %v4183
    %4322 = vmatpush1.bf16.msra.mxu0 %v4182
    %4323 = vmatprep.subr.bf16.mxu0 %v4185
    %4324 = vmatpush1.bf16.msra.mxu0 %v4184
    %4325 = vmatprep.subr.bf16.mxu0 %v4187
    %4326 = vmatpush1.bf16.msra.mxu0 %v4186
    %4327 = vmatprep.subr.bf16.mxu0 %v4189
    %4328 = vmatpush1.bf16.msra.mxu0 %v4188
    %4329 = vmatprep.subr.bf16.mxu0 %v4191
    %4330 = vmatpush1.bf16.msra.mxu0 %v4190
    %4331 = vmatprep.subr.bf16.mxu0 %v4193
    %4332 = vmatpush1.bf16.msra.mxu0 %v4192
    %4333 = vmatprep.subr.bf16.mxu0 %v4195
    %4334 = vmatpush1.bf16.msra.mxu0 %v4194
    %4335 = vmatprep.subr.bf16.mxu0 %v4197
    %4336 = vmatpush1.bf16.msra.mxu0 %v4196
    %4337 = vmatprep.subr.bf16.mxu0 %v4199
    %4338 = vmatpush1.bf16.msra.mxu0 %v4198
    %4339 = vmatprep.subr.bf16.mxu0 %v4201
    %4340 = vmatpush1.bf16.msra.mxu0 %v4200
    %4341 = vmatprep.mubr.bf16.mxu0 %v3869
    %4342 = vmatmul.mubr.bf16.gmra.mrb[0].mxu0 %v3868
    %v4343 = vpop.f32.mrb[0].mxu0
    %v4344 = vadd.f32 %v4301, %v4343
    %v4345 = vpop.f32.mrb[0].mxu0
    %v4346 = vadd.f32 %v4303, %v4345
    %v4347 = vpop.f32.mrb[0].mxu0
    %v4348 = vadd.f32 %v4305, %v4347
    %v4349 = vpop.f32.mrb[0].mxu0
    %v4350 = vadd.f32 %v4307, %v4349
    %4351 = vdwg.mxu0
    %v4352 = vmax.f32 %v4344, 0.0
    %v4353 = vmax.f32 %v4346, 0.0
    %v4354 = vmax.f32 %v4348, 0.0
    %v4355 = vmax.f32 %v4350, 0.0
    %v4356 = vpack.c.bf16 %v4354, %v4352
    %v4357 = vpack.c.bf16 %v4355, %v4353
    %v4358 = vld [vmem:[%s5] sm:$0xf]
    %v4359 = vld [vmem:[%s5 + $0x4] sm:$0xf]
    %v4360 = vld [vmem:[%s5 + $0x8] sm:$0xf]
    %v4361 = vld [vmem:[%s5 + $0xc] sm:$0xf]
    %v4362 = vld [vmem:[%s5 + $0x10] sm:$0xf]
    %v4363 = vld [vmem:[%s5 + $0x14] sm:$0xf]
    %v4364 = vld [vmem:[%s5 + $0x18] sm:$0xf]
    %v4365 = vld [vmem:[%s5 + $0x1c] sm:$0xf]
    %v4366 = vld [vmem:[%s5 + $0x20] sm:$0xf]
    %v4367 = vld [vmem:[%s5 + $0x24] sm:$0xf]
    %v4368 = vld [vmem:[%s5 + $0x28] sm:$0xf]
    %v4369 = vld [vmem:[%s5 + $0x2c] sm:$0xf]
    %v4370 = vld [vmem:[%s5 + $0x30] sm:$0xf]
    %v4371 = vld [vmem:[%s5 + $0x34] sm:$0xf]
    %v4372 = vld [vmem:[%s5 + $0x38] sm:$0xf]
    %v4373 = vld [vmem:[%s5 + $0x3c] sm:$0xf]
    %v4374 = vld [vmem:[%s5 + $0x40] sm:$0xf]
    %v4375 = vld [vmem:[%s5 + $0x44] sm:$0xf]
    %v4376 = vld [vmem:[%s5 + $0x48] sm:$0xf]
    %v4377 = vld [vmem:[%s5 + $0x4c] sm:$0xf]
    %v4378 = vld [vmem:[%s5 + $0x50] sm:$0xf]
    %v4379 = vld [vmem:[%s5 + $0x54] sm:$0xf]
    %v4380 = vld [vmem:[%s5 + $0x58] sm:$0xf]
    %v4381 = vld [vmem:[%s5 + $0x5c] sm:$0xf]
    %v4382 = vld [vmem:[%s5 + $0x60] sm:$0xf]
    %v4383 = vld [vmem:[%s5 + $0x64] sm:$0xf]
    %v4384 = vld [vmem:[%s5 + $0x68] sm:$0xf]
    %v4385 = vld [vmem:[%s5 + $0x6c] sm:$0xf]
    %v4386 = vld [vmem:[%s5 + $0x70] sm:$0xf]
    %v4387 = vld [vmem:[%s5 + $0x74] sm:$0xf]
    %v4388 = vld [vmem:[%s5 + $0x78] sm:$0xf]
    %v4389 = vld [vmem:[%s5 + $0x7c] sm:$0xf]
    %v4390 = vld [vmem:[%s6] sm:$0x1]
    %v4392 = vlaneseq
    %v4393 = vshrl.u32 %v4392, 7
    %v4394 = vsub.s32 0, %v4393
    %v4395 = vrot.slane %v4390, %v4394
    %v4429 = vunpack.c.l.b16 %v4358
    %v4430 = vunpack.c.l.b16 %v4359
    %v4431 = vunpack.c.l.b16 %v4360
    %v4432 = vunpack.c.l.b16 %v4361
    %v4433 = vunpack.c.l.b16 %v4362
    %v4434 = vunpack.c.l.b16 %v4363
    %v4435 = vunpack.c.l.b16 %v4364
    %v4436 = vunpack.c.l.b16 %v4365
    %v4437 = vunpack.c.l.b16 %v4366
    %v4438 = vunpack.c.l.b16 %v4367
    %v4439 = vunpack.c.l.b16 %v4368
    %v4440 = vunpack.c.l.b16 %v4369
    %v4441 = vunpack.c.l.b16 %v4370
    %v4442 = vunpack.c.l.b16 %v4371
    %v4443 = vunpack.c.l.b16 %v4372
    %v4444 = vunpack.c.l.b16 %v4373
    %v4445 = vunpack.c.l.b16 %v4374
    %v4446 = vunpack.c.l.b16 %v4375
    %v4447 = vunpack.c.l.b16 %v4376
    %v4448 = vunpack.c.l.b16 %v4377
    %v4449 = vunpack.c.l.b16 %v4378
    %v4450 = vunpack.c.l.b16 %v4379
    %v4451 = vunpack.c.l.b16 %v4380
    %v4452 = vunpack.c.l.b16 %v4381
    %v4453 = vunpack.c.l.b16 %v4382
    %v4454 = vunpack.c.l.b16 %v4383
    %v4455 = vunpack.c.l.b16 %v4384
    %v4456 = vunpack.c.l.b16 %v4385
    %v4457 = vunpack.c.l.b16 %v4386
    %v4458 = vunpack.c.l.b16 %v4387
    %v4459 = vunpack.c.l.b16 %v4388
    %v4460 = vunpack.c.l.b16 %v4389
    %v4461 = vpack.c.b16 %v4430, %v4429
    %v4462 = vpack.c.b16 %v4432, %v4431
    %v4463 = vpack.c.b16 %v4434, %v4433
    %v4464 = vpack.c.b16 %v4436, %v4435
    %v4465 = vpack.c.b16 %v4438, %v4437
    %v4466 = vpack.c.b16 %v4440, %v4439
    %v4467 = vpack.c.b16 %v4442, %v4441
    %v4468 = vpack.c.b16 %v4444, %v4443
    %v4469 = vpack.c.b16 %v4446, %v4445
    %v4470 = vpack.c.b16 %v4448, %v4447
    %v4471 = vpack.c.b16 %v4450, %v4449
    %v4472 = vpack.c.b16 %v4452, %v4451
    %v4473 = vpack.c.b16 %v4454, %v4453
    %v4474 = vpack.c.b16 %v4456, %v4455
    %v4475 = vpack.c.b16 %v4458, %v4457
    %v4476 = vpack.c.b16 %v4460, %v4459
    %4493 = vmatprep.subr.bf16.mxu0 0
    %4494 = vmatpush1.bf16.msra.mxu0 %v4461
    %4495 = vmatprep.subr.bf16.mxu0 0
    %4496 = vmatpush1.bf16.msra.mxu0 %v4462
    %4497 = vmatprep.subr.bf16.mxu0 0
    %4498 = vmatpush1.bf16.msra.mxu0 %v4463
    %4499 = vmatprep.subr.bf16.mxu0 0
    %4500 = vmatpush1.bf16.msra.mxu0 %v4464
    %4501 = vmatprep.subr.bf16.mxu0 0
    %4502 = vmatpush1.bf16.msra.mxu0 %v4465
    %4503 = vmatprep.subr.bf16.mxu0 0
    %4504 = vmatpush1.bf16.msra.mxu0 %v4466
    %4505 = vmatprep.subr.bf16.mxu0 0
    %4506 = vmatpush1.bf16.msra.mxu0 %v4467
    %4507 = vmatprep.subr.bf16.mxu0 0
    %4508 = vmatpush1.bf16.msra.mxu0 %v4468
    %4509 = vmatprep.subr.bf16.mxu0 0
    %4510 = vmatpush1.bf16.msra.mxu0 %v4469
    %4511 = vmatprep.subr.bf16.mxu0 0
    %4512 = vmatpush1.bf16.msra.mxu0 %v4470
    %4513 = vmatprep.subr.bf16.mxu0 0
    %4514 = vmatpush1.bf16.msra.mxu0 %v4471
    %4515 = vmatprep.subr.bf16.mxu0 0
    %4516 = vmatpush1.bf16.msra.mxu0 %v4472
    %4517 = vmatprep.subr.bf16.mxu0 0
    %4518 = vmatpush1.bf16.msra.mxu0 %v4473
    %4519 = vmatprep.subr.bf16.mxu0 0
    %4520 = vmatpush1.bf16.msra.mxu0 %v4474
    %4521 = vmatprep.subr.bf16.mxu0 0
    %4522 = vmatpush1.bf16.msra.mxu0 %v4475
    %4523 = vmatprep.subr.bf16.mxu0 0
    %4524 = vmatpush1.bf16.msra.mxu0 %v4476
    %4525 = vmatprep.mubr.bf16.mxu0 %v4357
    %4526 = vmatmul.mubr.bf16.gmra.mrb[0].mxu0 %v4356
    %v4527 = vpop.f32.mrb[0].mxu0
    %v4528 = vadd.f32 %v4395, %v4527
    %v4529 = vpop.f32.mrb[0].mxu0
    %v4530 = vpop.f32.mrb[0].mxu0
    %v4531 = vadd.f32 %v4395, %v4530
    %v4532 = vpop.f32.mrb[0].mxu0
    %4533 = vdwg.mxu0
    %v4534 = vpack.c.bf16 %v4531, %v4528
    %v4536 = vunpack.c.l.b16 %v4534
    %v4537 = vunpack.c.h.b16 %v4534
    %v4538 = vpack.c.b16 %v4536, %v4536
    %v4539 = vpack.c.b16 %v4537, %v4537
    %4542 = vst [vmem:[#allocation2] sm:$0xf] %v4538
    %4543 = vst [vmem:[#allocation2 + $0x4] sm:$0xf] %v4539
    // Predicated region
    $region30: #{simple_nn_classifier.1} parent=1 // pred_check
      _
    $region31: #{simple_nn_classifier.1} parent=1 // pred_check_branch
      %4545 = sbr.rel (0) target = $region33
    $region32: #{simple_nn_classifier.1} parent=1 // pred_region
      %s4547 = ssub.s32 128, 128
      %4548 = vsyncadd [#allocation3], %s4547
      %s4549 = sshll.u32 [#allocation2], 4
      %s4550 = int_to_ptr.vmem [resolvable:$true] %s4549
      %4555 = dma.vmem_to_hbm [thread:$0]  %s4550, 128, %s7, [#allocation3], 64, 64, 4
    $region33: #{simple_nn_classifier.1} parent=1 // pred_fallthru
      _
    // Predicated region
    $region34: #{simple_nn_classifier.1} parent=1 // pred_check
      _
    $region35: #{simple_nn_classifier.1} parent=1 // pred_check_branch
      %4557 = sbr.rel (0) target = $region37
    $region36: #{simple_nn_classifier.1} parent=1 // pred_region
      %4558 = dma.done [#allocation3], 128
    $region37: #{simple_nn_classifier.1} parent=1 // pred_fallthru
      _
    %4559 = vsyncpa [#allocation3], 1

</llo_original>
